<compile_context>
chip_gen: v7x
topology: tpu7x:2x2x1
jax: 0.10.0
libtpu: 0.0.40
codegen_flags: <defaults>
</compile_context>

<pallas_src>
import functools

import jax
import jax.numpy as jnp
from jax.experimental import pallas as pl
from jax.experimental.pallas import tpu as pltpu

_LN_EPS = 1e-5


# ----------------------------- kernel helpers ------------------------------

def _layer_norm(x, gamma, beta):
    # x: (M, C) f32, gamma/beta: (1, C) f32
    mu = jnp.mean(x, axis=-1, keepdims=True)
    xc = x - mu
    var = jnp.mean(xc * xc, axis=-1, keepdims=True)
    return xc * jax.lax.rsqrt(var + _LN_EPS) * gamma + beta


def _mlp(xn, w1_ref, b1_ref, w2_ref, b2_ref):
    # fc1 -> GELU -> fc2. Operands cast to the (bf16) weight dtype for the MXU,
    # f32 accumulation; bias / activation math stays f32.
    h = jnp.dot(xn.astype(w1_ref.dtype), w1_ref[...],
                preferred_element_type=jnp.float32)
    h = h + b1_ref[...].astype(jnp.float32)
    h = jax.nn.gelu(h, approximate=True)
    o = jnp.dot(h.astype(w2_ref.dtype), w2_ref[...],
                preferred_element_type=jnp.float32)
    return o + b2_ref[...].astype(jnp.float32)


# ------------------------------- fused kernel --------------------------------

def _conv_mlp_stage_kernel(x_ref,
                           g1_ref, b1_ref, w11_ref, fb11_ref, w12_ref, fb12_ref,
                           gc_ref, bc_ref, cw_ref,
                           g2_ref, b2_ref, w21_ref, fb21_ref, w22_ref, fb22_ref,
                           o_ref, zpad_ref, *, H, W):
    """One image per grid step.  x_ref/o_ref: (1, H*W, C); zpad_ref: (H+2, Wp, C)."""
    HW, C = o_ref.shape[1], o_ref.shape[2]

    x = x_ref[0].astype(jnp.float32)                               # (HW, C)

    # ---- stage 1: y = x + MLP1(LN1(x));  z = LN_connect(y) (all in VMEM) ----
    xn = _layer_norm(x, g1_ref[...].astype(jnp.float32),
                     b1_ref[...].astype(jnp.float32))
    y = x + _mlp(xn, w11_ref, fb11_ref, w12_ref, fb12_ref)
    z = _layer_norm(y, gc_ref[...].astype(jnp.float32),
                    bc_ref[...].astype(jnp.float32))

    # ---- stage 2: depthwise 3x3 conv, stride 1, pad 1, no bias ------------
    # Build the 1-px zero halo in a VMEM scratch; read each tap as a ref slice.
    zpad_ref[...] = jnp.zeros_like(zpad_ref)
    zpad_ref[1:H + 1, 1:W + 1, :] = z.reshape(H, W, C)
    w = cw_ref[...].astype(jnp.float32)                            # (3, 3, C)
    acc = jnp.zeros((H, W, C), jnp.float32)
    for ky in range(3):
        for kx in range(3):
            acc = acc + zpad_ref[ky:ky + H, kx:kx + W, :] * w[ky:ky + 1, kx:kx + 1, :]
    cv = acc.reshape(HW, C)

    # ---- stage 3: out = cv + MLP2(LN2(cv)) ---------------------------------
    cn = _layer_norm(cv, g2_ref[...].astype(jnp.float32),
                     b2_ref[...].astype(jnp.float32))
    o_ref[0] = (cv + _mlp(cn, w21_ref, fb21_ref, w22_ref, fb22_ref)).astype(o_ref.dtype)


# ------------------------------- wrapper -------------------------------------

def _round_up(x, n):
    return ((x + n - 1) // n) * n


def conv_mlp_stage(src, p, *, mxu_dtype=jnp.bfloat16,
                   vmem_limit_bytes=32 * 1024 * 1024):
    """src: [B, H, W, C] NHWC.  p: dict of PyTorch-layout parameters.
    Inference forward (DropPath is identity).  C should be a multiple of 128
    and H*W a multiple of 8 for lane/sublane-dense tiles (demo: C=128)."""
    B, H, W, C = src.shape
    dtype = src.dtype
    FF = p["m1_w1"].shape[0]                  # fc1 weight is [FF, C] (PyTorch)
    HW = H * W
    Wp = _round_up(W + 2, 8)                  # sublane-padded halo width

    x3 = src.reshape(B, HW, C)                # contiguous -> free reshape

    # One-time parameter prep (per trace); in a real model hoist to load time.
    w11 = p["m1_w1"].T.astype(mxu_dtype)      # (C, FF)
    w12 = p["m1_w2"].T.astype(mxu_dtype)      # (FF, C)
    w21 = p["m2_w1"].T.astype(mxu_dtype)
    w22 = p["m2_w2"].T.astype(mxu_dtype)
    cw = jnp.transpose(p["conv_w"][:, 0, :, :], (1, 2, 0)).astype(jnp.float32)  # (3,3,C)
    f32 = jnp.float32

    row = pl.BlockSpec((1, HW, C), lambda b: (b, 0, 0))
    vec_c = pl.BlockSpec((1, C), lambda b: (0, 0))
    vec_ff = pl.BlockSpec((1, FF), lambda b: (0, 0))
    mat_cf = pl.BlockSpec((C, FF), lambda b: (0, 0))
    mat_fc = pl.BlockSpec((FF, C), lambda b: (0, 0))
    conv_spec = pl.BlockSpec((3, 3, C), lambda b: (0, 0, 0))

    kernel = functools.partial(_conv_mlp_stage_kernel, H=H, W=W)

    out = pl.pallas_call(
        kernel,
        out_shape=jax.ShapeDtypeStruct((B, HW, C), dtype),
        grid_spec=pltpu.PrefetchScalarGridSpec(
            num_scalar_prefetch=0,
            grid=(B,),
            in_specs=[row,
                      vec_c, vec_c, mat_cf, vec_ff, mat_fc, vec_c,   # LN1 + MLP1
                      vec_c, vec_c, conv_spec,                        # LN_connect + conv
                      vec_c, vec_c, mat_cf, vec_ff, mat_fc, vec_c],   # LN2 + MLP2
            out_specs=row,
            scratch_shapes=[pltpu.VMEM((H + 2, Wp, C), jnp.float32)]),
        compiler_params=pltpu.CompilerParams(
            dimension_semantics=("parallel",),
            vmem_limit_bytes=vmem_limit_bytes),
    )(x3,
      p["ln1_g"].reshape(1, C).astype(f32), p["ln1_b"].reshape(1, C).astype(f32),
      w11, p["m1_b1"].reshape(1, FF).astype(f32),
      w12, p["m1_b2"].reshape(1, C).astype(f32),
      p["lnc_g"].reshape(1, C).astype(f32), p["lnc_b"].reshape(1, C).astype(f32),
      cw,
      p["ln2_g"].reshape(1, C).astype(f32), p["ln2_b"].reshape(1, C).astype(f32),
      w21, p["m2_b1"].reshape(1, FF).astype(f32),
      w22, p["m2_b2"].reshape(1, C).astype(f32))

    return out.reshape(B, H, W, C)


# ------------------------------- reference -----------------------------------

def _reference(src, p):
    C = src.shape[-1]

    def ln(x, g, b):
        mu = jnp.mean(x, -1, keepdims=True)
        xc = x - mu
        var = jnp.mean(xc * xc, -1, keepdims=True)
        return xc * jax.lax.rsqrt(var + _LN_EPS) * g + b

    def mlp(x, w1, b1, w2, b2):
        h = jax.nn.gelu(x @ w1.T + b1, approximate=True)
        return h @ w2.T + b2

    x = src + mlp(ln(src, p["ln1_g"], p["ln1_b"]),
                  p["m1_w1"], p["m1_b1"], p["m1_w2"], p["m1_b2"])
    z = ln(x, p["lnc_g"], p["lnc_b"])
    wh = jnp.transpose(p["conv_w"], (2, 3, 1, 0))            # HWIO [3,3,1,C]
    y = jax.lax.conv_general_dilated(
        z, wh, window_strides=(1, 1), padding=((1, 1), (1, 1)),
        dimension_numbers=("NHWC", "HWIO", "NHWC"),
        feature_group_count=C)
    return y + mlp(ln(y, p["ln2_g"], p["ln2_b"]),
                   p["m2_w1"], p["m2_b1"], p["m2_w2"], p["m2_b2"])


# --------------------------------- demo ---------------------------------------

if __name__ == "__main__":
    key = jax.random.PRNGKey(0)
    ks = jax.random.split(key, 16)

    B, H, W = 2, 16, 16
    C, FF = 128, 256            # embedding_dim, dim_feedforward (lane-dense)

    def uinit(k, shape, fan_in):
        bound = 1.0 / (fan_in ** 0.5)
        return jax.random.uniform(k, shape, minval=-bound, maxval=bound,
                                  dtype=jnp.float32)

    src = jax.random.normal(ks[0], (B, H, W, C), dtype=jnp.float32)
    params = dict(
        ln1_g=1.0 + 0.1 * jax.random.normal(ks[1], (C,), jnp.float32),
        ln1_b=0.1 * jax.random.normal(ks[2], (C,), jnp.float32),
        m1_w1=uinit(ks[3], (FF, C), C), m1_b1=uinit(ks[4], (FF,), C),
        m1_w2=uinit(ks[5], (C, FF), FF), m1_b2=uinit(ks[6], (C,), FF),
        lnc_g=1.0 + 0.1 * jax.random.normal(ks[7], (C,), jnp.float32),
        lnc_b=0.1 * jax.random.normal(ks[8], (C,), jnp.float32),
        conv_w=uinit(ks[9], (C, 1, 3, 3), 9),                 # depthwise, groups=C
        ln2_g=1.0 + 0.1 * jax.random.normal(ks[10], (C,), jnp.float32),
        ln2_b=0.1 * jax.random.normal(ks[11], (C,), jnp.float32),
        m2_w1=uinit(ks[12], (FF, C), C), m2_b1=uinit(ks[13], (FF,), C),
        m2_w2=uinit(ks[14], (C, FF), FF), m2_b2=uinit(ks[15], (C,), FF),
    )

    out = conv_mlp_stage(src, params)
    out = jax.block_until_ready(out)

    ref = _reference(src, params)
    assert out.shape == (B, H, W, C), out.shape
    # bf16 MXU path vs. f32 reference -> loosened tolerance (f32 LN/bias/residual).
    err = float(jnp.max(jnp.abs(out - ref)))
    assert jnp.allclose(out, ref, atol=3e-2, rtol=3e-2), err

    print("KERNEL_OK")
</pallas_src>

<mosaic_0001>
module attributes {stable_mosaic.version = 11 : i64} {
  func.func @_conv_mlp_stage_kernel(%arg0: i32, %arg1: memref<1x256x128xf32, #tpu.memory_space<vmem>>, %arg2: memref<1x128xf32, #tpu.memory_space<vmem>>, %arg3: memref<1x128xf32, #tpu.memory_space<vmem>>, %arg4: memref<128x256xbf16, #tpu.memory_space<vmem>>, %arg5: memref<1x256xf32, #tpu.memory_space<vmem>>, %arg6: memref<256x128xbf16, #tpu.memory_space<vmem>>, %arg7: memref<1x128xf32, #tpu.memory_space<vmem>>, %arg8: memref<1x128xf32, #tpu.memory_space<vmem>>, %arg9: memref<1x128xf32, #tpu.memory_space<vmem>>, %arg10: memref<3x3x128xf32, #tpu.memory_space<vmem>>, %arg11: memref<1x128xf32, #tpu.memory_space<vmem>>, %arg12: memref<1x128xf32, #tpu.memory_space<vmem>>, %arg13: memref<128x256xbf16, #tpu.memory_space<vmem>>, %arg14: memref<1x256xf32, #tpu.memory_space<vmem>>, %arg15: memref<256x128xbf16, #tpu.memory_space<vmem>>, %arg16: memref<1x128xf32, #tpu.memory_space<vmem>>, %arg17: memref<1x256x128xf32, #tpu.memory_space<vmem>>, %arg18: memref<18x24x128xf32, #tpu.memory_space<vmem>>) attributes {dimension_semantics = [#tpu.dimension_semantics<parallel>], iteration_bounds = array<i64: 2>, scalar_prefetch = 0 : i64, scratch_operands = 1 : i64, tpu.core_type = #tpu.core_type<tc>, window_params = [{transform_indices = @transform_0, window_bounds = array<i64: 1, 256, 128>}, {pipeline_mode = #tpu.pipeline_mode<synchronous>, transform_indices = @transform_1, window_bounds = array<i64: 1, 128>}, {pipeline_mode = #tpu.pipeline_mode<synchronous>, transform_indices = @transform_2, window_bounds = array<i64: 1, 128>}, {pipeline_mode = #tpu.pipeline_mode<synchronous>, transform_indices = @transform_3, window_bounds = array<i64: 128, 256>}, {pipeline_mode = #tpu.pipeline_mode<synchronous>, transform_indices = @transform_4, window_bounds = array<i64: 1, 256>}, {pipeline_mode = #tpu.pipeline_mode<synchronous>, transform_indices = @transform_5, window_bounds = array<i64: 256, 128>}, {pipeline_mode = #tpu.pipeline_mode<synchronous>, transform_indices = @transform_6, window_bounds = array<i64: 1, 128>}, {pipeline_mode = #tpu.pipeline_mode<synchronous>, transform_indices = @transform_7, window_bounds = array<i64: 1, 128>}, {pipeline_mode = #tpu.pipeline_mode<synchronous>, transform_indices = @transform_8, window_bounds = array<i64: 1, 128>}, {pipeline_mode = #tpu.pipeline_mode<synchronous>, transform_indices = @transform_9, window_bounds = array<i64: 3, 3, 128>}, {pipeline_mode = #tpu.pipeline_mode<synchronous>, transform_indices = @transform_10, window_bounds = array<i64: 1, 128>}, {pipeline_mode = #tpu.pipeline_mode<synchronous>, transform_indices = @transform_11, window_bounds = array<i64: 1, 128>}, {pipeline_mode = #tpu.pipeline_mode<synchronous>, transform_indices = @transform_12, window_bounds = array<i64: 128, 256>}, {pipeline_mode = #tpu.pipeline_mode<synchronous>, transform_indices = @transform_13, window_bounds = array<i64: 1, 256>}, {pipeline_mode = #tpu.pipeline_mode<synchronous>, transform_indices = @transform_14, window_bounds = array<i64: 256, 128>}, {pipeline_mode = #tpu.pipeline_mode<synchronous>, transform_indices = @transform_15, window_bounds = array<i64: 1, 128>}, {transform_indices = @transform_16, window_bounds = array<i64: 1, 256, 128>}]} {
    %c0 = arith.constant 0 : index
    %c0_0 = arith.constant 0 : index
    %c0_1 = arith.constant 0 : index
    %0 = vector.load %arg1[%c0, %c0_0, %c0_1] : memref<1x256x128xf32, #tpu.memory_space<vmem>>, vector<1x256x128xf32>
    %1 = vector.shape_cast %0 : vector<1x256x128xf32> to vector<256x128xf32>
    %c0_2 = arith.constant 0 : index
    %c0_3 = arith.constant 0 : index
    %2 = vector.load %arg2[%c0_2, %c0_3] : memref<1x128xf32, #tpu.memory_space<vmem>>, vector<1x128xf32>
    %c0_4 = arith.constant 0 : index
    %c0_5 = arith.constant 0 : index
    %3 = vector.load %arg3[%c0_4, %c0_5] : memref<1x128xf32, #tpu.memory_space<vmem>>, vector<1x128xf32>
    %cst = arith.constant dense<0.000000e+00> : vector<256xf32>
    %4 = vector.multi_reduction <add>, %1, %cst [1] : vector<256x128xf32> to vector<256xf32>
    %5 = vector.shape_cast %4 : vector<256xf32> to vector<256x1xf32>
    %cst_6 = arith.constant 1.280000e+02 : f32
    %6 = vector.broadcast %cst_6 : f32 to vector<256x1xf32>
    %7 = arith.divf %5, %6 : vector<256x1xf32>
    %8 = vector.broadcast %7 : vector<256x1xf32> to vector<256x128xf32>
    %9 = arith.subf %1, %8 : vector<256x128xf32>
    %10 = arith.mulf %9, %9 : vector<256x128xf32>
    %cst_7 = arith.constant dense<0.000000e+00> : vector<256xf32>
    %11 = vector.multi_reduction <add>, %10, %cst_7 [1] : vector<256x128xf32> to vector<256xf32>
    %12 = vector.shape_cast %11 : vector<256xf32> to vector<256x1xf32>
    %cst_8 = arith.constant 1.280000e+02 : f32
    %13 = vector.broadcast %cst_8 : f32 to vector<256x1xf32>
    %14 = arith.divf %12, %13 : vector<256x1xf32>
    %cst_9 = arith.constant 9.99999974E-6 : f32
    %15 = vector.broadcast %cst_9 : f32 to vector<256x1xf32>
    %16 = arith.addf %14, %15 : vector<256x1xf32>
    %17 = math.rsqrt %16 : vector<256x1xf32>
    %18 = vector.broadcast %17 : vector<256x1xf32> to vector<256x128xf32>
    %19 = arith.mulf %9, %18 : vector<256x128xf32>
    %20 = vector.broadcast %2 : vector<1x128xf32> to vector<256x128xf32>
    %21 = arith.mulf %19, %20 : vector<256x128xf32>
    %22 = vector.broadcast %3 : vector<1x128xf32> to vector<256x128xf32>
    %23 = arith.addf %21, %22 : vector<256x128xf32>
    %24 = arith.truncf %23 : vector<256x128xf32> to vector<256x128xbf16>
    %c0_10 = arith.constant 0 : index
    %c0_11 = arith.constant 0 : index
    %25 = vector.load %arg4[%c0_10, %c0_11] : memref<128x256xbf16, #tpu.memory_space<vmem>>, vector<128x256xbf16>
    %cst_12 = arith.constant dense<0.000000e+00> : vector<256x256xf32>
    %26 = tpu.matmul %24, %25, %cst_12 {dimension_numbers = #tpu.dot_dimension_numbers<[1], [0], [0], [1], [0, 0, 1, 1], [], []>} : vector<256x128xbf16>, vector<128x256xbf16>, vector<256x256xf32> -> vector<256x256xf32>
    %c0_13 = arith.constant 0 : index
    %c0_14 = arith.constant 0 : index
    %27 = vector.load %arg5[%c0_13, %c0_14] : memref<1x256xf32, #tpu.memory_space<vmem>>, vector<1x256xf32>
    %28 = vector.broadcast %27 : vector<1x256xf32> to vector<256x256xf32>
    %29 = arith.addf %26, %28 : vector<256x256xf32>
    %30 = arith.mulf %29, %29 : vector<256x256xf32>
    %31 = arith.mulf %29, %30 : vector<256x256xf32>
    %cst_15 = arith.constant 4.471500e-02 : f32
    %32 = vector.broadcast %cst_15 : f32 to vector<256x256xf32>
    %33 = arith.mulf %32, %31 : vector<256x256xf32>
    %34 = arith.addf %29, %33 : vector<256x256xf32>
    %cst_16 = arith.constant 0.797884583 : f32
    %35 = vector.broadcast %cst_16 : f32 to vector<256x256xf32>
    %36 = arith.mulf %35, %34 : vector<256x256xf32>
    %37 = math.tanh %36 : vector<256x256xf32>
    %cst_17 = arith.constant 1.000000e+00 : f32
    %38 = vector.broadcast %cst_17 : f32 to vector<256x256xf32>
    %39 = arith.addf %38, %37 : vector<256x256xf32>
    %cst_18 = arith.constant 5.000000e-01 : f32
    %40 = vector.broadcast %cst_18 : f32 to vector<256x256xf32>
    %41 = arith.mulf %40, %39 : vector<256x256xf32>
    %42 = arith.mulf %29, %41 : vector<256x256xf32>
    %43 = arith.truncf %42 : vector<256x256xf32> to vector<256x256xbf16>
    %c0_19 = arith.constant 0 : index
    %c0_20 = arith.constant 0 : index
    %44 = vector.load %arg6[%c0_19, %c0_20] : memref<256x128xbf16, #tpu.memory_space<vmem>>, vector<256x128xbf16>
    %cst_21 = arith.constant dense<0.000000e+00> : vector<256x128xf32>
    %45 = tpu.matmul %43, %44, %cst_21 {dimension_numbers = #tpu.dot_dimension_numbers<[1], [0], [0], [1], [0, 0, 1, 1], [], []>} : vector<256x256xbf16>, vector<256x128xbf16>, vector<256x128xf32> -> vector<256x128xf32>
    %c0_22 = arith.constant 0 : index
    %c0_23 = arith.constant 0 : index
    %46 = vector.load %arg7[%c0_22, %c0_23] : memref<1x128xf32, #tpu.memory_space<vmem>>, vector<1x128xf32>
    %47 = vector.broadcast %46 : vector<1x128xf32> to vector<256x128xf32>
    %48 = arith.addf %45, %47 : vector<256x128xf32>
    %49 = arith.addf %1, %48 : vector<256x128xf32>
    %c0_24 = arith.constant 0 : index
    %c0_25 = arith.constant 0 : index
    %50 = vector.load %arg8[%c0_24, %c0_25] : memref<1x128xf32, #tpu.memory_space<vmem>>, vector<1x128xf32>
    %c0_26 = arith.constant 0 : index
    %c0_27 = arith.constant 0 : index
    %51 = vector.load %arg9[%c0_26, %c0_27] : memref<1x128xf32, #tpu.memory_space<vmem>>, vector<1x128xf32>
    %cst_28 = arith.constant dense<0.000000e+00> : vector<256xf32>
    %52 = vector.multi_reduction <add>, %49, %cst_28 [1] : vector<256x128xf32> to vector<256xf32>
    %53 = vector.shape_cast %52 : vector<256xf32> to vector<256x1xf32>
    %cst_29 = arith.constant 1.280000e+02 : f32
    %54 = vector.broadcast %cst_29 : f32 to vector<256x1xf32>
    %55 = arith.divf %53, %54 : vector<256x1xf32>
    %56 = vector.broadcast %55 : vector<256x1xf32> to vector<256x128xf32>
    %57 = arith.subf %49, %56 : vector<256x128xf32>
    %58 = arith.mulf %57, %57 : vector<256x128xf32>
    %cst_30 = arith.constant dense<0.000000e+00> : vector<256xf32>
    %59 = vector.multi_reduction <add>, %58, %cst_30 [1] : vector<256x128xf32> to vector<256xf32>
    %60 = vector.shape_cast %59 : vector<256xf32> to vector<256x1xf32>
    %cst_31 = arith.constant 1.280000e+02 : f32
    %61 = vector.broadcast %cst_31 : f32 to vector<256x1xf32>
    %62 = arith.divf %60, %61 : vector<256x1xf32>
    %cst_32 = arith.constant 9.99999974E-6 : f32
    %63 = vector.broadcast %cst_32 : f32 to vector<256x1xf32>
    %64 = arith.addf %62, %63 : vector<256x1xf32>
    %65 = math.rsqrt %64 : vector<256x1xf32>
    %66 = vector.broadcast %65 : vector<256x1xf32> to vector<256x128xf32>
    %67 = arith.mulf %57, %66 : vector<256x128xf32>
    %68 = vector.broadcast %50 : vector<1x128xf32> to vector<256x128xf32>
    %69 = arith.mulf %67, %68 : vector<256x128xf32>
    %70 = vector.broadcast %51 : vector<1x128xf32> to vector<256x128xf32>
    %71 = arith.addf %69, %70 : vector<256x128xf32>
    %cst_33 = arith.constant 0.000000e+00 : f32
    %72 = vector.broadcast %cst_33 : f32 to vector<18x24x128xf32>
    %c0_34 = arith.constant 0 : index
    %c0_35 = arith.constant 0 : index
    %c0_36 = arith.constant 0 : index
    %73 = vector.load %arg18[%c0_34, %c0_35, %c0_36] : memref<18x24x128xf32, #tpu.memory_space<vmem>>, vector<18x24x128xf32>
    tpu.vector_store %arg18[%c0_34, %c0_35, %c0_36], %72 {strides = array<i32>} : memref<18x24x128xf32, #tpu.memory_space<vmem>>, vector<18x24x128xf32>,
    %74 = vector.shape_cast %71 : vector<256x128xf32> to vector<16x16x128xf32>
    %c1 = arith.constant 1 : index
    %c1_37 = arith.constant 1 : index
    %c0_38 = arith.constant 0 : index
    %75 = vector.load %arg18[%c1, %c1_37, %c0_38] : memref<18x24x128xf32, #tpu.memory_space<vmem>>, vector<16x16x128xf32>
    tpu.vector_store %arg18[%c1, %c1_37, %c0_38], %74 {strides = array<i32>} : memref<18x24x128xf32, #tpu.memory_space<vmem>>, vector<16x16x128xf32>,
    %c0_39 = arith.constant 0 : index
    %c0_40 = arith.constant 0 : index
    %c0_41 = arith.constant 0 : index
    %76 = vector.load %arg10[%c0_39, %c0_40, %c0_41] : memref<3x3x128xf32, #tpu.memory_space<vmem>>, vector<3x3x128xf32>
    %cst_42 = arith.constant 0.000000e+00 : f32
    %77 = vector.broadcast %cst_42 : f32 to vector<16x16x128xf32>
    %c0_43 = arith.constant 0 : index
    %c0_44 = arith.constant 0 : index
    %c0_45 = arith.constant 0 : index
    %78 = vector.load %arg18[%c0_43, %c0_44, %c0_45] : memref<18x24x128xf32, #tpu.memory_space<vmem>>, vector<16x16x128xf32>
    %79 = vector.extract_strided_slice %76 {offsets = [0, 0, 0], sizes = [1, 1, 128], strides = [1, 1, 1]} : vector<3x3x128xf32> to vector<1x1x128xf32>
    %80 = vector.broadcast %79 : vector<1x1x128xf32> to vector<16x16x128xf32>
    %81 = arith.mulf %78, %80 : vector<16x16x128xf32>
    %82 = arith.addf %77, %81 : vector<16x16x128xf32>
    %c0_46 = arith.constant 0 : index
    %c1_47 = arith.constant 1 : index
    %c0_48 = arith.constant 0 : index
    %83 = vector.load %arg18[%c0_46, %c1_47, %c0_48] : memref<18x24x128xf32, #tpu.memory_space<vmem>>, vector<16x16x128xf32>
    %84 = vector.extract_strided_slice %76 {offsets = [0, 1, 0], sizes = [1, 1, 128], strides = [1, 1, 1]} : vector<3x3x128xf32> to vector<1x1x128xf32>
    %85 = vector.broadcast %84 : vector<1x1x128xf32> to vector<16x16x128xf32>
    %86 = arith.mulf %83, %85 : vector<16x16x128xf32>
    %87 = arith.addf %82, %86 : vector<16x16x128xf32>
    %c0_49 = arith.constant 0 : index
    %c2 = arith.constant 2 : index
    %c0_50 = arith.constant 0 : index
    %88 = vector.load %arg18[%c0_49, %c2, %c0_50] : memref<18x24x128xf32, #tpu.memory_space<vmem>>, vector<16x16x128xf32>
    %89 = vector.extract_strided_slice %76 {offsets = [0, 2, 0], sizes = [1, 1, 128], strides = [1, 1, 1]} : vector<3x3x128xf32> to vector<1x1x128xf32>
    %90 = vector.broadcast %89 : vector<1x1x128xf32> to vector<16x16x128xf32>
    %91 = arith.mulf %88, %90 : vector<16x16x128xf32>
    %92 = arith.addf %87, %91 : vector<16x16x128xf32>
    %c1_51 = arith.constant 1 : index
    %c0_52 = arith.constant 0 : index
    %c0_53 = arith.constant 0 : index
    %93 = vector.load %arg18[%c1_51, %c0_52, %c0_53] : memref<18x24x128xf32, #tpu.memory_space<vmem>>, vector<16x16x128xf32>
    %94 = vector.extract_strided_slice %76 {offsets = [1, 0, 0], sizes = [1, 1, 128], strides = [1, 1, 1]} : vector<3x3x128xf32> to vector<1x1x128xf32>
    %95 = vector.broadcast %94 : vector<1x1x128xf32> to vector<16x16x128xf32>
    %96 = arith.mulf %93, %95 : vector<16x16x128xf32>
    %97 = arith.addf %92, %96 : vector<16x16x128xf32>
    %c1_54 = arith.constant 1 : index
    %c1_55 = arith.constant 1 : index
    %c0_56 = arith.constant 0 : index
    %98 = vector.load %arg18[%c1_54, %c1_55, %c0_56] : memref<18x24x128xf32, #tpu.memory_space<vmem>>, vector<16x16x128xf32>
    %99 = vector.extract_strided_slice %76 {offsets = [1, 1, 0], sizes = [1, 1, 128], strides = [1, 1, 1]} : vector<3x3x128xf32> to vector<1x1x128xf32>
    %100 = vector.broadcast %99 : vector<1x1x128xf32> to vector<16x16x128xf32>
    %101 = arith.mulf %98, %100 : vector<16x16x128xf32>
    %102 = arith.addf %97, %101 : vector<16x16x128xf32>
    %c1_57 = arith.constant 1 : index
    %c2_58 = arith.constant 2 : index
    %c0_59 = arith.constant 0 : index
    %103 = vector.load %arg18[%c1_57, %c2_58, %c0_59] : memref<18x24x128xf32, #tpu.memory_space<vmem>>, vector<16x16x128xf32>
    %104 = vector.extract_strided_slice %76 {offsets = [1, 2, 0], sizes = [1, 1, 128], strides = [1, 1, 1]} : vector<3x3x128xf32> to vector<1x1x128xf32>
    %105 = vector.broadcast %104 : vector<1x1x128xf32> to vector<16x16x128xf32>
    %106 = arith.mulf %103, %105 : vector<16x16x128xf32>
    %107 = arith.addf %102, %106 : vector<16x16x128xf32>
    %c2_60 = arith.constant 2 : index
    %c0_61 = arith.constant 0 : index
    %c0_62 = arith.constant 0 : index
    %108 = vector.load %arg18[%c2_60, %c0_61, %c0_62] : memref<18x24x128xf32, #tpu.memory_space<vmem>>, vector<16x16x128xf32>
    %109 = vector.extract_strided_slice %76 {offsets = [2, 0, 0], sizes = [1, 1, 128], strides = [1, 1, 1]} : vector<3x3x128xf32> to vector<1x1x128xf32>
    %110 = vector.broadcast %109 : vector<1x1x128xf32> to vector<16x16x128xf32>
    %111 = arith.mulf %108, %110 : vector<16x16x128xf32>
    %112 = arith.addf %107, %111 : vector<16x16x128xf32>
    %c2_63 = arith.constant 2 : index
    %c1_64 = arith.constant 1 : index
    %c0_65 = arith.constant 0 : index
    %113 = vector.load %arg18[%c2_63, %c1_64, %c0_65] : memref<18x24x128xf32, #tpu.memory_space<vmem>>, vector<16x16x128xf32>
    %114 = vector.extract_strided_slice %76 {offsets = [2, 1, 0], sizes = [1, 1, 128], strides = [1, 1, 1]} : vector<3x3x128xf32> to vector<1x1x128xf32>
    %115 = vector.broadcast %114 : vector<1x1x128xf32> to vector<16x16x128xf32>
    %116 = arith.mulf %113, %115 : vector<16x16x128xf32>
    %117 = arith.addf %112, %116 : vector<16x16x128xf32>
    %c2_66 = arith.constant 2 : index
    %c2_67 = arith.constant 2 : index
    %c0_68 = arith.constant 0 : index
    %118 = vector.load %arg18[%c2_66, %c2_67, %c0_68] : memref<18x24x128xf32, #tpu.memory_space<vmem>>, vector<16x16x128xf32>
    %119 = vector.extract_strided_slice %76 {offsets = [2, 2, 0], sizes = [1, 1, 128], strides = [1, 1, 1]} : vector<3x3x128xf32> to vector<1x1x128xf32>
    %120 = vector.broadcast %119 : vector<1x1x128xf32> to vector<16x16x128xf32>
    %121 = arith.mulf %118, %120 : vector<16x16x128xf32>
    %122 = arith.addf %117, %121 : vector<16x16x128xf32>
    %123 = vector.shape_cast %122 : vector<16x16x128xf32> to vector<256x128xf32>
    %c0_69 = arith.constant 0 : index
    %c0_70 = arith.constant 0 : index
    %124 = vector.load %arg11[%c0_69, %c0_70] : memref<1x128xf32, #tpu.memory_space<vmem>>, vector<1x128xf32>
    %c0_71 = arith.constant 0 : index
    %c0_72 = arith.constant 0 : index
    %125 = vector.load %arg12[%c0_71, %c0_72] : memref<1x128xf32, #tpu.memory_space<vmem>>, vector<1x128xf32>
    %cst_73 = arith.constant dense<0.000000e+00> : vector<256xf32>
    %126 = vector.multi_reduction <add>, %123, %cst_73 [1] : vector<256x128xf32> to vector<256xf32>
    %127 = vector.shape_cast %126 : vector<256xf32> to vector<256x1xf32>
    %cst_74 = arith.constant 1.280000e+02 : f32
    %128 = vector.broadcast %cst_74 : f32 to vector<256x1xf32>
    %129 = arith.divf %127, %128 : vector<256x1xf32>
    %130 = vector.broadcast %129 : vector<256x1xf32> to vector<256x128xf32>
    %131 = arith.subf %123, %130 : vector<256x128xf32>
    %132 = arith.mulf %131, %131 : vector<256x128xf32>
    %cst_75 = arith.constant dense<0.000000e+00> : vector<256xf32>
    %133 = vector.multi_reduction <add>, %132, %cst_75 [1] : vector<256x128xf32> to vector<256xf32>
    %134 = vector.shape_cast %133 : vector<256xf32> to vector<256x1xf32>
    %cst_76 = arith.constant 1.280000e+02 : f32
    %135 = vector.broadcast %cst_76 : f32 to vector<256x1xf32>
    %136 = arith.divf %134, %135 : vector<256x1xf32>
    %cst_77 = arith.constant 9.99999974E-6 : f32
    %137 = vector.broadcast %cst_77 : f32 to vector<256x1xf32>
    %138 = arith.addf %136, %137 : vector<256x1xf32>
    %139 = math.rsqrt %138 : vector<256x1xf32>
    %140 = vector.broadcast %139 : vector<256x1xf32> to vector<256x128xf32>
    %141 = arith.mulf %131, %140 : vector<256x128xf32>
    %142 = vector.broadcast %124 : vector<1x128xf32> to vector<256x128xf32>
    %143 = arith.mulf %141, %142 : vector<256x128xf32>
    %144 = vector.broadcast %125 : vector<1x128xf32> to vector<256x128xf32>
    %145 = arith.addf %143, %144 : vector<256x128xf32>
    %146 = arith.truncf %145 : vector<256x128xf32> to vector<256x128xbf16>
    %c0_78 = arith.constant 0 : index
    %c0_79 = arith.constant 0 : index
    %147 = vector.load %arg13[%c0_78, %c0_79] : memref<128x256xbf16, #tpu.memory_space<vmem>>, vector<128x256xbf16>
    %cst_80 = arith.constant dense<0.000000e+00> : vector<256x256xf32>
    %148 = tpu.matmul %146, %147, %cst_80 {dimension_numbers = #tpu.dot_dimension_numbers<[1], [0], [0], [1], [0, 0, 1, 1], [], []>} : vector<256x128xbf16>, vector<128x256xbf16>, vector<256x256xf32> -> vector<256x256xf32>
    %c0_81 = arith.constant 0 : index
    %c0_82 = arith.constant 0 : index
    %149 = vector.load %arg14[%c0_81, %c0_82] : memref<1x256xf32, #tpu.memory_space<vmem>>, vector<1x256xf32>
    %150 = vector.broadcast %149 : vector<1x256xf32> to vector<256x256xf32>
    %151 = arith.addf %148, %150 : vector<256x256xf32>
    %152 = arith.mulf %151, %151 : vector<256x256xf32>
    %153 = arith.mulf %151, %152 : vector<256x256xf32>
    %cst_83 = arith.constant 4.471500e-02 : f32
    %154 = vector.broadcast %cst_83 : f32 to vector<256x256xf32>
    %155 = arith.mulf %154, %153 : vector<256x256xf32>
    %156 = arith.addf %151, %155 : vector<256x256xf32>
    %cst_84 = arith.constant 0.797884583 : f32
    %157 = vector.broadcast %cst_84 : f32 to vector<256x256xf32>
    %158 = arith.mulf %157, %156 : vector<256x256xf32>
    %159 = math.tanh %158 : vector<256x256xf32>
    %cst_85 = arith.constant 1.000000e+00 : f32
    %160 = vector.broadcast %cst_85 : f32 to vector<256x256xf32>
    %161 = arith.addf %160, %159 : vector<256x256xf32>
    %cst_86 = arith.constant 5.000000e-01 : f32
    %162 = vector.broadcast %cst_86 : f32 to vector<256x256xf32>
    %163 = arith.mulf %162, %161 : vector<256x256xf32>
    %164 = arith.mulf %151, %163 : vector<256x256xf32>
    %165 = arith.truncf %164 : vector<256x256xf32> to vector<256x256xbf16>
    %c0_87 = arith.constant 0 : index
    %c0_88 = arith.constant 0 : index
    %166 = vector.load %arg15[%c0_87, %c0_88] : memref<256x128xbf16, #tpu.memory_space<vmem>>, vector<256x128xbf16>
    %cst_89 = arith.constant dense<0.000000e+00> : vector<256x128xf32>
    %167 = tpu.matmul %165, %166, %cst_89 {dimension_numbers = #tpu.dot_dimension_numbers<[1], [0], [0], [1], [0, 0, 1, 1], [], []>} : vector<256x256xbf16>, vector<256x128xbf16>, vector<256x128xf32> -> vector<256x128xf32>
    %c0_90 = arith.constant 0 : index
    %c0_91 = arith.constant 0 : index
    %168 = vector.load %arg16[%c0_90, %c0_91] : memref<1x128xf32, #tpu.memory_space<vmem>>, vector<1x128xf32>
    %169 = vector.broadcast %168 : vector<1x128xf32> to vector<256x128xf32>
    %170 = arith.addf %167, %169 : vector<256x128xf32>
    %171 = arith.addf %123, %170 : vector<256x128xf32>
    %c0_92 = arith.constant 0 : index
    %c0_93 = arith.constant 0 : index
    %c0_94 = arith.constant 0 : index
    %172 = vector.load %arg17[%c0_92, %c0_93, %c0_94] : memref<1x256x128xf32, #tpu.memory_space<vmem>>, vector<1x256x128xf32>
    %173 = vector.shape_cast %172 : vector<1x256x128xf32> to vector<256x128xf32>
    %174 = vector.shape_cast %171 : vector<256x128xf32> to vector<1x256x128xf32>
    tpu.vector_store %arg17[%c0_92, %c0_93, %c0_94], %174 {strides = array<i32>} : memref<1x256x128xf32, #tpu.memory_space<vmem>>, vector<1x256x128xf32>,
    return
  }
  func.func @transform_0(%arg0: i32) -> (i32, i32, i32) {
    %c0_i32 = arith.constant 0 : i32
    %c0_i32_0 = arith.constant 0 : i32
    %c0_i32_1 = arith.constant 0 : i32
    return %arg0, %c0_i32, %c0_i32_0 : i32, i32, i32
  }
  func.func @transform_1(%arg0: i32) -> (i32, i32) {
    %c0_i32 = arith.constant 0 : i32
    %c0_i32_0 = arith.constant 0 : i32
    %c0_i32_1 = arith.constant 0 : i32
    return %c0_i32, %c0_i32_0 : i32, i32
  }
  func.func @transform_2(%arg0: i32) -> (i32, i32) {
    %c0_i32 = arith.constant 0 : i32
    %c0_i32_0 = arith.constant 0 : i32
    %c0_i32_1 = arith.constant 0 : i32
    return %c0_i32, %c0_i32_0 : i32, i32
  }
  func.func @transform_3(%arg0: i32) -> (i32, i32) {
    %c0_i32 = arith.constant 0 : i32
    %c0_i32_0 = arith.constant 0 : i32
    %c0_i32_1 = arith.constant 0 : i32
    return %c0_i32, %c0_i32_0 : i32, i32
  }
  func.func @transform_4(%arg0: i32) -> (i32, i32) {
    %c0_i32 = arith.constant 0 : i32
    %c0_i32_0 = arith.constant 0 : i32
    %c0_i32_1 = arith.constant 0 : i32
    return %c0_i32, %c0_i32_0 : i32, i32
  }
  func.func @transform_5(%arg0: i32) -> (i32, i32) {
    %c0_i32 = arith.constant 0 : i32
    %c0_i32_0 = arith.constant 0 : i32
    %c0_i32_1 = arith.constant 0 : i32
    return %c0_i32, %c0_i32_0 : i32, i32
  }
  func.func @transform_6(%arg0: i32) -> (i32, i32) {
    %c0_i32 = arith.constant 0 : i32
    %c0_i32_0 = arith.constant 0 : i32
    %c0_i32_1 = arith.constant 0 : i32
    return %c0_i32, %c0_i32_0 : i32, i32
  }
  func.func @transform_7(%arg0: i32) -> (i32, i32) {
    %c0_i32 = arith.constant 0 : i32
    %c0_i32_0 = arith.constant 0 : i32
    %c0_i32_1 = arith.constant 0 : i32
    return %c0_i32, %c0_i32_0 : i32, i32
  }
  func.func @transform_8(%arg0: i32) -> (i32, i32) {
    %c0_i32 = arith.constant 0 : i32
    %c0_i32_0 = arith.constant 0 : i32
    %c0_i32_1 = arith.constant 0 : i32
    return %c0_i32, %c0_i32_0 : i32, i32
  }
  func.func @transform_9(%arg0: i32) -> (i32, i32, i32) {
    %c0_i32 = arith.constant 0 : i32
    %c0_i32_0 = arith.constant 0 : i32
    %c0_i32_1 = arith.constant 0 : i32
    %c0_i32_2 = arith.constant 0 : i32
    return %c0_i32, %c0_i32_0, %c0_i32_1 : i32, i32, i32
  }
  func.func @transform_10(%arg0: i32) -> (i32, i32) {
    %c0_i32 = arith.constant 0 : i32
    %c0_i32_0 = arith.constant 0 : i32
    %c0_i32_1 = arith.constant 0 : i32
    return %c0_i32, %c0_i32_0 : i32, i32
  }
  func.func @transform_11(%arg0: i32) -> (i32, i32) {
    %c0_i32 = arith.constant 0 : i32
    %c0_i32_0 = arith.constant 0 : i32
    %c0_i32_1 = arith.constant 0 : i32
    return %c0_i32, %c0_i32_0 : i32, i32
  }
  func.func @transform_12(%arg0: i32) -> (i32, i32) {
    %c0_i32 = arith.constant 0 : i32
    %c0_i32_0 = arith.constant 0 : i32
    %c0_i32_1 = arith.constant 0 : i32
    return %c0_i32, %c0_i32_0 : i32, i32
  }
  func.func @transform_13(%arg0: i32) -> (i32, i32) {
    %c0_i32 = arith.constant 0 : i32
    %c0_i32_0 = arith.constant 0 : i32
    %c0_i32_1 = arith.constant 0 : i32
    return %c0_i32, %c0_i32_0 : i32, i32
  }
  func.func @transform_14(%arg0: i32) -> (i32, i32) {
    %c0_i32 = arith.constant 0 : i32
    %c0_i32_0 = arith.constant 0 : i32
    %c0_i32_1 = arith.constant 0 : i32
    return %c0_i32, %c0_i32_0 : i32, i32
  }
  func.func @transform_15(%arg0: i32) -> (i32, i32) {
    %c0_i32 = arith.constant 0 : i32
    %c0_i32_0 = arith.constant 0 : i32
    %c0_i32_1 = arith.constant 0 : i32
    return %c0_i32, %c0_i32_0 : i32, i32
  }
  func.func @transform_16(%arg0: i32) -> (i32, i32, i32) {
    %c0_i32 = arith.constant 0 : i32
    %c0_i32_0 = arith.constant 0 : i32
    %c0_i32_1 = arith.constant 0 : i32
    return %arg0, %c0_i32, %c0_i32_0 : i32, i32, i32
  }
}

</mosaic_0001>

<llo_original>
// kernel: tpu_custom_call.1
$region0: #{tpu_custom_call.1}
  #allocation0 [shape = 'u32[]', space=smem, size = 0x4, offset = 0x4, fixed_abs, tag = 'smem constant byte address 0x4 - core index']
  #allocation1 [shape = 'u32[144,128]{1,0:T(1,128)}', space=vmem, size = 0x12000, scoped, tag = 'internal scratch']
  #allocation2 [shape = 'f32[18,24,128]{2,1,0:T(8,128)}', space=vmem, size = 0x36000, scoped, tag = 'scratch operand']
  %s0 = inlined_call_operand.hbm [shape: f32[2,256,128], index: 0, kind: input, shape index: {}]
  %s1 = inlined_call_operand.vmem [shape: f32[1,128], index: 1, kind: input, shape index: {}]
  %s2 = inlined_call_operand.vmem [shape: f32[1,128], index: 2, kind: input, shape index: {}]
  %s3 = inlined_call_operand.hbm [shape: bf16[128,256], index: 3, kind: input, shape index: {}]
  %s4 = inlined_call_operand.vmem [shape: f32[1,256], index: 4, kind: input, shape index: {}]
  %s5 = inlined_call_operand.hbm [shape: bf16[256,128], index: 5, kind: input, shape index: {}]
  %s6 = inlined_call_operand.vmem [shape: f32[1,128], index: 6, kind: input, shape index: {}]
  %s7 = inlined_call_operand.vmem [shape: f32[1,128], index: 7, kind: input, shape index: {}]
  %s8 = inlined_call_operand.vmem [shape: f32[1,128], index: 8, kind: input, shape index: {}]
  %s9 = inlined_call_operand.vmem [shape: f32[3,3,128], index: 9, kind: input, shape index: {}]
  %s10 = inlined_call_operand.vmem [shape: f32[1,128], index: 10, kind: input, shape index: {}]
  %s11 = inlined_call_operand.vmem [shape: f32[1,128], index: 11, kind: input, shape index: {}]
  %s12 = inlined_call_operand.hbm [shape: bf16[128,256], index: 12, kind: input, shape index: {}]
  %s13 = inlined_call_operand.vmem [shape: f32[1,256], index: 13, kind: input, shape index: {}]
  %s14 = inlined_call_operand.hbm [shape: bf16[256,128], index: 14, kind: input, shape index: {}]
  %s15 = inlined_call_operand.vmem [shape: f32[1,128], index: 15, kind: input, shape index: {}]
  %s16 = inlined_call_operand.hbm [shape: f32[2,256,128], index: 16, kind: output, shape index: {}]
  %s17 = sld [smem:[#allocation0]]
  $region117: #{tpu_custom_call.1} parent=0
    _
  %s19 = ssub.s32 1, %s17
  %s20 = scalar_select 0, %s19, %s17
  $region1: #{tpu_custom_call.1} parent=0
    #allocation3 [shape = 'u8[262144]{0}', space=vmem, size = 0x40000, scoped, tag = 'input window, operand 0']
    #allocation4 [shape = 's32[2]{0}', space=sflag, size = 0x8, scoped, tag = 'scoped memory for tpu_custom_call.1']
    #allocation5 [shape = 's32[2]{0}', space=sflag, size = 0x8, scoped, tag = 'scoped memory for tpu_custom_call.1']
    #allocation6 [shape = 'u8[65536]{0}', space=vmem, size = 0x10000, scoped, tag = 'input window, operand 3, single buffered']
    #allocation7 [shape = 's32[1]{0}', space=sflag, size = 0x4, scoped, tag = 'scoped memory for tpu_custom_call.1']
    #allocation8 [shape = 'u8[65536]{0}', space=vmem, size = 0x10000, scoped, tag = 'input window, operand 5, single buffered']
    #allocation9 [shape = 'u8[65536]{0}', space=vmem, size = 0x10000, scoped, tag = 'input window, operand 12, single buffered']
    #allocation10 [shape = 's32[1]{0}', space=sflag, size = 0x4, scoped, tag = 'scoped memory for tpu_custom_call.1']
    #allocation11 [shape = 'u8[65536]{0}', space=vmem, size = 0x10000, scoped, tag = 'input window, operand 14, single buffered']
    #allocation12 [shape = 'u8[262144]{0}', space=vmem, size = 0x40000, scoped, tag = 'output window, operand 0']
    %21 = vsyncpa [#allocation4], 0
    %s22 = scalar_lea.sflag [#allocation4], 1
    %23 = vsyncpa %s22, 0
    %24 = vsyncpa [#allocation7], 0
    %25 = vsyncpa [#allocation10], 0
    %26 = vsyncpa [#allocation5], 0
    %s27 = scalar_lea.sflag [#allocation5], 1
    %28 = vsyncpa %s27, 0
    loop: start=0, step=1, limit=4
    $region2: #{tpu_custom_call.1} parent=1 // loop_pre_header
      _
    $region3: #{tpu_custom_call.1} parent=1 // loop_header
      %s30 = sphi 0, %s34
      %p31 = scmp.ge.s32.totalorder %s30, 4
      %s40 = sphi 0, %s42
      %s43 = sphi 0, %s40
      %s44 = sphi 0, %s43
      %s60 = sphi 0, %s44
      %s64 = sphi 0, %s64
      %s66 = sphi 0, %s64
      %s67 = sphi 0, %s66
      %s81 = sphi 0, %s67
      %s85 = sphi 0, %s85
      %s87 = sphi 0, %s85
      %s88 = sphi 0, %s87
      %s102 = sphi 0, %s88
      %s106 = sphi 0, %s106
      %s108 = sphi 0, %s106
      %s109 = sphi 0, %s108
      %s123 = sphi 0, %s109
      %s127 = sphi 0, %s127
      %s129 = sphi 0, %s127
      %s130 = sphi 0, %s129
      %s144 = sphi 0, %s130
      %s148 = sphi 0, %s148
      %s150 = sphi 0, %s148
      %s151 = sphi 0, %s150
      %s165 = sphi 0, %s151
      %s169 = sphi 0, %s169
      %s171 = sphi 0, %s169
      %s172 = sphi 0, %s171
      %s186 = sphi 0, %s172
      %s190 = sphi 0, %s190
      %s192 = sphi 0, %s190
      %s193 = sphi 0, %s192
      %s207 = sphi 0, %s193
      %s211 = sphi 0, %s211
      %s213 = sphi 0, %s211
      %s214 = sphi 0, %s213
      %s228 = sphi 0, %s214
      %s232 = sphi 0, %s232
      %s234 = sphi 0, %s232
      %s235 = sphi 0, %s234
      %s249 = sphi 0, %s235
      %s253 = sphi 0, %s253
      %s255 = sphi 0, %s253
      %s256 = sphi 0, %s255
      %s270 = sphi 0, %s256
      %s274 = sphi 0, %s274
      %s276 = sphi 0, %s274
      %s277 = sphi 0, %s276
      %s291 = sphi 0, %s277
      %s295 = sphi 0, %s295
      %s297 = sphi 0, %s295
      %s298 = sphi 0, %s297
      %s312 = sphi 0, %s298
      %s316 = sphi 0, %s316
      %s318 = sphi 0, %s316
      %s319 = sphi 0, %s318
      %s333 = sphi 0, %s319
      %s337 = sphi 0, %s337
      %s339 = sphi 0, %s337
      %s340 = sphi 0, %s339
      %s354 = sphi 0, %s340
      %s358 = sphi 0, %s358
      %s360 = sphi 0, %s358
      %s361 = sphi 0, %s360
      %s375 = sphi 0, %s361
      %s381 = sphi 0, %s383
      %s384 = sphi 0, %s381
      %s385 = sphi 0, %s384
      %s401 = sphi 0, %s385
    $region4: #{tpu_custom_call.1} parent=1 // loop_header_branch
      %33 = sbr.rel (%p31) target = $region8
    $region5: #{tpu_custom_call.1} parent=1 // loop_body
      %s35 = ssub.s32 %s30, 1
      %s36 = ssub.s32 %s30, 2
      %s37 = sadd.s32 %s30, 1
      %s38 = ssub.s32 %s30, %s37
      %p39 = scmp.eq.s32.totalorder %s38, 0
      %s41 = sadd.s32 %s40, 1
      %s42 = scalar_select %p39, %s40, %s41
      %p45 = pneg %p39
      %p46 = scmp.eq.s32.totalorder %s30, 1
      %p47 = por %p45, %p46
      %p48 = scmp.ne.s32.totalorder %s40, %s43
      %p49 = scmp.eq.s32.totalorder %s30, 0
      %p50 = por %p48, %p49
      %p51 = scmp.ne.s32.totalorder %s40, %s43
      %p52 = scmp.eq.s32.totalorder %s35, 1
      %p53 = por %p51, %p52
      %p54 = scmp.ne.s32.totalorder %s43, %s44
      %p55 = scmp.eq.s32.totalorder %s35, 0
      %p56 = por %p54, %p55
      %p57 = scmp.ne.s32.totalorder %s43, %s44
      %p58 = scmp.eq.s32.totalorder %s36, 1
      %p59 = por %p57, %p58
      %p61 = scmp.ne.s32.totalorder %s44, %s60
      %p62 = scmp.eq.s32.totalorder %s36, 0
      %p63 = por %p61, %p62
      %s65 = sadd.s32 %s64, 1
      %p68 = scmp.eq.s32.totalorder %s30, 1
      %p69 = scmp.ne.s32.totalorder %s64, %s66
      %p70 = scmp.eq.s32.totalorder %s30, 0
      %p71 = por %p69, %p70
      %p72 = scmp.ne.s32.totalorder %s64, %s66
      %p73 = scmp.eq.s32.totalorder %s35, 1
      %p74 = por %p72, %p73
      %p75 = scmp.ne.s32.totalorder %s66, %s67
      %p76 = scmp.eq.s32.totalorder %s35, 0
      %p77 = por %p75, %p76
      %p78 = scmp.ne.s32.totalorder %s66, %s67
      %p79 = scmp.eq.s32.totalorder %s36, 1
      %p80 = por %p78, %p79
      %p82 = scmp.ne.s32.totalorder %s67, %s81
      %p83 = scmp.eq.s32.totalorder %s36, 0
      %p84 = por %p82, %p83
      %s86 = sadd.s32 %s85, 1
      %p89 = scmp.eq.s32.totalorder %s30, 1
      %p90 = scmp.ne.s32.totalorder %s85, %s87
      %p91 = scmp.eq.s32.totalorder %s30, 0
      %p92 = por %p90, %p91
      %p93 = scmp.ne.s32.totalorder %s85, %s87
      %p94 = scmp.eq.s32.totalorder %s35, 1
      %p95 = por %p93, %p94
      %p96 = scmp.ne.s32.totalorder %s87, %s88
      %p97 = scmp.eq.s32.totalorder %s35, 0
      %p98 = por %p96, %p97
      %p99 = scmp.ne.s32.totalorder %s87, %s88
      %p100 = scmp.eq.s32.totalorder %s36, 1
      %p101 = por %p99, %p100
      %p103 = scmp.ne.s32.totalorder %s88, %s102
      %p104 = scmp.eq.s32.totalorder %s36, 0
      %p105 = por %p103, %p104
      %s107 = sadd.s32 %s106, 1
      %p110 = scmp.eq.s32.totalorder %s30, 1
      %p111 = scmp.ne.s32.totalorder %s106, %s108
      %p112 = scmp.eq.s32.totalorder %s30, 0
      %p113 = por %p111, %p112
      %p114 = scmp.ne.s32.totalorder %s106, %s108
      %p115 = scmp.eq.s32.totalorder %s35, 1
      %p116 = por %p114, %p115
      %p117 = scmp.ne.s32.totalorder %s108, %s109
      %p118 = scmp.eq.s32.totalorder %s35, 0
      %p119 = por %p117, %p118
      %p120 = scmp.ne.s32.totalorder %s108, %s109
      %p121 = scmp.eq.s32.totalorder %s36, 1
      %p122 = por %p120, %p121
      %p124 = scmp.ne.s32.totalorder %s109, %s123
      %p125 = scmp.eq.s32.totalorder %s36, 0
      %p126 = por %p124, %p125
      %s128 = sadd.s32 %s127, 1
      %p131 = scmp.eq.s32.totalorder %s30, 1
      %p132 = scmp.ne.s32.totalorder %s127, %s129
      %p133 = scmp.eq.s32.totalorder %s30, 0
      %p134 = por %p132, %p133
      %p135 = scmp.ne.s32.totalorder %s127, %s129
      %p136 = scmp.eq.s32.totalorder %s35, 1
      %p137 = por %p135, %p136
      %p138 = scmp.ne.s32.totalorder %s129, %s130
      %p139 = scmp.eq.s32.totalorder %s35, 0
      %p140 = por %p138, %p139
      %p141 = scmp.ne.s32.totalorder %s129, %s130
      %p142 = scmp.eq.s32.totalorder %s36, 1
      %p143 = por %p141, %p142
      %p145 = scmp.ne.s32.totalorder %s130, %s144
      %p146 = scmp.eq.s32.totalorder %s36, 0
      %p147 = por %p145, %p146
      %s149 = sadd.s32 %s148, 1
      %p152 = scmp.eq.s32.totalorder %s30, 1
      %p153 = scmp.ne.s32.totalorder %s148, %s150
      %p154 = scmp.eq.s32.totalorder %s30, 0
      %p155 = por %p153, %p154
      %p156 = scmp.ne.s32.totalorder %s148, %s150
      %p157 = scmp.eq.s32.totalorder %s35, 1
      %p158 = por %p156, %p157
      %p159 = scmp.ne.s32.totalorder %s150, %s151
      %p160 = scmp.eq.s32.totalorder %s35, 0
      %p161 = por %p159, %p160
      %p162 = scmp.ne.s32.totalorder %s150, %s151
      %p163 = scmp.eq.s32.totalorder %s36, 1
      %p164 = por %p162, %p163
      %p166 = scmp.ne.s32.totalorder %s151, %s165
      %p167 = scmp.eq.s32.totalorder %s36, 0
      %p168 = por %p166, %p167
      %s170 = sadd.s32 %s169, 1
      %p173 = scmp.eq.s32.totalorder %s30, 1
      %p174 = scmp.ne.s32.totalorder %s169, %s171
      %p175 = scmp.eq.s32.totalorder %s30, 0
      %p176 = por %p174, %p175
      %p177 = scmp.ne.s32.totalorder %s169, %s171
      %p178 = scmp.eq.s32.totalorder %s35, 1
      %p179 = por %p177, %p178
      %p180 = scmp.ne.s32.totalorder %s171, %s172
      %p181 = scmp.eq.s32.totalorder %s35, 0
      %p182 = por %p180, %p181
      %p183 = scmp.ne.s32.totalorder %s171, %s172
      %p184 = scmp.eq.s32.totalorder %s36, 1
      %p185 = por %p183, %p184
      %p187 = scmp.ne.s32.totalorder %s172, %s186
      %p188 = scmp.eq.s32.totalorder %s36, 0
      %p189 = por %p187, %p188
      %s191 = sadd.s32 %s190, 1
      %p194 = scmp.eq.s32.totalorder %s30, 1
      %p195 = scmp.ne.s32.totalorder %s190, %s192
      %p196 = scmp.eq.s32.totalorder %s30, 0
      %p197 = por %p195, %p196
      %p198 = scmp.ne.s32.totalorder %s190, %s192
      %p199 = scmp.eq.s32.totalorder %s35, 1
      %p200 = por %p198, %p199
      %p201 = scmp.ne.s32.totalorder %s192, %s193
      %p202 = scmp.eq.s32.totalorder %s35, 0
      %p203 = por %p201, %p202
      %p204 = scmp.ne.s32.totalorder %s192, %s193
      %p205 = scmp.eq.s32.totalorder %s36, 1
      %p206 = por %p204, %p205
      %p208 = scmp.ne.s32.totalorder %s193, %s207
      %p209 = scmp.eq.s32.totalorder %s36, 0
      %p210 = por %p208, %p209
      %s212 = sadd.s32 %s211, 1
      %p215 = scmp.eq.s32.totalorder %s30, 1
      %p216 = scmp.ne.s32.totalorder %s211, %s213
      %p217 = scmp.eq.s32.totalorder %s30, 0
      %p218 = por %p216, %p217
      %p219 = scmp.ne.s32.totalorder %s211, %s213
      %p220 = scmp.eq.s32.totalorder %s35, 1
      %p221 = por %p219, %p220
      %p222 = scmp.ne.s32.totalorder %s213, %s214
      %p223 = scmp.eq.s32.totalorder %s35, 0
      %p224 = por %p222, %p223
      %p225 = scmp.ne.s32.totalorder %s213, %s214
      %p226 = scmp.eq.s32.totalorder %s36, 1
      %p227 = por %p225, %p226
      %p229 = scmp.ne.s32.totalorder %s214, %s228
      %p230 = scmp.eq.s32.totalorder %s36, 0
      %p231 = por %p229, %p230
      %s233 = sadd.s32 %s232, 1
      %p236 = scmp.eq.s32.totalorder %s30, 1
      %p237 = scmp.ne.s32.totalorder %s232, %s234
      %p238 = scmp.eq.s32.totalorder %s30, 0
      %p239 = por %p237, %p238
      %p240 = scmp.ne.s32.totalorder %s232, %s234
      %p241 = scmp.eq.s32.totalorder %s35, 1
      %p242 = por %p240, %p241
      %p243 = scmp.ne.s32.totalorder %s234, %s235
      %p244 = scmp.eq.s32.totalorder %s35, 0
      %p245 = por %p243, %p244
      %p246 = scmp.ne.s32.totalorder %s234, %s235
      %p247 = scmp.eq.s32.totalorder %s36, 1
      %p248 = por %p246, %p247
      %p250 = scmp.ne.s32.totalorder %s235, %s249
      %p251 = scmp.eq.s32.totalorder %s36, 0
      %p252 = por %p250, %p251
      %s254 = sadd.s32 %s253, 1
      %p257 = scmp.eq.s32.totalorder %s30, 1
      %p258 = scmp.ne.s32.totalorder %s253, %s255
      %p259 = scmp.eq.s32.totalorder %s30, 0
      %p260 = por %p258, %p259
      %p261 = scmp.ne.s32.totalorder %s253, %s255
      %p262 = scmp.eq.s32.totalorder %s35, 1
      %p263 = por %p261, %p262
      %p264 = scmp.ne.s32.totalorder %s255, %s256
      %p265 = scmp.eq.s32.totalorder %s35, 0
      %p266 = por %p264, %p265
      %p267 = scmp.ne.s32.totalorder %s255, %s256
      %p268 = scmp.eq.s32.totalorder %s36, 1
      %p269 = por %p267, %p268
      %p271 = scmp.ne.s32.totalorder %s256, %s270
      %p272 = scmp.eq.s32.totalorder %s36, 0
      %p273 = por %p271, %p272
      %s275 = sadd.s32 %s274, 1
      %p278 = scmp.eq.s32.totalorder %s30, 1
      %p279 = scmp.ne.s32.totalorder %s274, %s276
      %p280 = scmp.eq.s32.totalorder %s30, 0
      %p281 = por %p279, %p280
      %p282 = scmp.ne.s32.totalorder %s274, %s276
      %p283 = scmp.eq.s32.totalorder %s35, 1
      %p284 = por %p282, %p283
      %p285 = scmp.ne.s32.totalorder %s276, %s277
      %p286 = scmp.eq.s32.totalorder %s35, 0
      %p287 = por %p285, %p286
      %p288 = scmp.ne.s32.totalorder %s276, %s277
      %p289 = scmp.eq.s32.totalorder %s36, 1
      %p290 = por %p288, %p289
      %p292 = scmp.ne.s32.totalorder %s277, %s291
      %p293 = scmp.eq.s32.totalorder %s36, 0
      %p294 = por %p292, %p293
      %s296 = sadd.s32 %s295, 1
      %p299 = scmp.eq.s32.totalorder %s30, 1
      %p300 = scmp.ne.s32.totalorder %s295, %s297
      %p301 = scmp.eq.s32.totalorder %s30, 0
      %p302 = por %p300, %p301
      %p303 = scmp.ne.s32.totalorder %s295, %s297
      %p304 = scmp.eq.s32.totalorder %s35, 1
      %p305 = por %p303, %p304
      %p306 = scmp.ne.s32.totalorder %s297, %s298
      %p307 = scmp.eq.s32.totalorder %s35, 0
      %p308 = por %p306, %p307
      %p309 = scmp.ne.s32.totalorder %s297, %s298
      %p310 = scmp.eq.s32.totalorder %s36, 1
      %p311 = por %p309, %p310
      %p313 = scmp.ne.s32.totalorder %s298, %s312
      %p314 = scmp.eq.s32.totalorder %s36, 0
      %p315 = por %p313, %p314
      %s317 = sadd.s32 %s316, 1
      %p320 = scmp.eq.s32.totalorder %s30, 1
      %p321 = scmp.ne.s32.totalorder %s316, %s318
      %p322 = scmp.eq.s32.totalorder %s30, 0
      %p323 = por %p321, %p322
      %p324 = scmp.ne.s32.totalorder %s316, %s318
      %p325 = scmp.eq.s32.totalorder %s35, 1
      %p326 = por %p324, %p325
      %p327 = scmp.ne.s32.totalorder %s318, %s319
      %p328 = scmp.eq.s32.totalorder %s35, 0
      %p329 = por %p327, %p328
      %p330 = scmp.ne.s32.totalorder %s318, %s319
      %p331 = scmp.eq.s32.totalorder %s36, 1
      %p332 = por %p330, %p331
      %p334 = scmp.ne.s32.totalorder %s319, %s333
      %p335 = scmp.eq.s32.totalorder %s36, 0
      %p336 = por %p334, %p335
      %s338 = sadd.s32 %s337, 1
      %p341 = scmp.eq.s32.totalorder %s30, 1
      %p342 = scmp.ne.s32.totalorder %s337, %s339
      %p343 = scmp.eq.s32.totalorder %s30, 0
      %p344 = por %p342, %p343
      %p345 = scmp.ne.s32.totalorder %s337, %s339
      %p346 = scmp.eq.s32.totalorder %s35, 1
      %p347 = por %p345, %p346
      %p348 = scmp.ne.s32.totalorder %s339, %s340
      %p349 = scmp.eq.s32.totalorder %s35, 0
      %p350 = por %p348, %p349
      %p351 = scmp.ne.s32.totalorder %s339, %s340
      %p352 = scmp.eq.s32.totalorder %s36, 1
      %p353 = por %p351, %p352
      %p355 = scmp.ne.s32.totalorder %s340, %s354
      %p356 = scmp.eq.s32.totalorder %s36, 0
      %p357 = por %p355, %p356
      %s359 = sadd.s32 %s358, 1
      %p362 = scmp.eq.s32.totalorder %s30, 1
      %p363 = scmp.ne.s32.totalorder %s358, %s360
      %p364 = scmp.eq.s32.totalorder %s30, 0
      %p365 = por %p363, %p364
      %p366 = scmp.ne.s32.totalorder %s358, %s360
      %p367 = scmp.eq.s32.totalorder %s35, 1
      %p368 = por %p366, %p367
      %p369 = scmp.ne.s32.totalorder %s360, %s361
      %p370 = scmp.eq.s32.totalorder %s35, 0
      %p371 = por %p369, %p370
      %p372 = scmp.ne.s32.totalorder %s360, %s361
      %p373 = scmp.eq.s32.totalorder %s36, 1
      %p374 = por %p372, %p373
      %p376 = scmp.ne.s32.totalorder %s361, %s375
      %p377 = scmp.eq.s32.totalorder %s36, 0
      %p378 = por %p376, %p377
      %s379 = ssub.s32 %s30, %s37
      %p380 = scmp.eq.s32.totalorder %s379, 0
      %s382 = sadd.s32 %s381, 1
      %s383 = scalar_select %p380, %s381, %s382
      %p386 = pneg %p380
      %p387 = scmp.eq.s32.totalorder %s30, 1
      %p388 = por %p386, %p387
      %p389 = scmp.ne.s32.totalorder %s381, %s384
      %p390 = scmp.eq.s32.totalorder %s30, 0
      %p391 = por %p389, %p390
      %p392 = scmp.ne.s32.totalorder %s381, %s384
      %p393 = scmp.eq.s32.totalorder %s35, 1
      %p394 = por %p392, %p393
      %p395 = scmp.ne.s32.totalorder %s384, %s385
      %p396 = scmp.eq.s32.totalorder %s35, 0
      %p397 = por %p395, %p396
      %p398 = scmp.ne.s32.totalorder %s384, %s385
      %p399 = scmp.eq.s32.totalorder %s36, 1
      %p400 = por %p398, %p399
      %p402 = scmp.ne.s32.totalorder %s385, %s401
      %p403 = scmp.eq.s32.totalorder %s36, 0
      %p404 = por %p402, %p403
      %p405 = scmp.le.s32.totalorder 1, %s30
      %p406 = scmp.lt.s32.totalorder %s30, 3
      %p407 = pnand %p405, %p406
      %p408 = pneg %p407
      // Predicated region
      $region9: #{tpu_custom_call.1} parent=5 // pred_check
        _
      $region10: #{tpu_custom_call.1} parent=5 // pred_check_branch
        %410 = sbr.rel (%p407) target = $region12
      $region11: #{tpu_custom_call.1} parent=5 // pred_region
        %s411 = ssub.s32 %s30, 1
        // Predicated region
        $region13: #{tpu_custom_call.1} parent=11 // pred_check
          %p412 = pneg %p77
        $region14: #{tpu_custom_call.1} parent=11 // pred_check_branch
          %414 = sbr.rel (%p412) target = $region16
        $region15: #{tpu_custom_call.1} parent=11 // pred_region
          _
        $region16: #{tpu_custom_call.1} parent=11 // pred_fallthru
          _
        // Predicated region
        $region17: #{tpu_custom_call.1} parent=11 // pred_check
          %p415 = pneg %p98
        $region18: #{tpu_custom_call.1} parent=11 // pred_check_branch
          %417 = sbr.rel (%p415) target = $region20
        $region19: #{tpu_custom_call.1} parent=11 // pred_region
          _
        $region20: #{tpu_custom_call.1} parent=11 // pred_fallthru
          _
        // Predicated region
        $region21: #{tpu_custom_call.1} parent=11 // pred_check
          %p418 = pneg %p119
        $region22: #{tpu_custom_call.1} parent=11 // pred_check_branch
          %420 = sbr.rel (%p418) target = $region24
        $region23: #{tpu_custom_call.1} parent=11 // pred_region
          %s422 = ssub.s32 2048, 2048
          %423 = vsyncadd [#allocation7], %s422
          %s424 = sshll.u32 [#allocation6], 4
          %s425 = int_to_ptr.vmem [resolvable:$true] %s424
          %430 = dma.hbm_to_vmem [thread:$0]  %s3, 2048, %s425, [#allocation7], 128, 128, 8
        $region24: #{tpu_custom_call.1} parent=11 // pred_fallthru
          _
        // Predicated region
        $region25: #{tpu_custom_call.1} parent=11 // pred_check
          %p431 = pneg %p140
        $region26: #{tpu_custom_call.1} parent=11 // pred_check_branch
          %433 = sbr.rel (%p431) target = $region28
        $region27: #{tpu_custom_call.1} parent=11 // pred_region
          _
        $region28: #{tpu_custom_call.1} parent=11 // pred_fallthru
          _
        // Predicated region
        $region29: #{tpu_custom_call.1} parent=11 // pred_check
          %p434 = pneg %p161
        $region30: #{tpu_custom_call.1} parent=11 // pred_check_branch
          %436 = sbr.rel (%p434) target = $region32
        $region31: #{tpu_custom_call.1} parent=11 // pred_region
          %s438 = ssub.s32 2048, 2048
          %439 = vsyncadd [#allocation7], %s438
          %s440 = sshll.u32 [#allocation8], 4
          %s441 = int_to_ptr.vmem [resolvable:$true] %s440
          %446 = dma.hbm_to_vmem [thread:$0]  %s5, 2048, %s441, [#allocation7], 64, 64, 4
        $region32: #{tpu_custom_call.1} parent=11 // pred_fallthru
          _
        // Predicated region
        $region33: #{tpu_custom_call.1} parent=11 // pred_check
          %p447 = pneg %p182
        $region34: #{tpu_custom_call.1} parent=11 // pred_check_branch
          %449 = sbr.rel (%p447) target = $region36
        $region35: #{tpu_custom_call.1} parent=11 // pred_region
          _
        $region36: #{tpu_custom_call.1} parent=11 // pred_fallthru
          _
        // Predicated region
        $region37: #{tpu_custom_call.1} parent=11 // pred_check
          %p450 = pneg %p203
        $region38: #{tpu_custom_call.1} parent=11 // pred_check_branch
          %452 = sbr.rel (%p450) target = $region40
        $region39: #{tpu_custom_call.1} parent=11 // pred_region
          _
        $region40: #{tpu_custom_call.1} parent=11 // pred_fallthru
          _
        // Predicated region
        $region41: #{tpu_custom_call.1} parent=11 // pred_check
          %p453 = pneg %p224
        $region42: #{tpu_custom_call.1} parent=11 // pred_check_branch
          %455 = sbr.rel (%p453) target = $region44
        $region43: #{tpu_custom_call.1} parent=11 // pred_region
          _
        $region44: #{tpu_custom_call.1} parent=11 // pred_fallthru
          _
        // Predicated region
        $region45: #{tpu_custom_call.1} parent=11 // pred_check
          %p456 = pneg %p245
        $region46: #{tpu_custom_call.1} parent=11 // pred_check_branch
          %458 = sbr.rel (%p456) target = $region48
        $region47: #{tpu_custom_call.1} parent=11 // pred_region
          _
        $region48: #{tpu_custom_call.1} parent=11 // pred_fallthru
          _
        // Predicated region
        $region49: #{tpu_custom_call.1} parent=11 // pred_check
          %p459 = pneg %p266
        $region50: #{tpu_custom_call.1} parent=11 // pred_check_branch
          %461 = sbr.rel (%p459) target = $region52
        $region51: #{tpu_custom_call.1} parent=11 // pred_region
          _
        $region52: #{tpu_custom_call.1} parent=11 // pred_fallthru
          _
        // Predicated region
        $region53: #{tpu_custom_call.1} parent=11 // pred_check
          %p462 = pneg %p287
        $region54: #{tpu_custom_call.1} parent=11 // pred_check_branch
          %464 = sbr.rel (%p462) target = $region56
        $region55: #{tpu_custom_call.1} parent=11 // pred_region
          _
        $region56: #{tpu_custom_call.1} parent=11 // pred_fallthru
          _
        // Predicated region
        $region57: #{tpu_custom_call.1} parent=11 // pred_check
          %p465 = pneg %p308
        $region58: #{tpu_custom_call.1} parent=11 // pred_check_branch
          %467 = sbr.rel (%p465) target = $region60
        $region59: #{tpu_custom_call.1} parent=11 // pred_region
          %s469 = ssub.s32 2048, 2048
          %470 = vsyncadd [#allocation10], %s469
          %s471 = sshll.u32 [#allocation9], 4
          %s472 = int_to_ptr.vmem [resolvable:$true] %s471
          %477 = dma.hbm_to_vmem [thread:$0]  %s12, 2048, %s472, [#allocation10], 128, 128, 8
        $region60: #{tpu_custom_call.1} parent=11 // pred_fallthru
          _
        // Predicated region
        $region61: #{tpu_custom_call.1} parent=11 // pred_check
          %p478 = pneg %p329
        $region62: #{tpu_custom_call.1} parent=11 // pred_check_branch
          %480 = sbr.rel (%p478) target = $region64
        $region63: #{tpu_custom_call.1} parent=11 // pred_region
          _
        $region64: #{tpu_custom_call.1} parent=11 // pred_fallthru
          _
        // Predicated region
        $region65: #{tpu_custom_call.1} parent=11 // pred_check
          %p481 = pneg %p350
        $region66: #{tpu_custom_call.1} parent=11 // pred_check_branch
          %483 = sbr.rel (%p481) target = $region68
        $region67: #{tpu_custom_call.1} parent=11 // pred_region
          %s485 = ssub.s32 2048, 2048
          %486 = vsyncadd [#allocation10], %s485
          %s487 = sshll.u32 [#allocation11], 4
          %s488 = int_to_ptr.vmem [resolvable:$true] %s487
          %493 = dma.hbm_to_vmem [thread:$0]  %s14, 2048, %s488, [#allocation10], 64, 64, 4
        $region68: #{tpu_custom_call.1} parent=11 // pred_fallthru
          _
        // Predicated region
        $region69: #{tpu_custom_call.1} parent=11 // pred_check
          %p494 = pneg %p371
        $region70: #{tpu_custom_call.1} parent=11 // pred_check_branch
          %496 = sbr.rel (%p494) target = $region72
        $region71: #{tpu_custom_call.1} parent=11 // pred_region
          _
        $region72: #{tpu_custom_call.1} parent=11 // pred_fallthru
          _
      $region12: #{tpu_custom_call.1} parent=5 // pred_fallthru
        _
      %p497 = scmp.lt.s32.totalorder %s30, 2
      // Predicated region
      $region73: #{tpu_custom_call.1} parent=5 // pred_check
        %p498 = pneg %p497
      $region74: #{tpu_custom_call.1} parent=5 // pred_check_branch
        %500 = sbr.rel (%p498) target = $region76
      $region75: #{tpu_custom_call.1} parent=5 // pred_region
        // Predicated region
        $region77: #{tpu_custom_call.1} parent=75 // pred_check
          %p501 = pneg %p50
        $region78: #{tpu_custom_call.1} parent=75 // pred_check_branch
          %503 = sbr.rel (%p501) target = $region80
        $region79: #{tpu_custom_call.1} parent=75 // pred_region
          %s504 = sand.u32 %s40, 1
          %s505 = scalar_lea.sflag [#allocation4], %s504
          %s506 = sand.u32 %s40, 1
          %s507 = smul.addr %s506, 256
          %s508 = scalar_lea.vmem [#allocation3], %s507
          %s510 = ssub.s32 4096, 4096
          %511 = vsyncadd %s505, %s510
          %s512 = smul.addr %s30, 32
          %s513 = smul.addr %s512, 128
          %s514 = scalar_lea.hbm %s0, %s513
          %s515 = sshll.u32 %s508, 4
          %s516 = int_to_ptr.vmem [resolvable:$true] %s515
          %521 = dma.hbm_to_vmem [thread:$0]  %s514, 4096, %s516, %s505, 128, 128, 8
        $region80: #{tpu_custom_call.1} parent=75 // pred_fallthru
          _
      $region76: #{tpu_custom_call.1} parent=5 // pred_fallthru
        _
      %p522 = scmp.le.s32.totalorder 1, %s30
      %p523 = scmp.lt.s32.totalorder %s30, 3
      %p524 = pnand %p522, %p523
      %p525 = pneg %p524
      // Predicated region
      $region81: #{tpu_custom_call.1} parent=5 // pred_check
        _
      $region82: #{tpu_custom_call.1} parent=5 // pred_check_branch
        %527 = sbr.rel (%p524) target = $region84
      $region83: #{tpu_custom_call.1} parent=5 // pred_region
        %s528 = ssub.s32 %s30, 1
        %s529 = sand.u32 %s43, 1
        %s530 = scalar_lea.sflag [#allocation4], %s529
        %s531 = sand.u32 %s43, 1
        %s532 = smul.addr %s531, 256
        %s533 = scalar_lea.vmem [#allocation3], %s532
        // Predicated region
        $region85: #{tpu_custom_call.1} parent=83 // pred_check
          %p534 = pneg %p56
        $region86: #{tpu_custom_call.1} parent=83 // pred_check_branch
          %536 = sbr.rel (%p534) target = $region88
        $region87: #{tpu_custom_call.1} parent=83 // pred_region
          %537 = dma.done %s530, 4096
        $region88: #{tpu_custom_call.1} parent=83 // pred_fallthru
          _
        // Predicated region
        $region89: #{tpu_custom_call.1} parent=83 // pred_check
          %p538 = pneg %p119
        $region90: #{tpu_custom_call.1} parent=83 // pred_check_branch
          %540 = sbr.rel (%p538) target = $region92
        $region91: #{tpu_custom_call.1} parent=83 // pred_region
          %541 = dma.done [#allocation7], 2048
        $region92: #{tpu_custom_call.1} parent=83 // pred_fallthru
          _
        // Predicated region
        $region93: #{tpu_custom_call.1} parent=83 // pred_check
          %p542 = pneg %p161
        $region94: #{tpu_custom_call.1} parent=83 // pred_check_branch
          %544 = sbr.rel (%p542) target = $region96
        $region95: #{tpu_custom_call.1} parent=83 // pred_region
          %545 = dma.done [#allocation7], 2048
        $region96: #{tpu_custom_call.1} parent=83 // pred_fallthru
          _
        // Predicated region
        $region97: #{tpu_custom_call.1} parent=83 // pred_check
          %p546 = pneg %p308
        $region98: #{tpu_custom_call.1} parent=83 // pred_check_branch
          %548 = sbr.rel (%p546) target = $region100
        $region99: #{tpu_custom_call.1} parent=83 // pred_region
          %549 = dma.done [#allocation10], 2048
        $region100: #{tpu_custom_call.1} parent=83 // pred_fallthru
          _
        // Predicated region
        $region101: #{tpu_custom_call.1} parent=83 // pred_check
          %p550 = pneg %p350
        $region102: #{tpu_custom_call.1} parent=83 // pred_check_branch
          %552 = sbr.rel (%p550) target = $region104
        $region103: #{tpu_custom_call.1} parent=83 // pred_region
          %553 = dma.done [#allocation10], 2048
        $region104: #{tpu_custom_call.1} parent=83 // pred_fallthru
          _
        %s554 = sand.u32 %s43, 1
        %s555 = scalar_lea.sflag [#allocation4], %s554
        %s556 = sand.u32 %s43, 1
        %s557 = smul.addr %s556, 256
        %s558 = scalar_lea.vmem [#allocation3], %s557
        %p559 = pneg %p56
        %p560 = pneg %p53
        %p561 = pneg %p77
        %p562 = pneg %p74
        %p563 = pneg %p98
        %p564 = pneg %p95
        %p565 = pneg %p119
        %p566 = pneg %p116
        %p567 = pneg %p140
        %p568 = pneg %p137
        %p569 = pneg %p161
        %p570 = pneg %p158
        %p571 = pneg %p182
        %p572 = pneg %p179
        %p573 = pneg %p203
        %p574 = pneg %p200
        %p575 = pneg %p224
        %p576 = pneg %p221
        %p577 = pneg %p245
        %p578 = pneg %p242
        %p579 = pneg %p266
        %p580 = pneg %p263
        %p581 = pneg %p287
        %p582 = pneg %p284
        %p583 = pneg %p308
        %p584 = pneg %p305
        %p585 = pneg %p329
        %p586 = pneg %p326
        %p587 = pneg %p350
        %p588 = pneg %p347
        %p589 = pneg %p371
        %p590 = pneg %p368
        %p591 = pneg %p397
        %p592 = pneg %p394
        %s593 = sand.u32 %s384, 1
        %s594 = scalar_lea.sflag [#allocation5], %s593
        %s595 = sand.u32 %s384, 1
        %s596 = smul.addr %s595, 256
        %s597 = scalar_lea.vmem [#allocation12], %s596
        %v599 = vld [vmem:[%s533] sm:$0xff]
        %v600 = vld [vmem:[%s533 + $0x8] sm:$0xff]
        %v601 = vld [vmem:[%s533 + $0x10] sm:$0xff]
        %v602 = vld [vmem:[%s533 + $0x18] sm:$0xff]
        %v603 = vld [vmem:[%s533 + $0x20] sm:$0xff]
        %v604 = vld [vmem:[%s533 + $0x28] sm:$0xff]
        %v605 = vld [vmem:[%s533 + $0x30] sm:$0xff]
        %v606 = vld [vmem:[%s533 + $0x38] sm:$0xff]
        %v607 = vld [vmem:[%s533 + $0x40] sm:$0xff]
        %v608 = vld [vmem:[%s533 + $0x48] sm:$0xff]
        %v609 = vld [vmem:[%s533 + $0x50] sm:$0xff]
        %v610 = vld [vmem:[%s533 + $0x58] sm:$0xff]
        %v611 = vld [vmem:[%s533 + $0x60] sm:$0xff]
        %v612 = vld [vmem:[%s533 + $0x68] sm:$0xff]
        %v613 = vld [vmem:[%s533 + $0x70] sm:$0xff]
        %v614 = vld [vmem:[%s533 + $0x78] sm:$0xff]
        %v615 = vld [vmem:[%s533 + $0x80] sm:$0xff]
        %v616 = vld [vmem:[%s533 + $0x88] sm:$0xff]
        %v617 = vld [vmem:[%s533 + $0x90] sm:$0xff]
        %v618 = vld [vmem:[%s533 + $0x98] sm:$0xff]
        %v619 = vld [vmem:[%s533 + $0xa0] sm:$0xff]
        %v620 = vld [vmem:[%s533 + $0xa8] sm:$0xff]
        %v621 = vld [vmem:[%s533 + $0xb0] sm:$0xff]
        %v622 = vld [vmem:[%s533 + $0xb8] sm:$0xff]
        %v623 = vld [vmem:[%s533 + $0xc0] sm:$0xff]
        %v624 = vld [vmem:[%s533 + $0xc8] sm:$0xff]
        %v625 = vld [vmem:[%s533 + $0xd0] sm:$0xff]
        %v626 = vld [vmem:[%s533 + $0xd8] sm:$0xff]
        %v627 = vld [vmem:[%s533 + $0xe0] sm:$0xff]
        %v628 = vld [vmem:[%s533 + $0xe8] sm:$0xff]
        %v629 = vld [vmem:[%s533 + $0xf0] sm:$0xff]
        %v630 = vld [vmem:[%s533 + $0xf8] sm:$0xff]
        %v631 = vld [vmem:[%s1] sm:$0x1]
        %v632 = vld [vmem:[%s2] sm:$0x1]
        %633 = vadd.xlane.f32.xlu0 %v599
        %v634 = vpop.xlane.xlu0 %633
        %635 = vadd.xlane.f32.xlu0 %v600
        %v636 = vpop.xlane.xlu0 %635
        %637 = vadd.xlane.f32.xlu0 %v601
        %v638 = vpop.xlane.xlu0 %637
        %639 = vadd.xlane.f32.xlu0 %v602
        %v640 = vpop.xlane.xlu0 %639
        %641 = vadd.xlane.f32.xlu0 %v603
        %v642 = vpop.xlane.xlu0 %641
        %643 = vadd.xlane.f32.xlu0 %v604
        %v644 = vpop.xlane.xlu0 %643
        %645 = vadd.xlane.f32.xlu0 %v605
        %v646 = vpop.xlane.xlu0 %645
        %647 = vadd.xlane.f32.xlu0 %v606
        %v648 = vpop.xlane.xlu0 %647
        %649 = vadd.xlane.f32.xlu0 %v607
        %v650 = vpop.xlane.xlu0 %649
        %651 = vadd.xlane.f32.xlu0 %v608
        %v652 = vpop.xlane.xlu0 %651
        %653 = vadd.xlane.f32.xlu0 %v609
        %v654 = vpop.xlane.xlu0 %653
        %655 = vadd.xlane.f32.xlu0 %v610
        %v656 = vpop.xlane.xlu0 %655
        %657 = vadd.xlane.f32.xlu0 %v611
        %v658 = vpop.xlane.xlu0 %657
        %659 = vadd.xlane.f32.xlu0 %v612
        %v660 = vpop.xlane.xlu0 %659
        %661 = vadd.xlane.f32.xlu0 %v613
        %v662 = vpop.xlane.xlu0 %661
        %663 = vadd.xlane.f32.xlu0 %v614
        %v664 = vpop.xlane.xlu0 %663
        %665 = vadd.xlane.f32.xlu0 %v615
        %v666 = vpop.xlane.xlu0 %665
        %667 = vadd.xlane.f32.xlu0 %v616
        %v668 = vpop.xlane.xlu0 %667
        %669 = vadd.xlane.f32.xlu0 %v617
        %v670 = vpop.xlane.xlu0 %669
        %671 = vadd.xlane.f32.xlu0 %v618
        %v672 = vpop.xlane.xlu0 %671
        %673 = vadd.xlane.f32.xlu0 %v619
        %v674 = vpop.xlane.xlu0 %673
        %675 = vadd.xlane.f32.xlu0 %v620
        %v676 = vpop.xlane.xlu0 %675
        %677 = vadd.xlane.f32.xlu0 %v621
        %v678 = vpop.xlane.xlu0 %677
        %679 = vadd.xlane.f32.xlu0 %v622
        %v680 = vpop.xlane.xlu0 %679
        %681 = vadd.xlane.f32.xlu0 %v623
        %v682 = vpop.xlane.xlu0 %681
        %683 = vadd.xlane.f32.xlu0 %v624
        %v684 = vpop.xlane.xlu0 %683
        %685 = vadd.xlane.f32.xlu0 %v625
        %v686 = vpop.xlane.xlu0 %685
        %687 = vadd.xlane.f32.xlu0 %v626
        %v688 = vpop.xlane.xlu0 %687
        %689 = vadd.xlane.f32.xlu0 %v627
        %v690 = vpop.xlane.xlu0 %689
        %691 = vadd.xlane.f32.xlu0 %v628
        %v692 = vpop.xlane.xlu0 %691
        %693 = vadd.xlane.f32.xlu0 %v629
        %v694 = vpop.xlane.xlu0 %693
        %695 = vadd.xlane.f32.xlu0 %v630
        %v696 = vpop.xlane.xlu0 %695
        %v697 = vrcp.pop 128.0
        %v698 = vmul.f32 %v634, %v697
        %v699 = vmul.f32 %v636, %v697
        %v700 = vmul.f32 %v638, %v697
        %v701 = vmul.f32 %v640, %v697
        %v702 = vmul.f32 %v642, %v697
        %v703 = vmul.f32 %v644, %v697
        %v704 = vmul.f32 %v646, %v697
        %v705 = vmul.f32 %v648, %v697
        %v706 = vmul.f32 %v650, %v697
        %v707 = vmul.f32 %v652, %v697
        %v708 = vmul.f32 %v654, %v697
        %v709 = vmul.f32 %v656, %v697
        %v710 = vmul.f32 %v658, %v697
        %v711 = vmul.f32 %v660, %v697
        %v712 = vmul.f32 %v662, %v697
        %v713 = vmul.f32 %v664, %v697
        %v714 = vmul.f32 %v666, %v697
        %v715 = vmul.f32 %v668, %v697
        %v716 = vmul.f32 %v670, %v697
        %v717 = vmul.f32 %v672, %v697
        %v718 = vmul.f32 %v674, %v697
        %v719 = vmul.f32 %v676, %v697
        %v720 = vmul.f32 %v678, %v697
        %v721 = vmul.f32 %v680, %v697
        %v722 = vmul.f32 %v682, %v697
        %v723 = vmul.f32 %v684, %v697
        %v724 = vmul.f32 %v686, %v697
        %v725 = vmul.f32 %v688, %v697
        %v726 = vmul.f32 %v690, %v697
        %v727 = vmul.f32 %v692, %v697
        %v728 = vmul.f32 %v694, %v697
        %v729 = vmul.f32 %v696, %v697
        %v730 = vsub.f32 %v599, %v698
        %v731 = vsub.f32 %v600, %v699
        %v732 = vsub.f32 %v601, %v700
        %v733 = vsub.f32 %v602, %v701
        %v734 = vsub.f32 %v603, %v702
        %v735 = vsub.f32 %v604, %v703
        %v736 = vsub.f32 %v605, %v704
        %v737 = vsub.f32 %v606, %v705
        %v738 = vsub.f32 %v607, %v706
        %v739 = vsub.f32 %v608, %v707
        %v740 = vsub.f32 %v609, %v708
        %v741 = vsub.f32 %v610, %v709
        %v742 = vsub.f32 %v611, %v710
        %v743 = vsub.f32 %v612, %v711
        %v744 = vsub.f32 %v613, %v712
        %v745 = vsub.f32 %v614, %v713
        %v746 = vsub.f32 %v615, %v714
        %v747 = vsub.f32 %v616, %v715
        %v748 = vsub.f32 %v617, %v716
        %v749 = vsub.f32 %v618, %v717
        %v750 = vsub.f32 %v619, %v718
        %v751 = vsub.f32 %v620, %v719
        %v752 = vsub.f32 %v621, %v720
        %v753 = vsub.f32 %v622, %v721
        %v754 = vsub.f32 %v623, %v722
        %v755 = vsub.f32 %v624, %v723
        %v756 = vsub.f32 %v625, %v724
        %v757 = vsub.f32 %v626, %v725
        %v758 = vsub.f32 %v627, %v726
        %v759 = vsub.f32 %v628, %v727
        %v760 = vsub.f32 %v629, %v728
        %v761 = vsub.f32 %v630, %v729
        %v762 = vmul.f32 %v730, %v730
        %v763 = vmul.f32 %v731, %v731
        %v764 = vmul.f32 %v732, %v732
        %v765 = vmul.f32 %v733, %v733
        %v766 = vmul.f32 %v734, %v734
        %v767 = vmul.f32 %v735, %v735
        %v768 = vmul.f32 %v736, %v736
        %v769 = vmul.f32 %v737, %v737
        %v770 = vmul.f32 %v738, %v738
        %v771 = vmul.f32 %v739, %v739
        %v772 = vmul.f32 %v740, %v740
        %v773 = vmul.f32 %v741, %v741
        %v774 = vmul.f32 %v742, %v742
        %v775 = vmul.f32 %v743, %v743
        %v776 = vmul.f32 %v744, %v744
        %v777 = vmul.f32 %v745, %v745
        %v778 = vmul.f32 %v746, %v746
        %v779 = vmul.f32 %v747, %v747
        %v780 = vmul.f32 %v748, %v748
        %v781 = vmul.f32 %v749, %v749
        %v782 = vmul.f32 %v750, %v750
        %v783 = vmul.f32 %v751, %v751
        %v784 = vmul.f32 %v752, %v752
        %v785 = vmul.f32 %v753, %v753
        %v786 = vmul.f32 %v754, %v754
        %v787 = vmul.f32 %v755, %v755
        %v788 = vmul.f32 %v756, %v756
        %v789 = vmul.f32 %v757, %v757
        %v790 = vmul.f32 %v758, %v758
        %v791 = vmul.f32 %v759, %v759
        %v792 = vmul.f32 %v760, %v760
        %v793 = vmul.f32 %v761, %v761
        %794 = vadd.xlane.f32.xlu0 %v762
        %v795 = vpop.xlane.xlu0 %794
        %796 = vadd.xlane.f32.xlu0 %v763
        %v797 = vpop.xlane.xlu0 %796
        %798 = vadd.xlane.f32.xlu0 %v764
        %v799 = vpop.xlane.xlu0 %798
        %800 = vadd.xlane.f32.xlu0 %v765
        %v801 = vpop.xlane.xlu0 %800
        %802 = vadd.xlane.f32.xlu0 %v766
        %v803 = vpop.xlane.xlu0 %802
        %804 = vadd.xlane.f32.xlu0 %v767
        %v805 = vpop.xlane.xlu0 %804
        %806 = vadd.xlane.f32.xlu0 %v768
        %v807 = vpop.xlane.xlu0 %806
        %808 = vadd.xlane.f32.xlu0 %v769
        %v809 = vpop.xlane.xlu0 %808
        %810 = vadd.xlane.f32.xlu0 %v770
        %v811 = vpop.xlane.xlu0 %810
        %812 = vadd.xlane.f32.xlu0 %v771
        %v813 = vpop.xlane.xlu0 %812
        %814 = vadd.xlane.f32.xlu0 %v772
        %v815 = vpop.xlane.xlu0 %814
        %816 = vadd.xlane.f32.xlu0 %v773
        %v817 = vpop.xlane.xlu0 %816
        %818 = vadd.xlane.f32.xlu0 %v774
        %v819 = vpop.xlane.xlu0 %818
        %820 = vadd.xlane.f32.xlu0 %v775
        %v821 = vpop.xlane.xlu0 %820
        %822 = vadd.xlane.f32.xlu0 %v776
        %v823 = vpop.xlane.xlu0 %822
        %824 = vadd.xlane.f32.xlu0 %v777
        %v825 = vpop.xlane.xlu0 %824
        %826 = vadd.xlane.f32.xlu0 %v778
        %v827 = vpop.xlane.xlu0 %826
        %828 = vadd.xlane.f32.xlu0 %v779
        %v829 = vpop.xlane.xlu0 %828
        %830 = vadd.xlane.f32.xlu0 %v780
        %v831 = vpop.xlane.xlu0 %830
        %832 = vadd.xlane.f32.xlu0 %v781
        %v833 = vpop.xlane.xlu0 %832
        %834 = vadd.xlane.f32.xlu0 %v782
        %v835 = vpop.xlane.xlu0 %834
        %836 = vadd.xlane.f32.xlu0 %v783
        %v837 = vpop.xlane.xlu0 %836
        %838 = vadd.xlane.f32.xlu0 %v784
        %v839 = vpop.xlane.xlu0 %838
        %840 = vadd.xlane.f32.xlu0 %v785
        %v841 = vpop.xlane.xlu0 %840
        %842 = vadd.xlane.f32.xlu0 %v786
        %v843 = vpop.xlane.xlu0 %842
        %844 = vadd.xlane.f32.xlu0 %v787
        %v845 = vpop.xlane.xlu0 %844
        %846 = vadd.xlane.f32.xlu0 %v788
        %v847 = vpop.xlane.xlu0 %846
        %848 = vadd.xlane.f32.xlu0 %v789
        %v849 = vpop.xlane.xlu0 %848
        %850 = vadd.xlane.f32.xlu0 %v790
        %v851 = vpop.xlane.xlu0 %850
        %852 = vadd.xlane.f32.xlu0 %v791
        %v853 = vpop.xlane.xlu0 %852
        %854 = vadd.xlane.f32.xlu0 %v792
        %v855 = vpop.xlane.xlu0 %854
        %856 = vadd.xlane.f32.xlu0 %v793
        %v857 = vpop.xlane.xlu0 %856
        %v858 = vmul.f32 %v795, %v697
        %v859 = vmul.f32 %v797, %v697
        %v860 = vmul.f32 %v799, %v697
        %v861 = vmul.f32 %v801, %v697
        %v862 = vmul.f32 %v803, %v697
        %v863 = vmul.f32 %v805, %v697
        %v864 = vmul.f32 %v807, %v697
        %v865 = vmul.f32 %v809, %v697
        %v866 = vmul.f32 %v811, %v697
        %v867 = vmul.f32 %v813, %v697
        %v868 = vmul.f32 %v815, %v697
        %v869 = vmul.f32 %v817, %v697
        %v870 = vmul.f32 %v819, %v697
        %v871 = vmul.f32 %v821, %v697
        %v872 = vmul.f32 %v823, %v697
        %v873 = vmul.f32 %v825, %v697
        %v874 = vmul.f32 %v827, %v697
        %v875 = vmul.f32 %v829, %v697
        %v876 = vmul.f32 %v831, %v697
        %v877 = vmul.f32 %v833, %v697
        %v878 = vmul.f32 %v835, %v697
        %v879 = vmul.f32 %v837, %v697
        %v880 = vmul.f32 %v839, %v697
        %v881 = vmul.f32 %v841, %v697
        %v882 = vmul.f32 %v843, %v697
        %v883 = vmul.f32 %v845, %v697
        %v884 = vmul.f32 %v847, %v697
        %v885 = vmul.f32 %v849, %v697
        %v886 = vmul.f32 %v851, %v697
        %v887 = vmul.f32 %v853, %v697
        %v888 = vmul.f32 %v855, %v697
        %v889 = vmul.f32 %v857, %v697
        %v890 = vadd.f32 %v858, 1e-05
        %v891 = vadd.f32 %v859, 1e-05
        %v892 = vadd.f32 %v860, 1e-05
        %v893 = vadd.f32 %v861, 1e-05
        %v894 = vadd.f32 %v862, 1e-05
        %v895 = vadd.f32 %v863, 1e-05
        %v896 = vadd.f32 %v864, 1e-05
        %v897 = vadd.f32 %v865, 1e-05
        %v898 = vadd.f32 %v866, 1e-05
        %v899 = vadd.f32 %v867, 1e-05
        %v900 = vadd.f32 %v868, 1e-05
        %v901 = vadd.f32 %v869, 1e-05
        %v902 = vadd.f32 %v870, 1e-05
        %v903 = vadd.f32 %v871, 1e-05
        %v904 = vadd.f32 %v872, 1e-05
        %v905 = vadd.f32 %v873, 1e-05
        %v906 = vadd.f32 %v874, 1e-05
        %v907 = vadd.f32 %v875, 1e-05
        %v908 = vadd.f32 %v876, 1e-05
        %v909 = vadd.f32 %v877, 1e-05
        %v910 = vadd.f32 %v878, 1e-05
        %v911 = vadd.f32 %v879, 1e-05
        %v912 = vadd.f32 %v880, 1e-05
        %v913 = vadd.f32 %v881, 1e-05
        %v914 = vadd.f32 %v882, 1e-05
        %v915 = vadd.f32 %v883, 1e-05
        %v916 = vadd.f32 %v884, 1e-05
        %v917 = vadd.f32 %v885, 1e-05
        %v918 = vadd.f32 %v886, 1e-05
        %v919 = vadd.f32 %v887, 1e-05
        %v920 = vadd.f32 %v888, 1e-05
        %v921 = vadd.f32 %v889, 1e-05
        %v922 = vrsqrt.pop %v890
        %v923 = vrsqrt.pop %v891
        %v924 = vrsqrt.pop %v892
        %v925 = vrsqrt.pop %v893
        %v926 = vrsqrt.pop %v894
        %v927 = vrsqrt.pop %v895
        %v928 = vrsqrt.pop %v896
        %v929 = vrsqrt.pop %v897
        %v930 = vrsqrt.pop %v898
        %v931 = vrsqrt.pop %v899
        %v932 = vrsqrt.pop %v900
        %v933 = vrsqrt.pop %v901
        %v934 = vrsqrt.pop %v902
        %v935 = vrsqrt.pop %v903
        %v936 = vrsqrt.pop %v904
        %v937 = vrsqrt.pop %v905
        %v938 = vrsqrt.pop %v906
        %v939 = vrsqrt.pop %v907
        %v940 = vrsqrt.pop %v908
        %v941 = vrsqrt.pop %v909
        %v942 = vrsqrt.pop %v910
        %v943 = vrsqrt.pop %v911
        %v944 = vrsqrt.pop %v912
        %v945 = vrsqrt.pop %v913
        %v946 = vrsqrt.pop %v914
        %v947 = vrsqrt.pop %v915
        %v948 = vrsqrt.pop %v916
        %v949 = vrsqrt.pop %v917
        %v950 = vrsqrt.pop %v918
        %v951 = vrsqrt.pop %v919
        %v952 = vrsqrt.pop %v920
        %v953 = vrsqrt.pop %v921
        %v954 = vmul.f32 %v730, %v922
        %v955 = vmul.f32 %v731, %v923
        %v956 = vmul.f32 %v732, %v924
        %v957 = vmul.f32 %v733, %v925
        %v958 = vmul.f32 %v734, %v926
        %v959 = vmul.f32 %v735, %v927
        %v960 = vmul.f32 %v736, %v928
        %v961 = vmul.f32 %v737, %v929
        %v962 = vmul.f32 %v738, %v930
        %v963 = vmul.f32 %v739, %v931
        %v964 = vmul.f32 %v740, %v932
        %v965 = vmul.f32 %v741, %v933
        %v966 = vmul.f32 %v742, %v934
        %v967 = vmul.f32 %v743, %v935
        %v968 = vmul.f32 %v744, %v936
        %v969 = vmul.f32 %v745, %v937
        %v970 = vmul.f32 %v746, %v938
        %v971 = vmul.f32 %v747, %v939
        %v972 = vmul.f32 %v748, %v940
        %v973 = vmul.f32 %v749, %v941
        %v974 = vmul.f32 %v750, %v942
        %v975 = vmul.f32 %v751, %v943
        %v976 = vmul.f32 %v752, %v944
        %v977 = vmul.f32 %v753, %v945
        %v978 = vmul.f32 %v754, %v946
        %v979 = vmul.f32 %v755, %v947
        %v980 = vmul.f32 %v756, %v948
        %v981 = vmul.f32 %v757, %v949
        %v982 = vmul.f32 %v758, %v950
        %v983 = vmul.f32 %v759, %v951
        %v984 = vmul.f32 %v760, %v952
        %v985 = vmul.f32 %v761, %v953
        %v987 = vlaneseq
        %v988 = vshrl.u32 %v987, 7
        %v989 = vsub.s32 0, %v988
        %v990 = vrot.slane %v631, %v989
        %v992 = vmul.f32 %v954, %v990
        %v993 = vmul.f32 %v955, %v990
        %v994 = vmul.f32 %v956, %v990
        %v995 = vmul.f32 %v957, %v990
        %v996 = vmul.f32 %v958, %v990
        %v997 = vmul.f32 %v959, %v990
        %v998 = vmul.f32 %v960, %v990
        %v999 = vmul.f32 %v961, %v990
        %v1000 = vmul.f32 %v962, %v990
        %v1001 = vmul.f32 %v963, %v990
        %v1002 = vmul.f32 %v964, %v990
        %v1003 = vmul.f32 %v965, %v990
        %v1004 = vmul.f32 %v966, %v990
        %v1005 = vmul.f32 %v967, %v990
        %v1006 = vmul.f32 %v968, %v990
        %v1007 = vmul.f32 %v969, %v990
        %v1008 = vmul.f32 %v970, %v990
        %v1009 = vmul.f32 %v971, %v990
        %v1010 = vmul.f32 %v972, %v990
        %v1011 = vmul.f32 %v973, %v990
        %v1012 = vmul.f32 %v974, %v990
        %v1013 = vmul.f32 %v975, %v990
        %v1014 = vmul.f32 %v976, %v990
        %v1015 = vmul.f32 %v977, %v990
        %v1016 = vmul.f32 %v978, %v990
        %v1017 = vmul.f32 %v979, %v990
        %v1018 = vmul.f32 %v980, %v990
        %v1019 = vmul.f32 %v981, %v990
        %v1020 = vmul.f32 %v982, %v990
        %v1021 = vmul.f32 %v983, %v990
        %v1022 = vmul.f32 %v984, %v990
        %v1023 = vmul.f32 %v985, %v990
        %v1025 = vlaneseq
        %v1026 = vshrl.u32 %v1025, 7
        %v1027 = vsub.s32 0, %v1026
        %v1028 = vrot.slane %v632, %v1027
        %v1030 = vadd.f32 %v992, %v1028
        %v1031 = vadd.f32 %v993, %v1028
        %v1032 = vadd.f32 %v994, %v1028
        %v1033 = vadd.f32 %v995, %v1028
        %v1034 = vadd.f32 %v996, %v1028
        %v1035 = vadd.f32 %v997, %v1028
        %v1036 = vadd.f32 %v998, %v1028
        %v1037 = vadd.f32 %v999, %v1028
        %v1038 = vadd.f32 %v1000, %v1028
        %v1039 = vadd.f32 %v1001, %v1028
        %v1040 = vadd.f32 %v1002, %v1028
        %v1041 = vadd.f32 %v1003, %v1028
        %v1042 = vadd.f32 %v1004, %v1028
        %v1043 = vadd.f32 %v1005, %v1028
        %v1044 = vadd.f32 %v1006, %v1028
        %v1045 = vadd.f32 %v1007, %v1028
        %v1046 = vadd.f32 %v1008, %v1028
        %v1047 = vadd.f32 %v1009, %v1028
        %v1048 = vadd.f32 %v1010, %v1028
        %v1049 = vadd.f32 %v1011, %v1028
        %v1050 = vadd.f32 %v1012, %v1028
        %v1051 = vadd.f32 %v1013, %v1028
        %v1052 = vadd.f32 %v1014, %v1028
        %v1053 = vadd.f32 %v1015, %v1028
        %v1054 = vadd.f32 %v1016, %v1028
        %v1055 = vadd.f32 %v1017, %v1028
        %v1056 = vadd.f32 %v1018, %v1028
        %v1057 = vadd.f32 %v1019, %v1028
        %v1058 = vadd.f32 %v1020, %v1028
        %v1059 = vadd.f32 %v1021, %v1028
        %v1060 = vadd.f32 %v1022, %v1028
        %v1061 = vadd.f32 %v1023, %v1028
        %v1062 = vpack.c.bf16 %v1031, %v1030
        %v1063 = vpack.c.bf16 %v1033, %v1032
        %v1064 = vpack.c.bf16 %v1035, %v1034
        %v1065 = vpack.c.bf16 %v1037, %v1036
        %v1066 = vpack.c.bf16 %v1039, %v1038
        %v1067 = vpack.c.bf16 %v1041, %v1040
        %v1068 = vpack.c.bf16 %v1043, %v1042
        %v1069 = vpack.c.bf16 %v1045, %v1044
        %v1070 = vpack.c.bf16 %v1047, %v1046
        %v1071 = vpack.c.bf16 %v1049, %v1048
        %v1072 = vpack.c.bf16 %v1051, %v1050
        %v1073 = vpack.c.bf16 %v1053, %v1052
        %v1074 = vpack.c.bf16 %v1055, %v1054
        %v1075 = vpack.c.bf16 %v1057, %v1056
        %v1076 = vpack.c.bf16 %v1059, %v1058
        %v1077 = vpack.c.bf16 %v1061, %v1060
        %v1078 = vld [vmem:[#allocation6] sm:$0xff]
        %v1079 = vld [vmem:[#allocation6 + $0x8] sm:$0xff]
        %v1080 = vld [vmem:[#allocation6 + $0x10] sm:$0xff]
        %v1081 = vld [vmem:[#allocation6 + $0x18] sm:$0xff]
        %v1082 = vld [vmem:[#allocation6 + $0x20] sm:$0xff]
        %v1083 = vld [vmem:[#allocation6 + $0x28] sm:$0xff]
        %v1084 = vld [vmem:[#allocation6 + $0x30] sm:$0xff]
        %v1085 = vld [vmem:[#allocation6 + $0x38] sm:$0xff]
        %v1086 = vld [vmem:[#allocation6 + $0x40] sm:$0xff]
        %v1087 = vld [vmem:[#allocation6 + $0x48] sm:$0xff]
        %v1088 = vld [vmem:[#allocation6 + $0x50] sm:$0xff]
        %v1089 = vld [vmem:[#allocation6 + $0x58] sm:$0xff]
        %v1090 = vld [vmem:[#allocation6 + $0x60] sm:$0xff]
        %v1091 = vld [vmem:[#allocation6 + $0x68] sm:$0xff]
        %v1092 = vld [vmem:[#allocation6 + $0x70] sm:$0xff]
        %v1093 = vld [vmem:[#allocation6 + $0x78] sm:$0xff]
        %v1094 = vld [vmem:[%s4] sm:$0x3]
        %v1096 = vlaneseq
        %v1097 = vshrl.u32 %v1096, 7
        %v1098 = vsub.s32 0, %v1097
        %v1099 = vrot.slane %v1094, %v1098
        %v1100 = vlaneseq
        %v1101 = vshrl.u32 %v1100, 7
        %v1102 = vsub.s32 1, %v1101
        %v1103 = vrot.slane %v1094, %v1102
        %v1122 = vunpack.c.l.b16 %v1078
        %v1123 = vunpack.c.h.b16 %v1078
        %v1124 = vunpack.c.l.b16 %v1079
        %v1125 = vunpack.c.h.b16 %v1079
        %v1126 = vunpack.c.l.b16 %v1080
        %v1127 = vunpack.c.h.b16 %v1080
        %v1128 = vunpack.c.l.b16 %v1081
        %v1129 = vunpack.c.h.b16 %v1081
        %v1130 = vunpack.c.l.b16 %v1082
        %v1131 = vunpack.c.h.b16 %v1082
        %v1132 = vunpack.c.l.b16 %v1083
        %v1133 = vunpack.c.h.b16 %v1083
        %v1134 = vunpack.c.l.b16 %v1084
        %v1135 = vunpack.c.h.b16 %v1084
        %v1136 = vunpack.c.l.b16 %v1085
        %v1137 = vunpack.c.h.b16 %v1085
        %v1138 = vunpack.c.l.b16 %v1086
        %v1139 = vunpack.c.h.b16 %v1086
        %v1140 = vunpack.c.l.b16 %v1087
        %v1141 = vunpack.c.h.b16 %v1087
        %v1142 = vunpack.c.l.b16 %v1088
        %v1143 = vunpack.c.h.b16 %v1088
        %v1144 = vunpack.c.l.b16 %v1089
        %v1145 = vunpack.c.h.b16 %v1089
        %v1146 = vunpack.c.l.b16 %v1090
        %v1147 = vunpack.c.h.b16 %v1090
        %v1148 = vunpack.c.l.b16 %v1091
        %v1149 = vunpack.c.h.b16 %v1091
        %v1150 = vunpack.c.l.b16 %v1092
        %v1151 = vunpack.c.h.b16 %v1092
        %v1152 = vunpack.c.l.b16 %v1093
        %v1153 = vunpack.c.h.b16 %v1093
        %v1154 = vpack.c.b16 %v1124, %v1122
        %v1155 = vpack.c.b16 %v1125, %v1123
        %v1156 = vpack.c.b16 %v1128, %v1126
        %v1157 = vpack.c.b16 %v1129, %v1127
        %v1158 = vpack.c.b16 %v1132, %v1130
        %v1159 = vpack.c.b16 %v1133, %v1131
        %v1160 = vpack.c.b16 %v1136, %v1134
        %v1161 = vpack.c.b16 %v1137, %v1135
        %v1162 = vpack.c.b16 %v1140, %v1138
        %v1163 = vpack.c.b16 %v1141, %v1139
        %v1164 = vpack.c.b16 %v1144, %v1142
        %v1165 = vpack.c.b16 %v1145, %v1143
        %v1166 = vpack.c.b16 %v1148, %v1146
        %v1167 = vpack.c.b16 %v1149, %v1147
        %v1168 = vpack.c.b16 %v1152, %v1150
        %v1169 = vpack.c.b16 %v1153, %v1151
        %1186 = vmatprep.subr.bf16.mxu0 %v1155
        %1187 = vmatpush1.bf16.msra.mxu0 %v1154
        %1188 = vmatprep.subr.bf16.mxu0 %v1157
        %1189 = vmatpush1.bf16.msra.mxu0 %v1156
        %1190 = vmatprep.subr.bf16.mxu0 %v1159
        %1191 = vmatpush1.bf16.msra.mxu0 %v1158
        %1192 = vmatprep.subr.bf16.mxu0 %v1161
        %1193 = vmatpush1.bf16.msra.mxu0 %v1160
        %1194 = vmatprep.subr.bf16.mxu0 %v1163
        %1195 = vmatpush1.bf16.msra.mxu0 %v1162
        %1196 = vmatprep.subr.bf16.mxu0 %v1165
        %1197 = vmatpush1.bf16.msra.mxu0 %v1164
        %1198 = vmatprep.subr.bf16.mxu0 %v1167
        %1199 = vmatpush1.bf16.msra.mxu0 %v1166
        %1200 = vmatprep.subr.bf16.mxu0 %v1169
        %1201 = vmatpush1.bf16.msra.mxu0 %v1168
        %1202 = vmatprep.subr.bf16.mxu0 0
        %1203 = vmatpush1.bf16.msra.mxu0 0
        %1204 = vmatprep.subr.bf16.mxu0 0
        %1205 = vmatpush1.bf16.msra.mxu0 0
        %1206 = vmatprep.subr.bf16.mxu0 0
        %1207 = vmatpush1.bf16.msra.mxu0 0
        %1208 = vmatprep.subr.bf16.mxu0 0
        %1209 = vmatpush1.bf16.msra.mxu0 0
        %1210 = vmatprep.subr.bf16.mxu0 0
        %1211 = vmatpush1.bf16.msra.mxu0 0
        %1212 = vmatprep.subr.bf16.mxu0 0
        %1213 = vmatpush1.bf16.msra.mxu0 0
        %1214 = vmatprep.subr.bf16.mxu0 0
        %1215 = vmatpush1.bf16.msra.mxu0 0
        %1216 = vmatprep.subr.bf16.mxu0 0
        %1217 = vmatpush1.bf16.msra.mxu0 0
        %1218 = vmatprep.mubr.bf16.mxu0 0
        %1219 = vmatmul.mubr.bf16.gmra.mrb[0].mxu0 %v1062
        %v1220 = vpop.f32.mrb[0].mxu0
        %v1221 = vadd.f32 %v1099, %v1220
        %v1222 = vpop.f32.mrb[0].mxu0
        %v1223 = vadd.f32 %v1103, %v1222
        %v1224 = vpop.f32.mrb[0].mxu0
        %v1225 = vadd.f32 %v1099, %v1224
        %v1226 = vpop.f32.mrb[0].mxu0
        %v1227 = vadd.f32 %v1103, %v1226
        %1228 = vmatprep.mubr.bf16.mxu0 0
        %1229 = vmatmul.mubr.bf16.gmra.mrb[0].mxu0 %v1063
        %v1230 = vpop.f32.mrb[0].mxu0
        %v1231 = vadd.f32 %v1099, %v1230
        %v1232 = vpop.f32.mrb[0].mxu0
        %v1233 = vadd.f32 %v1103, %v1232
        %v1234 = vpop.f32.mrb[0].mxu0
        %v1235 = vadd.f32 %v1099, %v1234
        %v1236 = vpop.f32.mrb[0].mxu0
        %v1237 = vadd.f32 %v1103, %v1236
        %1238 = vmatprep.mubr.bf16.mxu0 0
        %1239 = vmatmul.mubr.bf16.gmra.mrb[0].mxu0 %v1064
        %v1240 = vpop.f32.mrb[0].mxu0
        %v1241 = vadd.f32 %v1099, %v1240
        %v1242 = vpop.f32.mrb[0].mxu0
        %v1243 = vadd.f32 %v1103, %v1242
        %v1244 = vpop.f32.mrb[0].mxu0
        %v1245 = vadd.f32 %v1099, %v1244
        %v1246 = vpop.f32.mrb[0].mxu0
        %v1247 = vadd.f32 %v1103, %v1246
        %1248 = vmatprep.mubr.bf16.mxu0 0
        %1249 = vmatmul.mubr.bf16.gmra.mrb[0].mxu0 %v1065
        %v1250 = vpop.f32.mrb[0].mxu0
        %v1251 = vadd.f32 %v1099, %v1250
        %v1252 = vpop.f32.mrb[0].mxu0
        %v1253 = vadd.f32 %v1103, %v1252
        %v1254 = vpop.f32.mrb[0].mxu0
        %v1255 = vadd.f32 %v1099, %v1254
        %v1256 = vpop.f32.mrb[0].mxu0
        %v1257 = vadd.f32 %v1103, %v1256
        %1258 = vmatprep.mubr.bf16.mxu0 0
        %1259 = vmatmul.mubr.bf16.gmra.mrb[0].mxu0 %v1066
        %v1260 = vpop.f32.mrb[0].mxu0
        %v1261 = vadd.f32 %v1099, %v1260
        %v1262 = vpop.f32.mrb[0].mxu0
        %v1263 = vadd.f32 %v1103, %v1262
        %v1264 = vpop.f32.mrb[0].mxu0
        %v1265 = vadd.f32 %v1099, %v1264
        %v1266 = vpop.f32.mrb[0].mxu0
        %v1267 = vadd.f32 %v1103, %v1266
        %1268 = vmatprep.mubr.bf16.mxu0 0
        %1269 = vmatmul.mubr.bf16.gmra.mrb[0].mxu0 %v1067
        %v1270 = vpop.f32.mrb[0].mxu0
        %v1271 = vadd.f32 %v1099, %v1270
        %v1272 = vpop.f32.mrb[0].mxu0
        %v1273 = vadd.f32 %v1103, %v1272
        %v1274 = vpop.f32.mrb[0].mxu0
        %v1275 = vadd.f32 %v1099, %v1274
        %v1276 = vpop.f32.mrb[0].mxu0
        %v1277 = vadd.f32 %v1103, %v1276
        %1278 = vmatprep.mubr.bf16.mxu0 0
        %1279 = vmatmul.mubr.bf16.gmra.mrb[0].mxu0 %v1068
        %v1280 = vpop.f32.mrb[0].mxu0
        %v1281 = vadd.f32 %v1099, %v1280
        %v1282 = vpop.f32.mrb[0].mxu0
        %v1283 = vadd.f32 %v1103, %v1282
        %v1284 = vpop.f32.mrb[0].mxu0
        %v1285 = vadd.f32 %v1099, %v1284
        %v1286 = vpop.f32.mrb[0].mxu0
        %v1287 = vadd.f32 %v1103, %v1286
        %1288 = vmatprep.mubr.bf16.mxu0 0
        %1289 = vmatmul.mubr.bf16.gmra.mrb[0].mxu0 %v1069
        %v1290 = vpop.f32.mrb[0].mxu0
        %v1291 = vadd.f32 %v1099, %v1290
        %v1292 = vpop.f32.mrb[0].mxu0
        %v1293 = vadd.f32 %v1103, %v1292
        %v1294 = vpop.f32.mrb[0].mxu0
        %v1295 = vadd.f32 %v1099, %v1294
        %v1296 = vpop.f32.mrb[0].mxu0
        %v1297 = vadd.f32 %v1103, %v1296
        %1298 = vmatprep.mubr.bf16.mxu0 0
        %1299 = vmatmul.mubr.bf16.gmra.mrb[0].mxu0 %v1070
        %v1300 = vpop.f32.mrb[0].mxu0
        %v1301 = vadd.f32 %v1099, %v1300
        %v1302 = vpop.f32.mrb[0].mxu0
        %v1303 = vadd.f32 %v1103, %v1302
        %v1304 = vpop.f32.mrb[0].mxu0
        %v1305 = vadd.f32 %v1099, %v1304
        %v1306 = vpop.f32.mrb[0].mxu0
        %v1307 = vadd.f32 %v1103, %v1306
        %1308 = vmatprep.mubr.bf16.mxu0 0
        %1309 = vmatmul.mubr.bf16.gmra.mrb[0].mxu0 %v1071
        %v1310 = vpop.f32.mrb[0].mxu0
        %v1311 = vadd.f32 %v1099, %v1310
        %v1312 = vpop.f32.mrb[0].mxu0
        %v1313 = vadd.f32 %v1103, %v1312
        %v1314 = vpop.f32.mrb[0].mxu0
        %v1315 = vadd.f32 %v1099, %v1314
        %v1316 = vpop.f32.mrb[0].mxu0
        %v1317 = vadd.f32 %v1103, %v1316
        %1318 = vmatprep.mubr.bf16.mxu0 0
        %1319 = vmatmul.mubr.bf16.gmra.mrb[0].mxu0 %v1072
        %v1320 = vpop.f32.mrb[0].mxu0
        %v1321 = vadd.f32 %v1099, %v1320
        %v1322 = vpop.f32.mrb[0].mxu0
        %v1323 = vadd.f32 %v1103, %v1322
        %v1324 = vpop.f32.mrb[0].mxu0
        %v1325 = vadd.f32 %v1099, %v1324
        %v1326 = vpop.f32.mrb[0].mxu0
        %v1327 = vadd.f32 %v1103, %v1326
        %1328 = vmatprep.mubr.bf16.mxu0 0
        %1329 = vmatmul.mubr.bf16.gmra.mrb[0].mxu0 %v1073
        %v1330 = vpop.f32.mrb[0].mxu0
        %v1331 = vadd.f32 %v1099, %v1330
        %v1332 = vpop.f32.mrb[0].mxu0
        %v1333 = vadd.f32 %v1103, %v1332
        %v1334 = vpop.f32.mrb[0].mxu0
        %v1335 = vadd.f32 %v1099, %v1334
        %v1336 = vpop.f32.mrb[0].mxu0
        %v1337 = vadd.f32 %v1103, %v1336
        %1338 = vmatprep.mubr.bf16.mxu0 0
        %1339 = vmatmul.mubr.bf16.gmra.mrb[0].mxu0 %v1074
        %v1340 = vpop.f32.mrb[0].mxu0
        %v1341 = vadd.f32 %v1099, %v1340
        %v1342 = vpop.f32.mrb[0].mxu0
        %v1343 = vadd.f32 %v1103, %v1342
        %v1344 = vpop.f32.mrb[0].mxu0
        %v1345 = vadd.f32 %v1099, %v1344
        %v1346 = vpop.f32.mrb[0].mxu0
        %v1347 = vadd.f32 %v1103, %v1346
        %1348 = vmatprep.mubr.bf16.mxu0 0
        %1349 = vmatmul.mubr.bf16.gmra.mrb[0].mxu0 %v1075
        %v1350 = vpop.f32.mrb[0].mxu0
        %v1351 = vadd.f32 %v1099, %v1350
        %v1352 = vpop.f32.mrb[0].mxu0
        %v1353 = vadd.f32 %v1103, %v1352
        %v1354 = vpop.f32.mrb[0].mxu0
        %v1355 = vadd.f32 %v1099, %v1354
        %v1356 = vpop.f32.mrb[0].mxu0
        %v1357 = vadd.f32 %v1103, %v1356
        %1358 = vmatprep.mubr.bf16.mxu0 0
        %1359 = vmatmul.mubr.bf16.gmra.mrb[0].mxu0 %v1076
        %v1360 = vpop.f32.mrb[0].mxu0
        %v1361 = vadd.f32 %v1099, %v1360
        %v1362 = vpop.f32.mrb[0].mxu0
        %v1363 = vadd.f32 %v1103, %v1362
        %v1364 = vpop.f32.mrb[0].mxu0
        %v1365 = vadd.f32 %v1099, %v1364
        %v1366 = vpop.f32.mrb[0].mxu0
        %v1367 = vadd.f32 %v1103, %v1366
        %1368 = vmatprep.mubr.bf16.mxu0 0
        %1369 = vmatmul.mubr.bf16.gmra.mrb[0].mxu0 %v1077
        %v1370 = vpop.f32.mrb[0].mxu0
        %v1371 = vadd.f32 %v1099, %v1370
        %v1372 = vpop.f32.mrb[0].mxu0
        %v1373 = vadd.f32 %v1103, %v1372
        %v1374 = vpop.f32.mrb[0].mxu0
        %v1375 = vadd.f32 %v1099, %v1374
        %v1376 = vpop.f32.mrb[0].mxu0
        %v1377 = vadd.f32 %v1103, %v1376
        %1378 = vdwg.mxu0
        %v1379 = vmul.f32 %v1221, %v1221
        %v1380 = vmul.f32 %v1223, %v1223
        %v1381 = vmul.f32 %v1225, %v1225
        %v1382 = vmul.f32 %v1227, %v1227
        %v1383 = vmul.f32 %v1231, %v1231
        %v1384 = vmul.f32 %v1233, %v1233
        %v1385 = vmul.f32 %v1235, %v1235
        %v1386 = vmul.f32 %v1237, %v1237
        %v1387 = vmul.f32 %v1241, %v1241
        %v1388 = vmul.f32 %v1243, %v1243
        %v1389 = vmul.f32 %v1245, %v1245
        %v1390 = vmul.f32 %v1247, %v1247
        %v1391 = vmul.f32 %v1251, %v1251
        %v1392 = vmul.f32 %v1253, %v1253
        %v1393 = vmul.f32 %v1255, %v1255
        %v1394 = vmul.f32 %v1257, %v1257
        %v1395 = vmul.f32 %v1261, %v1261
        %v1396 = vmul.f32 %v1263, %v1263
        %v1397 = vmul.f32 %v1265, %v1265
        %v1398 = vmul.f32 %v1267, %v1267
        %v1399 = vmul.f32 %v1271, %v1271
        %v1400 = vmul.f32 %v1273, %v1273
        %v1401 = vmul.f32 %v1275, %v1275
        %v1402 = vmul.f32 %v1277, %v1277
        %v1403 = vmul.f32 %v1281, %v1281
        %v1404 = vmul.f32 %v1283, %v1283
        %v1405 = vmul.f32 %v1285, %v1285
        %v1406 = vmul.f32 %v1287, %v1287
        %v1407 = vmul.f32 %v1291, %v1291
        %v1408 = vmul.f32 %v1293, %v1293
        %v1409 = vmul.f32 %v1295, %v1295
        %v1410 = vmul.f32 %v1297, %v1297
        %v1411 = vmul.f32 %v1301, %v1301
        %v1412 = vmul.f32 %v1303, %v1303
        %v1413 = vmul.f32 %v1305, %v1305
        %v1414 = vmul.f32 %v1307, %v1307
        %v1415 = vmul.f32 %v1311, %v1311
        %v1416 = vmul.f32 %v1313, %v1313
        %v1417 = vmul.f32 %v1315, %v1315
        %v1418 = vmul.f32 %v1317, %v1317
        %v1419 = vmul.f32 %v1321, %v1321
        %v1420 = vmul.f32 %v1323, %v1323
        %v1421 = vmul.f32 %v1325, %v1325
        %v1422 = vmul.f32 %v1327, %v1327
        %v1423 = vmul.f32 %v1331, %v1331
        %v1424 = vmul.f32 %v1333, %v1333
        %v1425 = vmul.f32 %v1335, %v1335
        %v1426 = vmul.f32 %v1337, %v1337
        %v1427 = vmul.f32 %v1341, %v1341
        %v1428 = vmul.f32 %v1343, %v1343
        %v1429 = vmul.f32 %v1345, %v1345
        %v1430 = vmul.f32 %v1347, %v1347
        %v1431 = vmul.f32 %v1351, %v1351
        %v1432 = vmul.f32 %v1353, %v1353
        %v1433 = vmul.f32 %v1355, %v1355
        %v1434 = vmul.f32 %v1357, %v1357
        %v1435 = vmul.f32 %v1361, %v1361
        %v1436 = vmul.f32 %v1363, %v1363
        %v1437 = vmul.f32 %v1365, %v1365
        %v1438 = vmul.f32 %v1367, %v1367
        %v1439 = vmul.f32 %v1371, %v1371
        %v1440 = vmul.f32 %v1373, %v1373
        %v1441 = vmul.f32 %v1375, %v1375
        %v1442 = vmul.f32 %v1377, %v1377
        %v1443 = vmul.f32 %v1221, %v1379
        %v1444 = vmul.f32 %v1223, %v1380
        %v1445 = vmul.f32 %v1225, %v1381
        %v1446 = vmul.f32 %v1227, %v1382
        %v1447 = vmul.f32 %v1231, %v1383
        %v1448 = vmul.f32 %v1233, %v1384
        %v1449 = vmul.f32 %v1235, %v1385
        %v1450 = vmul.f32 %v1237, %v1386
        %v1451 = vmul.f32 %v1241, %v1387
        %v1452 = vmul.f32 %v1243, %v1388
        %v1453 = vmul.f32 %v1245, %v1389
        %v1454 = vmul.f32 %v1247, %v1390
        %v1455 = vmul.f32 %v1251, %v1391
        %v1456 = vmul.f32 %v1253, %v1392
        %v1457 = vmul.f32 %v1255, %v1393
        %v1458 = vmul.f32 %v1257, %v1394
        %v1459 = vmul.f32 %v1261, %v1395
        %v1460 = vmul.f32 %v1263, %v1396
        %v1461 = vmul.f32 %v1265, %v1397
        %v1462 = vmul.f32 %v1267, %v1398
        %v1463 = vmul.f32 %v1271, %v1399
        %v1464 = vmul.f32 %v1273, %v1400
        %v1465 = vmul.f32 %v1275, %v1401
        %v1466 = vmul.f32 %v1277, %v1402
        %v1467 = vmul.f32 %v1281, %v1403
        %v1468 = vmul.f32 %v1283, %v1404
        %v1469 = vmul.f32 %v1285, %v1405
        %v1470 = vmul.f32 %v1287, %v1406
        %v1471 = vmul.f32 %v1291, %v1407
        %v1472 = vmul.f32 %v1293, %v1408
        %v1473 = vmul.f32 %v1295, %v1409
        %v1474 = vmul.f32 %v1297, %v1410
        %v1475 = vmul.f32 %v1301, %v1411
        %v1476 = vmul.f32 %v1303, %v1412
        %v1477 = vmul.f32 %v1305, %v1413
        %v1478 = vmul.f32 %v1307, %v1414
        %v1479 = vmul.f32 %v1311, %v1415
        %v1480 = vmul.f32 %v1313, %v1416
        %v1481 = vmul.f32 %v1315, %v1417
        %v1482 = vmul.f32 %v1317, %v1418
        %v1483 = vmul.f32 %v1321, %v1419
        %v1484 = vmul.f32 %v1323, %v1420
        %v1485 = vmul.f32 %v1325, %v1421
        %v1486 = vmul.f32 %v1327, %v1422
        %v1487 = vmul.f32 %v1331, %v1423
        %v1488 = vmul.f32 %v1333, %v1424
        %v1489 = vmul.f32 %v1335, %v1425
        %v1490 = vmul.f32 %v1337, %v1426
        %v1491 = vmul.f32 %v1341, %v1427
        %v1492 = vmul.f32 %v1343, %v1428
        %v1493 = vmul.f32 %v1345, %v1429
        %v1494 = vmul.f32 %v1347, %v1430
        %v1495 = vmul.f32 %v1351, %v1431
        %v1496 = vmul.f32 %v1353, %v1432
        %v1497 = vmul.f32 %v1355, %v1433
        %v1498 = vmul.f32 %v1357, %v1434
        %v1499 = vmul.f32 %v1361, %v1435
        %v1500 = vmul.f32 %v1363, %v1436
        %v1501 = vmul.f32 %v1365, %v1437
        %v1502 = vmul.f32 %v1367, %v1438
        %v1503 = vmul.f32 %v1371, %v1439
        %v1504 = vmul.f32 %v1373, %v1440
        %v1505 = vmul.f32 %v1375, %v1441
        %v1506 = vmul.f32 %v1377, %v1442
        %v1507 = vmul.f32 %v1443, 0.044715
        %v1508 = vmul.f32 %v1444, 0.044715
        %v1509 = vmul.f32 %v1445, 0.044715
        %v1510 = vmul.f32 %v1446, 0.044715
        %v1511 = vmul.f32 %v1447, 0.044715
        %v1512 = vmul.f32 %v1448, 0.044715
        %v1513 = vmul.f32 %v1449, 0.044715
        %v1514 = vmul.f32 %v1450, 0.044715
        %v1515 = vmul.f32 %v1451, 0.044715
        %v1516 = vmul.f32 %v1452, 0.044715
        %v1517 = vmul.f32 %v1453, 0.044715
        %v1518 = vmul.f32 %v1454, 0.044715
        %v1519 = vmul.f32 %v1455, 0.044715
        %v1520 = vmul.f32 %v1456, 0.044715
        %v1521 = vmul.f32 %v1457, 0.044715
        %v1522 = vmul.f32 %v1458, 0.044715
        %v1523 = vmul.f32 %v1459, 0.044715
        %v1524 = vmul.f32 %v1460, 0.044715
        %v1525 = vmul.f32 %v1461, 0.044715
        %v1526 = vmul.f32 %v1462, 0.044715
        %v1527 = vmul.f32 %v1463, 0.044715
        %v1528 = vmul.f32 %v1464, 0.044715
        %v1529 = vmul.f32 %v1465, 0.044715
        %v1530 = vmul.f32 %v1466, 0.044715
        %v1531 = vmul.f32 %v1467, 0.044715
        %v1532 = vmul.f32 %v1468, 0.044715
        %v1533 = vmul.f32 %v1469, 0.044715
        %v1534 = vmul.f32 %v1470, 0.044715
        %v1535 = vmul.f32 %v1471, 0.044715
        %v1536 = vmul.f32 %v1472, 0.044715
        %v1537 = vmul.f32 %v1473, 0.044715
        %v1538 = vmul.f32 %v1474, 0.044715
        %v1539 = vmul.f32 %v1475, 0.044715
        %v1540 = vmul.f32 %v1476, 0.044715
        %v1541 = vmul.f32 %v1477, 0.044715
        %v1542 = vmul.f32 %v1478, 0.044715
        %v1543 = vmul.f32 %v1479, 0.044715
        %v1544 = vmul.f32 %v1480, 0.044715
        %v1545 = vmul.f32 %v1481, 0.044715
        %v1546 = vmul.f32 %v1482, 0.044715
        %v1547 = vmul.f32 %v1483, 0.044715
        %v1548 = vmul.f32 %v1484, 0.044715
        %v1549 = vmul.f32 %v1485, 0.044715
        %v1550 = vmul.f32 %v1486, 0.044715
        %v1551 = vmul.f32 %v1487, 0.044715
        %v1552 = vmul.f32 %v1488, 0.044715
        %v1553 = vmul.f32 %v1489, 0.044715
        %v1554 = vmul.f32 %v1490, 0.044715
        %v1555 = vmul.f32 %v1491, 0.044715
        %v1556 = vmul.f32 %v1492, 0.044715
        %v1557 = vmul.f32 %v1493, 0.044715
        %v1558 = vmul.f32 %v1494, 0.044715
        %v1559 = vmul.f32 %v1495, 0.044715
        %v1560 = vmul.f32 %v1496, 0.044715
        %v1561 = vmul.f32 %v1497, 0.044715
        %v1562 = vmul.f32 %v1498, 0.044715
        %v1563 = vmul.f32 %v1499, 0.044715
        %v1564 = vmul.f32 %v1500, 0.044715
        %v1565 = vmul.f32 %v1501, 0.044715
        %v1566 = vmul.f32 %v1502, 0.044715
        %v1567 = vmul.f32 %v1503, 0.044715
        %v1568 = vmul.f32 %v1504, 0.044715
        %v1569 = vmul.f32 %v1505, 0.044715
        %v1570 = vmul.f32 %v1506, 0.044715
        %v1571 = vadd.f32 %v1221, %v1507
        %v1572 = vadd.f32 %v1223, %v1508
        %v1573 = vadd.f32 %v1225, %v1509
        %v1574 = vadd.f32 %v1227, %v1510
        %v1575 = vadd.f32 %v1231, %v1511
        %v1576 = vadd.f32 %v1233, %v1512
        %v1577 = vadd.f32 %v1235, %v1513
        %v1578 = vadd.f32 %v1237, %v1514
        %v1579 = vadd.f32 %v1241, %v1515
        %v1580 = vadd.f32 %v1243, %v1516
        %v1581 = vadd.f32 %v1245, %v1517
        %v1582 = vadd.f32 %v1247, %v1518
        %v1583 = vadd.f32 %v1251, %v1519
        %v1584 = vadd.f32 %v1253, %v1520
        %v1585 = vadd.f32 %v1255, %v1521
        %v1586 = vadd.f32 %v1257, %v1522
        %v1587 = vadd.f32 %v1261, %v1523
        %v1588 = vadd.f32 %v1263, %v1524
        %v1589 = vadd.f32 %v1265, %v1525
        %v1590 = vadd.f32 %v1267, %v1526
        %v1591 = vadd.f32 %v1271, %v1527
        %v1592 = vadd.f32 %v1273, %v1528
        %v1593 = vadd.f32 %v1275, %v1529
        %v1594 = vadd.f32 %v1277, %v1530
        %v1595 = vadd.f32 %v1281, %v1531
        %v1596 = vadd.f32 %v1283, %v1532
        %v1597 = vadd.f32 %v1285, %v1533
        %v1598 = vadd.f32 %v1287, %v1534
        %v1599 = vadd.f32 %v1291, %v1535
        %v1600 = vadd.f32 %v1293, %v1536
        %v1601 = vadd.f32 %v1295, %v1537
        %v1602 = vadd.f32 %v1297, %v1538
        %v1603 = vadd.f32 %v1301, %v1539
        %v1604 = vadd.f32 %v1303, %v1540
        %v1605 = vadd.f32 %v1305, %v1541
        %v1606 = vadd.f32 %v1307, %v1542
        %v1607 = vadd.f32 %v1311, %v1543
        %v1608 = vadd.f32 %v1313, %v1544
        %v1609 = vadd.f32 %v1315, %v1545
        %v1610 = vadd.f32 %v1317, %v1546
        %v1611 = vadd.f32 %v1321, %v1547
        %v1612 = vadd.f32 %v1323, %v1548
        %v1613 = vadd.f32 %v1325, %v1549
        %v1614 = vadd.f32 %v1327, %v1550
        %v1615 = vadd.f32 %v1331, %v1551
        %v1616 = vadd.f32 %v1333, %v1552
        %v1617 = vadd.f32 %v1335, %v1553
        %v1618 = vadd.f32 %v1337, %v1554
        %v1619 = vadd.f32 %v1341, %v1555
        %v1620 = vadd.f32 %v1343, %v1556
        %v1621 = vadd.f32 %v1345, %v1557
        %v1622 = vadd.f32 %v1347, %v1558
        %v1623 = vadd.f32 %v1351, %v1559
        %v1624 = vadd.f32 %v1353, %v1560
        %v1625 = vadd.f32 %v1355, %v1561
        %v1626 = vadd.f32 %v1357, %v1562
        %v1627 = vadd.f32 %v1361, %v1563
        %v1628 = vadd.f32 %v1363, %v1564
        %v1629 = vadd.f32 %v1365, %v1565
        %v1630 = vadd.f32 %v1367, %v1566
        %v1631 = vadd.f32 %v1371, %v1567
        %v1632 = vadd.f32 %v1373, %v1568
        %v1633 = vadd.f32 %v1375, %v1569
        %v1634 = vadd.f32 %v1377, %v1570
        %v1635 = vmul.f32 %v1571, 0.7978846
        %v1636 = vmul.f32 %v1572, 0.7978846
        %v1637 = vmul.f32 %v1573, 0.7978846
        %v1638 = vmul.f32 %v1574, 0.7978846
        %v1639 = vmul.f32 %v1575, 0.7978846
        %v1640 = vmul.f32 %v1576, 0.7978846
        %v1641 = vmul.f32 %v1577, 0.7978846
        %v1642 = vmul.f32 %v1578, 0.7978846
        %v1643 = vmul.f32 %v1579, 0.7978846
        %v1644 = vmul.f32 %v1580, 0.7978846
        %v1645 = vmul.f32 %v1581, 0.7978846
        %v1646 = vmul.f32 %v1582, 0.7978846
        %v1647 = vmul.f32 %v1583, 0.7978846
        %v1648 = vmul.f32 %v1584, 0.7978846
        %v1649 = vmul.f32 %v1585, 0.7978846
        %v1650 = vmul.f32 %v1586, 0.7978846
        %v1651 = vmul.f32 %v1587, 0.7978846
        %v1652 = vmul.f32 %v1588, 0.7978846
        %v1653 = vmul.f32 %v1589, 0.7978846
        %v1654 = vmul.f32 %v1590, 0.7978846
        %v1655 = vmul.f32 %v1591, 0.7978846
        %v1656 = vmul.f32 %v1592, 0.7978846
        %v1657 = vmul.f32 %v1593, 0.7978846
        %v1658 = vmul.f32 %v1594, 0.7978846
        %v1659 = vmul.f32 %v1595, 0.7978846
        %v1660 = vmul.f32 %v1596, 0.7978846
        %v1661 = vmul.f32 %v1597, 0.7978846
        %v1662 = vmul.f32 %v1598, 0.7978846
        %v1663 = vmul.f32 %v1599, 0.7978846
        %v1664 = vmul.f32 %v1600, 0.7978846
        %v1665 = vmul.f32 %v1601, 0.7978846
        %v1666 = vmul.f32 %v1602, 0.7978846
        %v1667 = vmul.f32 %v1603, 0.7978846
        %v1668 = vmul.f32 %v1604, 0.7978846
        %v1669 = vmul.f32 %v1605, 0.7978846
        %v1670 = vmul.f32 %v1606, 0.7978846
        %v1671 = vmul.f32 %v1607, 0.7978846
        %v1672 = vmul.f32 %v1608, 0.7978846
        %v1673 = vmul.f32 %v1609, 0.7978846
        %v1674 = vmul.f32 %v1610, 0.7978846
        %v1675 = vmul.f32 %v1611, 0.7978846
        %v1676 = vmul.f32 %v1612, 0.7978846
        %v1677 = vmul.f32 %v1613, 0.7978846
        %v1678 = vmul.f32 %v1614, 0.7978846
        %v1679 = vmul.f32 %v1615, 0.7978846
        %v1680 = vmul.f32 %v1616, 0.7978846
        %v1681 = vmul.f32 %v1617, 0.7978846
        %v1682 = vmul.f32 %v1618, 0.7978846
        %v1683 = vmul.f32 %v1619, 0.7978846
        %v1684 = vmul.f32 %v1620, 0.7978846
        %v1685 = vmul.f32 %v1621, 0.7978846
        %v1686 = vmul.f32 %v1622, 0.7978846
        %v1687 = vmul.f32 %v1623, 0.7978846
        %v1688 = vmul.f32 %v1624, 0.7978846
        %v1689 = vmul.f32 %v1625, 0.7978846
        %v1690 = vmul.f32 %v1626, 0.7978846
        %v1691 = vmul.f32 %v1627, 0.7978846
        %v1692 = vmul.f32 %v1628, 0.7978846
        %v1693 = vmul.f32 %v1629, 0.7978846
        %v1694 = vmul.f32 %v1630, 0.7978846
        %v1695 = vmul.f32 %v1631, 0.7978846
        %v1696 = vmul.f32 %v1632, 0.7978846
        %v1697 = vmul.f32 %v1633, 0.7978846
        %v1698 = vmul.f32 %v1634, 0.7978846
        %v1699 = vtanh.pop %v1635
        %v1700 = vtanh.pop %v1636
        %v1701 = vtanh.pop %v1637
        %v1702 = vtanh.pop %v1638
        %v1703 = vtanh.pop %v1639
        %v1704 = vtanh.pop %v1640
        %v1705 = vtanh.pop %v1641
        %v1706 = vtanh.pop %v1642
        %v1707 = vtanh.pop %v1643
        %v1708 = vtanh.pop %v1644
        %v1709 = vtanh.pop %v1645
        %v1710 = vtanh.pop %v1646
        %v1711 = vtanh.pop %v1647
        %v1712 = vtanh.pop %v1648
        %v1713 = vtanh.pop %v1649
        %v1714 = vtanh.pop %v1650
        %v1715 = vtanh.pop %v1651
        %v1716 = vtanh.pop %v1652
        %v1717 = vtanh.pop %v1653
        %v1718 = vtanh.pop %v1654
        %v1719 = vtanh.pop %v1655
        %v1720 = vtanh.pop %v1656
        %v1721 = vtanh.pop %v1657
        %v1722 = vtanh.pop %v1658
        %v1723 = vtanh.pop %v1659
        %v1724 = vtanh.pop %v1660
        %v1725 = vtanh.pop %v1661
        %v1726 = vtanh.pop %v1662
        %v1727 = vtanh.pop %v1663
        %v1728 = vtanh.pop %v1664
        %v1729 = vtanh.pop %v1665
        %v1730 = vtanh.pop %v1666
        %v1731 = vtanh.pop %v1667
        %v1732 = vtanh.pop %v1668
        %v1733 = vtanh.pop %v1669
        %v1734 = vtanh.pop %v1670
        %v1735 = vtanh.pop %v1671
        %v1736 = vtanh.pop %v1672
        %v1737 = vtanh.pop %v1673
        %v1738 = vtanh.pop %v1674
        %v1739 = vtanh.pop %v1675
        %v1740 = vtanh.pop %v1676
        %v1741 = vtanh.pop %v1677
        %v1742 = vtanh.pop %v1678
        %v1743 = vtanh.pop %v1679
        %v1744 = vtanh.pop %v1680
        %v1745 = vtanh.pop %v1681
        %v1746 = vtanh.pop %v1682
        %v1747 = vtanh.pop %v1683
        %v1748 = vtanh.pop %v1684
        %v1749 = vtanh.pop %v1685
        %v1750 = vtanh.pop %v1686
        %v1751 = vtanh.pop %v1687
        %v1752 = vtanh.pop %v1688
        %v1753 = vtanh.pop %v1689
        %v1754 = vtanh.pop %v1690
        %v1755 = vtanh.pop %v1691
        %v1756 = vtanh.pop %v1692
        %v1757 = vtanh.pop %v1693
        %v1758 = vtanh.pop %v1694
        %v1759 = vtanh.pop %v1695
        %v1760 = vtanh.pop %v1696
        %v1761 = vtanh.pop %v1697
        %v1762 = vtanh.pop %v1698
        %v1763 = vadd.f32 %v1699, 1.0
        %v1764 = vadd.f32 %v1700, 1.0
        %v1765 = vadd.f32 %v1701, 1.0
        %v1766 = vadd.f32 %v1702, 1.0
        %v1767 = vadd.f32 %v1703, 1.0
        %v1768 = vadd.f32 %v1704, 1.0
        %v1769 = vadd.f32 %v1705, 1.0
        %v1770 = vadd.f32 %v1706, 1.0
        %v1771 = vadd.f32 %v1707, 1.0
        %v1772 = vadd.f32 %v1708, 1.0
        %v1773 = vadd.f32 %v1709, 1.0
        %v1774 = vadd.f32 %v1710, 1.0
        %v1775 = vadd.f32 %v1711, 1.0
        %v1776 = vadd.f32 %v1712, 1.0
        %v1777 = vadd.f32 %v1713, 1.0
        %v1778 = vadd.f32 %v1714, 1.0
        %v1779 = vadd.f32 %v1715, 1.0
        %v1780 = vadd.f32 %v1716, 1.0
        %v1781 = vadd.f32 %v1717, 1.0
        %v1782 = vadd.f32 %v1718, 1.0
        %v1783 = vadd.f32 %v1719, 1.0
        %v1784 = vadd.f32 %v1720, 1.0
        %v1785 = vadd.f32 %v1721, 1.0
        %v1786 = vadd.f32 %v1722, 1.0
        %v1787 = vadd.f32 %v1723, 1.0
        %v1788 = vadd.f32 %v1724, 1.0
        %v1789 = vadd.f32 %v1725, 1.0
        %v1790 = vadd.f32 %v1726, 1.0
        %v1791 = vadd.f32 %v1727, 1.0
        %v1792 = vadd.f32 %v1728, 1.0
        %v1793 = vadd.f32 %v1729, 1.0
        %v1794 = vadd.f32 %v1730, 1.0
        %v1795 = vadd.f32 %v1731, 1.0
        %v1796 = vadd.f32 %v1732, 1.0
        %v1797 = vadd.f32 %v1733, 1.0
        %v1798 = vadd.f32 %v1734, 1.0
        %v1799 = vadd.f32 %v1735, 1.0
        %v1800 = vadd.f32 %v1736, 1.0
        %v1801 = vadd.f32 %v1737, 1.0
        %v1802 = vadd.f32 %v1738, 1.0
        %v1803 = vadd.f32 %v1739, 1.0
        %v1804 = vadd.f32 %v1740, 1.0
        %v1805 = vadd.f32 %v1741, 1.0
        %v1806 = vadd.f32 %v1742, 1.0
        %v1807 = vadd.f32 %v1743, 1.0
        %v1808 = vadd.f32 %v1744, 1.0
        %v1809 = vadd.f32 %v1745, 1.0
        %v1810 = vadd.f32 %v1746, 1.0
        %v1811 = vadd.f32 %v1747, 1.0
        %v1812 = vadd.f32 %v1748, 1.0
        %v1813 = vadd.f32 %v1749, 1.0
        %v1814 = vadd.f32 %v1750, 1.0
        %v1815 = vadd.f32 %v1751, 1.0
        %v1816 = vadd.f32 %v1752, 1.0
        %v1817 = vadd.f32 %v1753, 1.0
        %v1818 = vadd.f32 %v1754, 1.0
        %v1819 = vadd.f32 %v1755, 1.0
        %v1820 = vadd.f32 %v1756, 1.0
        %v1821 = vadd.f32 %v1757, 1.0
        %v1822 = vadd.f32 %v1758, 1.0
        %v1823 = vadd.f32 %v1759, 1.0
        %v1824 = vadd.f32 %v1760, 1.0
        %v1825 = vadd.f32 %v1761, 1.0
        %v1826 = vadd.f32 %v1762, 1.0
        %v1827 = vmul.f32 %v1763, 0.5
        %v1828 = vmul.f32 %v1764, 0.5
        %v1829 = vmul.f32 %v1765, 0.5
        %v1830 = vmul.f32 %v1766, 0.5
        %v1831 = vmul.f32 %v1767, 0.5
        %v1832 = vmul.f32 %v1768, 0.5
        %v1833 = vmul.f32 %v1769, 0.5
        %v1834 = vmul.f32 %v1770, 0.5
        %v1835 = vmul.f32 %v1771, 0.5
        %v1836 = vmul.f32 %v1772, 0.5
        %v1837 = vmul.f32 %v1773, 0.5
        %v1838 = vmul.f32 %v1774, 0.5
        %v1839 = vmul.f32 %v1775, 0.5
        %v1840 = vmul.f32 %v1776, 0.5
        %v1841 = vmul.f32 %v1777, 0.5
        %v1842 = vmul.f32 %v1778, 0.5
        %v1843 = vmul.f32 %v1779, 0.5
        %v1844 = vmul.f32 %v1780, 0.5
        %v1845 = vmul.f32 %v1781, 0.5
        %v1846 = vmul.f32 %v1782, 0.5
        %v1847 = vmul.f32 %v1783, 0.5
        %v1848 = vmul.f32 %v1784, 0.5
        %v1849 = vmul.f32 %v1785, 0.5
        %v1850 = vmul.f32 %v1786, 0.5
        %v1851 = vmul.f32 %v1787, 0.5
        %v1852 = vmul.f32 %v1788, 0.5
        %v1853 = vmul.f32 %v1789, 0.5
        %v1854 = vmul.f32 %v1790, 0.5
        %v1855 = vmul.f32 %v1791, 0.5
        %v1856 = vmul.f32 %v1792, 0.5
        %v1857 = vmul.f32 %v1793, 0.5
        %v1858 = vmul.f32 %v1794, 0.5
        %v1859 = vmul.f32 %v1795, 0.5
        %v1860 = vmul.f32 %v1796, 0.5
        %v1861 = vmul.f32 %v1797, 0.5
        %v1862 = vmul.f32 %v1798, 0.5
        %v1863 = vmul.f32 %v1799, 0.5
        %v1864 = vmul.f32 %v1800, 0.5
        %v1865 = vmul.f32 %v1801, 0.5
        %v1866 = vmul.f32 %v1802, 0.5
        %v1867 = vmul.f32 %v1803, 0.5
        %v1868 = vmul.f32 %v1804, 0.5
        %v1869 = vmul.f32 %v1805, 0.5
        %v1870 = vmul.f32 %v1806, 0.5
        %v1871 = vmul.f32 %v1807, 0.5
        %v1872 = vmul.f32 %v1808, 0.5
        %v1873 = vmul.f32 %v1809, 0.5
        %v1874 = vmul.f32 %v1810, 0.5
        %v1875 = vmul.f32 %v1811, 0.5
        %v1876 = vmul.f32 %v1812, 0.5
        %v1877 = vmul.f32 %v1813, 0.5
        %v1878 = vmul.f32 %v1814, 0.5
        %v1879 = vmul.f32 %v1815, 0.5
        %v1880 = vmul.f32 %v1816, 0.5
        %v1881 = vmul.f32 %v1817, 0.5
        %v1882 = vmul.f32 %v1818, 0.5
        %v1883 = vmul.f32 %v1819, 0.5
        %v1884 = vmul.f32 %v1820, 0.5
        %v1885 = vmul.f32 %v1821, 0.5
        %v1886 = vmul.f32 %v1822, 0.5
        %v1887 = vmul.f32 %v1823, 0.5
        %v1888 = vmul.f32 %v1824, 0.5
        %v1889 = vmul.f32 %v1825, 0.5
        %v1890 = vmul.f32 %v1826, 0.5
        %v1891 = vmul.f32 %v1221, %v1827
        %v1892 = vmul.f32 %v1223, %v1828
        %v1893 = vmul.f32 %v1225, %v1829
        %v1894 = vmul.f32 %v1227, %v1830
        %v1895 = vmul.f32 %v1231, %v1831
        %v1896 = vmul.f32 %v1233, %v1832
        %v1897 = vmul.f32 %v1235, %v1833
        %v1898 = vmul.f32 %v1237, %v1834
        %v1899 = vmul.f32 %v1241, %v1835
        %v1900 = vmul.f32 %v1243, %v1836
        %v1901 = vmul.f32 %v1245, %v1837
        %v1902 = vmul.f32 %v1247, %v1838
        %v1903 = vmul.f32 %v1251, %v1839
        %v1904 = vmul.f32 %v1253, %v1840
        %v1905 = vmul.f32 %v1255, %v1841
        %v1906 = vmul.f32 %v1257, %v1842
        %v1907 = vmul.f32 %v1261, %v1843
        %v1908 = vmul.f32 %v1263, %v1844
        %v1909 = vmul.f32 %v1265, %v1845
        %v1910 = vmul.f32 %v1267, %v1846
        %v1911 = vmul.f32 %v1271, %v1847
        %v1912 = vmul.f32 %v1273, %v1848
        %v1913 = vmul.f32 %v1275, %v1849
        %v1914 = vmul.f32 %v1277, %v1850
        %v1915 = vmul.f32 %v1281, %v1851
        %v1916 = vmul.f32 %v1283, %v1852
        %v1917 = vmul.f32 %v1285, %v1853
        %v1918 = vmul.f32 %v1287, %v1854
        %v1919 = vmul.f32 %v1291, %v1855
        %v1920 = vmul.f32 %v1293, %v1856
        %v1921 = vmul.f32 %v1295, %v1857
        %v1922 = vmul.f32 %v1297, %v1858
        %v1923 = vmul.f32 %v1301, %v1859
        %v1924 = vmul.f32 %v1303, %v1860
        %v1925 = vmul.f32 %v1305, %v1861
        %v1926 = vmul.f32 %v1307, %v1862
        %v1927 = vmul.f32 %v1311, %v1863
        %v1928 = vmul.f32 %v1313, %v1864
        %v1929 = vmul.f32 %v1315, %v1865
        %v1930 = vmul.f32 %v1317, %v1866
        %v1931 = vmul.f32 %v1321, %v1867
        %v1932 = vmul.f32 %v1323, %v1868
        %v1933 = vmul.f32 %v1325, %v1869
        %v1934 = vmul.f32 %v1327, %v1870
        %v1935 = vmul.f32 %v1331, %v1871
        %v1936 = vmul.f32 %v1333, %v1872
        %v1937 = vmul.f32 %v1335, %v1873
        %v1938 = vmul.f32 %v1337, %v1874
        %v1939 = vmul.f32 %v1341, %v1875
        %v1940 = vmul.f32 %v1343, %v1876
        %v1941 = vmul.f32 %v1345, %v1877
        %v1942 = vmul.f32 %v1347, %v1878
        %v1943 = vmul.f32 %v1351, %v1879
        %v1944 = vmul.f32 %v1353, %v1880
        %v1945 = vmul.f32 %v1355, %v1881
        %v1946 = vmul.f32 %v1357, %v1882
        %v1947 = vmul.f32 %v1361, %v1883
        %v1948 = vmul.f32 %v1363, %v1884
        %v1949 = vmul.f32 %v1365, %v1885
        %v1950 = vmul.f32 %v1367, %v1886
        %v1951 = vmul.f32 %v1371, %v1887
        %v1952 = vmul.f32 %v1373, %v1888
        %v1953 = vmul.f32 %v1375, %v1889
        %v1954 = vmul.f32 %v1377, %v1890
        %v1955 = vpack.c.bf16 %v1893, %v1891
        %v1956 = vpack.c.bf16 %v1894, %v1892
        %v1957 = vpack.c.bf16 %v1897, %v1895
        %v1958 = vpack.c.bf16 %v1898, %v1896
        %v1959 = vpack.c.bf16 %v1901, %v1899
        %v1960 = vpack.c.bf16 %v1902, %v1900
        %v1961 = vpack.c.bf16 %v1905, %v1903
        %v1962 = vpack.c.bf16 %v1906, %v1904
        %v1963 = vpack.c.bf16 %v1909, %v1907
        %v1964 = vpack.c.bf16 %v1910, %v1908
        %v1965 = vpack.c.bf16 %v1913, %v1911
        %v1966 = vpack.c.bf16 %v1914, %v1912
        %v1967 = vpack.c.bf16 %v1917, %v1915
        %v1968 = vpack.c.bf16 %v1918, %v1916
        %v1969 = vpack.c.bf16 %v1921, %v1919
        %v1970 = vpack.c.bf16 %v1922, %v1920
        %v1971 = vpack.c.bf16 %v1925, %v1923
        %v1972 = vpack.c.bf16 %v1926, %v1924
        %v1973 = vpack.c.bf16 %v1929, %v1927
        %v1974 = vpack.c.bf16 %v1930, %v1928
        %v1975 = vpack.c.bf16 %v1933, %v1931
        %v1976 = vpack.c.bf16 %v1934, %v1932
        %v1977 = vpack.c.bf16 %v1937, %v1935
        %v1978 = vpack.c.bf16 %v1938, %v1936
        %v1979 = vpack.c.bf16 %v1941, %v1939
        %v1980 = vpack.c.bf16 %v1942, %v1940
        %v1981 = vpack.c.bf16 %v1945, %v1943
        %v1982 = vpack.c.bf16 %v1946, %v1944
        %v1983 = vpack.c.bf16 %v1949, %v1947
        %v1984 = vpack.c.bf16 %v1950, %v1948
        %v1985 = vpack.c.bf16 %v1953, %v1951
        %v1986 = vpack.c.bf16 %v1954, %v1952
        %v1987 = vld [vmem:[#allocation8] sm:$0xf]
        %v1988 = vld [vmem:[#allocation8 + $0x4] sm:$0xf]
        %v1989 = vld [vmem:[#allocation8 + $0x8] sm:$0xf]
        %v1990 = vld [vmem:[#allocation8 + $0xc] sm:$0xf]
        %v1991 = vld [vmem:[#allocation8 + $0x10] sm:$0xf]
        %v1992 = vld [vmem:[#allocation8 + $0x14] sm:$0xf]
        %v1993 = vld [vmem:[#allocation8 + $0x18] sm:$0xf]
        %v1994 = vld [vmem:[#allocation8 + $0x1c] sm:$0xf]
        %v1995 = vld [vmem:[#allocation8 + $0x20] sm:$0xf]
        %v1996 = vld [vmem:[#allocation8 + $0x24] sm:$0xf]
        %v1997 = vld [vmem:[#allocation8 + $0x28] sm:$0xf]
        %v1998 = vld [vmem:[#allocation8 + $0x2c] sm:$0xf]
        %v1999 = vld [vmem:[#allocation8 + $0x30] sm:$0xf]
        %v2000 = vld [vmem:[#allocation8 + $0x34] sm:$0xf]
        %v2001 = vld [vmem:[#allocation8 + $0x38] sm:$0xf]
        %v2002 = vld [vmem:[#allocation8 + $0x3c] sm:$0xf]
        %v2003 = vld [vmem:[#allocation8 + $0x40] sm:$0xf]
        %v2004 = vld [vmem:[#allocation8 + $0x44] sm:$0xf]
        %v2005 = vld [vmem:[#allocation8 + $0x48] sm:$0xf]
        %v2006 = vld [vmem:[#allocation8 + $0x4c] sm:$0xf]
        %v2007 = vld [vmem:[#allocation8 + $0x50] sm:$0xf]
        %v2008 = vld [vmem:[#allocation8 + $0x54] sm:$0xf]
        %v2009 = vld [vmem:[#allocation8 + $0x58] sm:$0xf]
        %v2010 = vld [vmem:[#allocation8 + $0x5c] sm:$0xf]
        %v2011 = vld [vmem:[#allocation8 + $0x60] sm:$0xf]
        %v2012 = vld [vmem:[#allocation8 + $0x64] sm:$0xf]
        %v2013 = vld [vmem:[#allocation8 + $0x68] sm:$0xf]
        %v2014 = vld [vmem:[#allocation8 + $0x6c] sm:$0xf]
        %v2015 = vld [vmem:[#allocation8 + $0x70] sm:$0xf]
        %v2016 = vld [vmem:[#allocation8 + $0x74] sm:$0xf]
        %v2017 = vld [vmem:[#allocation8 + $0x78] sm:$0xf]
        %v2018 = vld [vmem:[#allocation8 + $0x7c] sm:$0xf]
        %v2019 = vld [vmem:[%s6] sm:$0x1]
        %v2021 = vlaneseq
        %v2022 = vshrl.u32 %v2021, 7
        %v2023 = vsub.s32 0, %v2022
        %v2024 = vrot.slane %v2019, %v2023
        %v2058 = vunpack.c.l.b16 %v1987
        %v2059 = vunpack.c.l.b16 %v1988
        %v2060 = vunpack.c.l.b16 %v1989
        %v2061 = vunpack.c.l.b16 %v1990
        %v2062 = vunpack.c.l.b16 %v1991
        %v2063 = vunpack.c.l.b16 %v1992
        %v2064 = vunpack.c.l.b16 %v1993
        %v2065 = vunpack.c.l.b16 %v1994
        %v2066 = vunpack.c.l.b16 %v1995
        %v2067 = vunpack.c.l.b16 %v1996
        %v2068 = vunpack.c.l.b16 %v1997
        %v2069 = vunpack.c.l.b16 %v1998
        %v2070 = vunpack.c.l.b16 %v1999
        %v2071 = vunpack.c.l.b16 %v2000
        %v2072 = vunpack.c.l.b16 %v2001
        %v2073 = vunpack.c.l.b16 %v2002
        %v2074 = vunpack.c.l.b16 %v2003
        %v2075 = vunpack.c.l.b16 %v2004
        %v2076 = vunpack.c.l.b16 %v2005
        %v2077 = vunpack.c.l.b16 %v2006
        %v2078 = vunpack.c.l.b16 %v2007
        %v2079 = vunpack.c.l.b16 %v2008
        %v2080 = vunpack.c.l.b16 %v2009
        %v2081 = vunpack.c.l.b16 %v2010
        %v2082 = vunpack.c.l.b16 %v2011
        %v2083 = vunpack.c.l.b16 %v2012
        %v2084 = vunpack.c.l.b16 %v2013
        %v2085 = vunpack.c.l.b16 %v2014
        %v2086 = vunpack.c.l.b16 %v2015
        %v2087 = vunpack.c.l.b16 %v2016
        %v2088 = vunpack.c.l.b16 %v2017
        %v2089 = vunpack.c.l.b16 %v2018
        %v2090 = vpack.c.b16 %v2059, %v2058
        %v2091 = vpack.c.b16 %v2061, %v2060
        %v2092 = vpack.c.b16 %v2063, %v2062
        %v2093 = vpack.c.b16 %v2065, %v2064
        %v2094 = vpack.c.b16 %v2067, %v2066
        %v2095 = vpack.c.b16 %v2069, %v2068
        %v2096 = vpack.c.b16 %v2071, %v2070
        %v2097 = vpack.c.b16 %v2073, %v2072
        %v2098 = vpack.c.b16 %v2075, %v2074
        %v2099 = vpack.c.b16 %v2077, %v2076
        %v2100 = vpack.c.b16 %v2079, %v2078
        %v2101 = vpack.c.b16 %v2081, %v2080
        %v2102 = vpack.c.b16 %v2083, %v2082
        %v2103 = vpack.c.b16 %v2085, %v2084
        %v2104 = vpack.c.b16 %v2087, %v2086
        %v2105 = vpack.c.b16 %v2089, %v2088
        %2122 = vmatprep.subr.bf16.mxu0 0
        %2123 = vmatpush1.bf16.msra.mxu0 %v2090
        %2124 = vmatprep.subr.bf16.mxu0 0
        %2125 = vmatpush1.bf16.msra.mxu0 %v2091
        %2126 = vmatprep.subr.bf16.mxu0 0
        %2127 = vmatpush1.bf16.msra.mxu0 %v2092
        %2128 = vmatprep.subr.bf16.mxu0 0
        %2129 = vmatpush1.bf16.msra.mxu0 %v2093
        %2130 = vmatprep.subr.bf16.mxu0 0
        %2131 = vmatpush1.bf16.msra.mxu0 %v2094
        %2132 = vmatprep.subr.bf16.mxu0 0
        %2133 = vmatpush1.bf16.msra.mxu0 %v2095
        %2134 = vmatprep.subr.bf16.mxu0 0
        %2135 = vmatpush1.bf16.msra.mxu0 %v2096
        %2136 = vmatprep.subr.bf16.mxu0 0
        %2137 = vmatpush1.bf16.msra.mxu0 %v2097
        %2138 = vmatprep.subr.bf16.mxu0 0
        %2139 = vmatpush1.bf16.msra.mxu0 %v2098
        %2140 = vmatprep.subr.bf16.mxu0 0
        %2141 = vmatpush1.bf16.msra.mxu0 %v2099
        %2142 = vmatprep.subr.bf16.mxu0 0
        %2143 = vmatpush1.bf16.msra.mxu0 %v2100
        %2144 = vmatprep.subr.bf16.mxu0 0
        %2145 = vmatpush1.bf16.msra.mxu0 %v2101
        %2146 = vmatprep.subr.bf16.mxu0 0
        %2147 = vmatpush1.bf16.msra.mxu0 %v2102
        %2148 = vmatprep.subr.bf16.mxu0 0
        %2149 = vmatpush1.bf16.msra.mxu0 %v2103
        %2150 = vmatprep.subr.bf16.mxu0 0
        %2151 = vmatpush1.bf16.msra.mxu0 %v2104
        %2152 = vmatprep.subr.bf16.mxu0 0
        %2153 = vmatpush1.bf16.msra.mxu0 %v2105
        %2154 = vmatprep.mubr.bf16.mxu0 %v1956
        %2155 = vmatmul.mubr.bf16.gmra.mrb[0].mxu0 %v1955
        %v2156 = vpop.f32.mrb[0].mxu0
        %v2157 = vadd.f32 %v2024, %v2156
        %v2158 = vpop.f32.mrb[0].mxu0
        %v2159 = vpop.f32.mrb[0].mxu0
        %v2160 = vadd.f32 %v2024, %v2159
        %v2161 = vpop.f32.mrb[0].mxu0
        %2162 = vmatprep.mubr.bf16.mxu0 %v1958
        %2163 = vmatmul.mubr.bf16.gmra.mrb[0].mxu0 %v1957
        %v2164 = vpop.f32.mrb[0].mxu0
        %v2165 = vadd.f32 %v2024, %v2164
        %v2166 = vpop.f32.mrb[0].mxu0
        %v2167 = vpop.f32.mrb[0].mxu0
        %v2168 = vadd.f32 %v2024, %v2167
        %v2169 = vpop.f32.mrb[0].mxu0
        %2170 = vmatprep.mubr.bf16.mxu0 %v1960
        %2171 = vmatmul.mubr.bf16.gmra.mrb[0].mxu0 %v1959
        %v2172 = vpop.f32.mrb[0].mxu0
        %v2173 = vadd.f32 %v2024, %v2172
        %v2174 = vpop.f32.mrb[0].mxu0
        %v2175 = vpop.f32.mrb[0].mxu0
        %v2176 = vadd.f32 %v2024, %v2175
        %v2177 = vpop.f32.mrb[0].mxu0
        %2178 = vmatprep.mubr.bf16.mxu0 %v1962
        %2179 = vmatmul.mubr.bf16.gmra.mrb[0].mxu0 %v1961
        %v2180 = vpop.f32.mrb[0].mxu0
        %v2181 = vadd.f32 %v2024, %v2180
        %v2182 = vpop.f32.mrb[0].mxu0
        %v2183 = vpop.f32.mrb[0].mxu0
        %v2184 = vadd.f32 %v2024, %v2183
        %v2185 = vpop.f32.mrb[0].mxu0
        %2186 = vmatprep.mubr.bf16.mxu0 %v1964
        %2187 = vmatmul.mubr.bf16.gmra.mrb[0].mxu0 %v1963
        %v2188 = vpop.f32.mrb[0].mxu0
        %v2189 = vadd.f32 %v2024, %v2188
        %v2190 = vpop.f32.mrb[0].mxu0
        %v2191 = vpop.f32.mrb[0].mxu0
        %v2192 = vadd.f32 %v2024, %v2191
        %v2193 = vpop.f32.mrb[0].mxu0
        %2194 = vmatprep.mubr.bf16.mxu0 %v1966
        %2195 = vmatmul.mubr.bf16.gmra.mrb[0].mxu0 %v1965
        %v2196 = vpop.f32.mrb[0].mxu0
        %v2197 = vadd.f32 %v2024, %v2196
        %v2198 = vpop.f32.mrb[0].mxu0
        %v2199 = vpop.f32.mrb[0].mxu0
        %v2200 = vadd.f32 %v2024, %v2199
        %v2201 = vpop.f32.mrb[0].mxu0
        %2202 = vmatprep.mubr.bf16.mxu0 %v1968
        %2203 = vmatmul.mubr.bf16.gmra.mrb[0].mxu0 %v1967
        %v2204 = vpop.f32.mrb[0].mxu0
        %v2205 = vadd.f32 %v2024, %v2204
        %v2206 = vpop.f32.mrb[0].mxu0
        %v2207 = vpop.f32.mrb[0].mxu0
        %v2208 = vadd.f32 %v2024, %v2207
        %v2209 = vpop.f32.mrb[0].mxu0
        %2210 = vmatprep.mubr.bf16.mxu0 %v1970
        %2211 = vmatmul.mubr.bf16.gmra.mrb[0].mxu0 %v1969
        %v2212 = vpop.f32.mrb[0].mxu0
        %v2213 = vadd.f32 %v2024, %v2212
        %v2214 = vpop.f32.mrb[0].mxu0
        %v2215 = vpop.f32.mrb[0].mxu0
        %v2216 = vadd.f32 %v2024, %v2215
        %v2217 = vpop.f32.mrb[0].mxu0
        %2218 = vmatprep.mubr.bf16.mxu0 %v1972
        %2219 = vmatmul.mubr.bf16.gmra.mrb[0].mxu0 %v1971
        %v2220 = vpop.f32.mrb[0].mxu0
        %v2221 = vadd.f32 %v2024, %v2220
        %v2222 = vpop.f32.mrb[0].mxu0
        %v2223 = vpop.f32.mrb[0].mxu0
        %v2224 = vadd.f32 %v2024, %v2223
        %v2225 = vpop.f32.mrb[0].mxu0
        %2226 = vmatprep.mubr.bf16.mxu0 %v1974
        %2227 = vmatmul.mubr.bf16.gmra.mrb[0].mxu0 %v1973
        %v2228 = vpop.f32.mrb[0].mxu0
        %v2229 = vadd.f32 %v2024, %v2228
        %v2230 = vpop.f32.mrb[0].mxu0
        %v2231 = vpop.f32.mrb[0].mxu0
        %v2232 = vadd.f32 %v2024, %v2231
        %v2233 = vpop.f32.mrb[0].mxu0
        %2234 = vmatprep.mubr.bf16.mxu0 %v1976
        %2235 = vmatmul.mubr.bf16.gmra.mrb[0].mxu0 %v1975
        %v2236 = vpop.f32.mrb[0].mxu0
        %v2237 = vadd.f32 %v2024, %v2236
        %v2238 = vpop.f32.mrb[0].mxu0
        %v2239 = vpop.f32.mrb[0].mxu0
        %v2240 = vadd.f32 %v2024, %v2239
        %v2241 = vpop.f32.mrb[0].mxu0
        %2242 = vmatprep.mubr.bf16.mxu0 %v1978
        %2243 = vmatmul.mubr.bf16.gmra.mrb[0].mxu0 %v1977
        %v2244 = vpop.f32.mrb[0].mxu0
        %v2245 = vadd.f32 %v2024, %v2244
        %v2246 = vpop.f32.mrb[0].mxu0
        %v2247 = vpop.f32.mrb[0].mxu0
        %v2248 = vadd.f32 %v2024, %v2247
        %v2249 = vpop.f32.mrb[0].mxu0
        %2250 = vmatprep.mubr.bf16.mxu0 %v1980
        %2251 = vmatmul.mubr.bf16.gmra.mrb[0].mxu0 %v1979
        %v2252 = vpop.f32.mrb[0].mxu0
        %v2253 = vadd.f32 %v2024, %v2252
        %v2254 = vpop.f32.mrb[0].mxu0
        %v2255 = vpop.f32.mrb[0].mxu0
        %v2256 = vadd.f32 %v2024, %v2255
        %v2257 = vpop.f32.mrb[0].mxu0
        %2258 = vmatprep.mubr.bf16.mxu0 %v1982
        %2259 = vmatmul.mubr.bf16.gmra.mrb[0].mxu0 %v1981
        %v2260 = vpop.f32.mrb[0].mxu0
        %v2261 = vadd.f32 %v2024, %v2260
        %v2262 = vpop.f32.mrb[0].mxu0
        %v2263 = vpop.f32.mrb[0].mxu0
        %v2264 = vadd.f32 %v2024, %v2263
        %v2265 = vpop.f32.mrb[0].mxu0
        %2266 = vmatprep.mubr.bf16.mxu0 %v1984
        %2267 = vmatmul.mubr.bf16.gmra.mrb[0].mxu0 %v1983
        %v2268 = vpop.f32.mrb[0].mxu0
        %v2269 = vadd.f32 %v2024, %v2268
        %v2270 = vpop.f32.mrb[0].mxu0
        %v2271 = vpop.f32.mrb[0].mxu0
        %v2272 = vadd.f32 %v2024, %v2271
        %v2273 = vpop.f32.mrb[0].mxu0
        %2274 = vmatprep.mubr.bf16.mxu0 %v1986
        %2275 = vmatmul.mubr.bf16.gmra.mrb[0].mxu0 %v1985
        %v2276 = vpop.f32.mrb[0].mxu0
        %v2277 = vadd.f32 %v2024, %v2276
        %v2278 = vpop.f32.mrb[0].mxu0
        %v2279 = vpop.f32.mrb[0].mxu0
        %v2280 = vadd.f32 %v2024, %v2279
        %v2281 = vpop.f32.mrb[0].mxu0
        %2282 = vdwg.mxu0
        %v2283 = vadd.f32 %v599, %v2157
        %v2284 = vadd.f32 %v600, %v2160
        %v2285 = vadd.f32 %v601, %v2165
        %v2286 = vadd.f32 %v602, %v2168
        %v2287 = vadd.f32 %v603, %v2173
        %v2288 = vadd.f32 %v604, %v2176
        %v2289 = vadd.f32 %v605, %v2181
        %v2290 = vadd.f32 %v606, %v2184
        %v2291 = vadd.f32 %v607, %v2189
        %v2292 = vadd.f32 %v608, %v2192
        %v2293 = vadd.f32 %v609, %v2197
        %v2294 = vadd.f32 %v610, %v2200
        %v2295 = vadd.f32 %v611, %v2205
        %v2296 = vadd.f32 %v612, %v2208
        %v2297 = vadd.f32 %v613, %v2213
        %v2298 = vadd.f32 %v614, %v2216
        %v2299 = vadd.f32 %v615, %v2221
        %v2300 = vadd.f32 %v616, %v2224
        %v2301 = vadd.f32 %v617, %v2229
        %v2302 = vadd.f32 %v618, %v2232
        %v2303 = vadd.f32 %v619, %v2237
        %v2304 = vadd.f32 %v620, %v2240
        %v2305 = vadd.f32 %v621, %v2245
        %v2306 = vadd.f32 %v622, %v2248
        %v2307 = vadd.f32 %v623, %v2253
        %v2308 = vadd.f32 %v624, %v2256
        %v2309 = vadd.f32 %v625, %v2261
        %v2310 = vadd.f32 %v626, %v2264
        %v2311 = vadd.f32 %v627, %v2269
        %v2312 = vadd.f32 %v628, %v2272
        %v2313 = vadd.f32 %v629, %v2277
        %v2314 = vadd.f32 %v630, %v2280
        %v2315 = vld [vmem:[%s7] sm:$0x1]
        %v2316 = vld [vmem:[%s8] sm:$0x1]
        %2317 = vadd.xlane.f32.xlu0 %v2283
        %v2318 = vpop.xlane.xlu0 %2317
        %2319 = vadd.xlane.f32.xlu0 %v2284
        %v2320 = vpop.xlane.xlu0 %2319
        %2321 = vadd.xlane.f32.xlu0 %v2285
        %v2322 = vpop.xlane.xlu0 %2321
        %2323 = vadd.xlane.f32.xlu0 %v2286
        %v2324 = vpop.xlane.xlu0 %2323
        %2325 = vadd.xlane.f32.xlu0 %v2287
        %v2326 = vpop.xlane.xlu0 %2325
        %2327 = vadd.xlane.f32.xlu0 %v2288
        %v2328 = vpop.xlane.xlu0 %2327
        %2329 = vadd.xlane.f32.xlu0 %v2289
        %v2330 = vpop.xlane.xlu0 %2329
        %2331 = vadd.xlane.f32.xlu0 %v2290
        %v2332 = vpop.xlane.xlu0 %2331
        %2333 = vadd.xlane.f32.xlu0 %v2291
        %v2334 = vpop.xlane.xlu0 %2333
        %2335 = vadd.xlane.f32.xlu0 %v2292
        %v2336 = vpop.xlane.xlu0 %2335
        %2337 = vadd.xlane.f32.xlu0 %v2293
        %v2338 = vpop.xlane.xlu0 %2337
        %2339 = vadd.xlane.f32.xlu0 %v2294
        %v2340 = vpop.xlane.xlu0 %2339
        %2341 = vadd.xlane.f32.xlu0 %v2295
        %v2342 = vpop.xlane.xlu0 %2341
        %2343 = vadd.xlane.f32.xlu0 %v2296
        %v2344 = vpop.xlane.xlu0 %2343
        %2345 = vadd.xlane.f32.xlu0 %v2297
        %v2346 = vpop.xlane.xlu0 %2345
        %2347 = vadd.xlane.f32.xlu0 %v2298
        %v2348 = vpop.xlane.xlu0 %2347
        %2349 = vadd.xlane.f32.xlu0 %v2299
        %v2350 = vpop.xlane.xlu0 %2349
        %2351 = vadd.xlane.f32.xlu0 %v2300
        %v2352 = vpop.xlane.xlu0 %2351
        %2353 = vadd.xlane.f32.xlu0 %v2301
        %v2354 = vpop.xlane.xlu0 %2353
        %2355 = vadd.xlane.f32.xlu0 %v2302
        %v2356 = vpop.xlane.xlu0 %2355
        %2357 = vadd.xlane.f32.xlu0 %v2303
        %v2358 = vpop.xlane.xlu0 %2357
        %2359 = vadd.xlane.f32.xlu0 %v2304
        %v2360 = vpop.xlane.xlu0 %2359
        %2361 = vadd.xlane.f32.xlu0 %v2305
        %v2362 = vpop.xlane.xlu0 %2361
        %2363 = vadd.xlane.f32.xlu0 %v2306
        %v2364 = vpop.xlane.xlu0 %2363
        %2365 = vadd.xlane.f32.xlu0 %v2307
        %v2366 = vpop.xlane.xlu0 %2365
        %2367 = vadd.xlane.f32.xlu0 %v2308
        %v2368 = vpop.xlane.xlu0 %2367
        %2369 = vadd.xlane.f32.xlu0 %v2309
        %v2370 = vpop.xlane.xlu0 %2369
        %2371 = vadd.xlane.f32.xlu0 %v2310
        %v2372 = vpop.xlane.xlu0 %2371
        %2373 = vadd.xlane.f32.xlu0 %v2311
        %v2374 = vpop.xlane.xlu0 %2373
        %2375 = vadd.xlane.f32.xlu0 %v2312
        %v2376 = vpop.xlane.xlu0 %2375
        %2377 = vadd.xlane.f32.xlu0 %v2313
        %v2378 = vpop.xlane.xlu0 %2377
        %2379 = vadd.xlane.f32.xlu0 %v2314
        %v2380 = vpop.xlane.xlu0 %2379
        %v2381 = vmul.f32 %v2318, %v697
        %v2382 = vmul.f32 %v2320, %v697
        %v2383 = vmul.f32 %v2322, %v697
        %v2384 = vmul.f32 %v2324, %v697
        %v2385 = vmul.f32 %v2326, %v697
        %v2386 = vmul.f32 %v2328, %v697
        %v2387 = vmul.f32 %v2330, %v697
        %v2388 = vmul.f32 %v2332, %v697
        %v2389 = vmul.f32 %v2334, %v697
        %v2390 = vmul.f32 %v2336, %v697
        %v2391 = vmul.f32 %v2338, %v697
        %v2392 = vmul.f32 %v2340, %v697
        %v2393 = vmul.f32 %v2342, %v697
        %v2394 = vmul.f32 %v2344, %v697
        %v2395 = vmul.f32 %v2346, %v697
        %v2396 = vmul.f32 %v2348, %v697
        %v2397 = vmul.f32 %v2350, %v697
        %v2398 = vmul.f32 %v2352, %v697
        %v2399 = vmul.f32 %v2354, %v697
        %v2400 = vmul.f32 %v2356, %v697
        %v2401 = vmul.f32 %v2358, %v697
        %v2402 = vmul.f32 %v2360, %v697
        %v2403 = vmul.f32 %v2362, %v697
        %v2404 = vmul.f32 %v2364, %v697
        %v2405 = vmul.f32 %v2366, %v697
        %v2406 = vmul.f32 %v2368, %v697
        %v2407 = vmul.f32 %v2370, %v697
        %v2408 = vmul.f32 %v2372, %v697
        %v2409 = vmul.f32 %v2374, %v697
        %v2410 = vmul.f32 %v2376, %v697
        %v2411 = vmul.f32 %v2378, %v697
        %v2412 = vmul.f32 %v2380, %v697
        %v2413 = vsub.f32 %v2283, %v2381
        %v2414 = vsub.f32 %v2284, %v2382
        %v2415 = vsub.f32 %v2285, %v2383
        %v2416 = vsub.f32 %v2286, %v2384
        %v2417 = vsub.f32 %v2287, %v2385
        %v2418 = vsub.f32 %v2288, %v2386
        %v2419 = vsub.f32 %v2289, %v2387
        %v2420 = vsub.f32 %v2290, %v2388
        %v2421 = vsub.f32 %v2291, %v2389
        %v2422 = vsub.f32 %v2292, %v2390
        %v2423 = vsub.f32 %v2293, %v2391
        %v2424 = vsub.f32 %v2294, %v2392
        %v2425 = vsub.f32 %v2295, %v2393
        %v2426 = vsub.f32 %v2296, %v2394
        %v2427 = vsub.f32 %v2297, %v2395
        %v2428 = vsub.f32 %v2298, %v2396
        %v2429 = vsub.f32 %v2299, %v2397
        %v2430 = vsub.f32 %v2300, %v2398
        %v2431 = vsub.f32 %v2301, %v2399
        %v2432 = vsub.f32 %v2302, %v2400
        %v2433 = vsub.f32 %v2303, %v2401
        %v2434 = vsub.f32 %v2304, %v2402
        %v2435 = vsub.f32 %v2305, %v2403
        %v2436 = vsub.f32 %v2306, %v2404
        %v2437 = vsub.f32 %v2307, %v2405
        %v2438 = vsub.f32 %v2308, %v2406
        %v2439 = vsub.f32 %v2309, %v2407
        %v2440 = vsub.f32 %v2310, %v2408
        %v2441 = vsub.f32 %v2311, %v2409
        %v2442 = vsub.f32 %v2312, %v2410
        %v2443 = vsub.f32 %v2313, %v2411
        %v2444 = vsub.f32 %v2314, %v2412
        %v2445 = vmul.f32 %v2413, %v2413
        %v2446 = vmul.f32 %v2414, %v2414
        %v2447 = vmul.f32 %v2415, %v2415
        %v2448 = vmul.f32 %v2416, %v2416
        %v2449 = vmul.f32 %v2417, %v2417
        %v2450 = vmul.f32 %v2418, %v2418
        %v2451 = vmul.f32 %v2419, %v2419
        %v2452 = vmul.f32 %v2420, %v2420
        %v2453 = vmul.f32 %v2421, %v2421
        %v2454 = vmul.f32 %v2422, %v2422
        %v2455 = vmul.f32 %v2423, %v2423
        %v2456 = vmul.f32 %v2424, %v2424
        %v2457 = vmul.f32 %v2425, %v2425
        %v2458 = vmul.f32 %v2426, %v2426
        %v2459 = vmul.f32 %v2427, %v2427
        %v2460 = vmul.f32 %v2428, %v2428
        %v2461 = vmul.f32 %v2429, %v2429
        %v2462 = vmul.f32 %v2430, %v2430
        %v2463 = vmul.f32 %v2431, %v2431
        %v2464 = vmul.f32 %v2432, %v2432
        %v2465 = vmul.f32 %v2433, %v2433
        %v2466 = vmul.f32 %v2434, %v2434
        %v2467 = vmul.f32 %v2435, %v2435
        %v2468 = vmul.f32 %v2436, %v2436
        %v2469 = vmul.f32 %v2437, %v2437
        %v2470 = vmul.f32 %v2438, %v2438
        %v2471 = vmul.f32 %v2439, %v2439
        %v2472 = vmul.f32 %v2440, %v2440
        %v2473 = vmul.f32 %v2441, %v2441
        %v2474 = vmul.f32 %v2442, %v2442
        %v2475 = vmul.f32 %v2443, %v2443
        %v2476 = vmul.f32 %v2444, %v2444
        %2477 = vadd.xlane.f32.xlu0 %v2445
        %v2478 = vpop.xlane.xlu0 %2477
        %2479 = vadd.xlane.f32.xlu0 %v2446
        %v2480 = vpop.xlane.xlu0 %2479
        %2481 = vadd.xlane.f32.xlu0 %v2447
        %v2482 = vpop.xlane.xlu0 %2481
        %2483 = vadd.xlane.f32.xlu0 %v2448
        %v2484 = vpop.xlane.xlu0 %2483
        %2485 = vadd.xlane.f32.xlu0 %v2449
        %v2486 = vpop.xlane.xlu0 %2485
        %2487 = vadd.xlane.f32.xlu0 %v2450
        %v2488 = vpop.xlane.xlu0 %2487
        %2489 = vadd.xlane.f32.xlu0 %v2451
        %v2490 = vpop.xlane.xlu0 %2489
        %2491 = vadd.xlane.f32.xlu0 %v2452
        %v2492 = vpop.xlane.xlu0 %2491
        %2493 = vadd.xlane.f32.xlu0 %v2453
        %v2494 = vpop.xlane.xlu0 %2493
        %2495 = vadd.xlane.f32.xlu0 %v2454
        %v2496 = vpop.xlane.xlu0 %2495
        %2497 = vadd.xlane.f32.xlu0 %v2455
        %v2498 = vpop.xlane.xlu0 %2497
        %2499 = vadd.xlane.f32.xlu0 %v2456
        %v2500 = vpop.xlane.xlu0 %2499
        %2501 = vadd.xlane.f32.xlu0 %v2457
        %v2502 = vpop.xlane.xlu0 %2501
        %2503 = vadd.xlane.f32.xlu0 %v2458
        %v2504 = vpop.xlane.xlu0 %2503
        %2505 = vadd.xlane.f32.xlu0 %v2459
        %v2506 = vpop.xlane.xlu0 %2505
        %2507 = vadd.xlane.f32.xlu0 %v2460
        %v2508 = vpop.xlane.xlu0 %2507
        %2509 = vadd.xlane.f32.xlu0 %v2461
        %v2510 = vpop.xlane.xlu0 %2509
        %2511 = vadd.xlane.f32.xlu0 %v2462
        %v2512 = vpop.xlane.xlu0 %2511
        %2513 = vadd.xlane.f32.xlu0 %v2463
        %v2514 = vpop.xlane.xlu0 %2513
        %2515 = vadd.xlane.f32.xlu0 %v2464
        %v2516 = vpop.xlane.xlu0 %2515
        %2517 = vadd.xlane.f32.xlu0 %v2465
        %v2518 = vpop.xlane.xlu0 %2517
        %2519 = vadd.xlane.f32.xlu0 %v2466
        %v2520 = vpop.xlane.xlu0 %2519
        %2521 = vadd.xlane.f32.xlu0 %v2467
        %v2522 = vpop.xlane.xlu0 %2521
        %2523 = vadd.xlane.f32.xlu0 %v2468
        %v2524 = vpop.xlane.xlu0 %2523
        %2525 = vadd.xlane.f32.xlu0 %v2469
        %v2526 = vpop.xlane.xlu0 %2525
        %2527 = vadd.xlane.f32.xlu0 %v2470
        %v2528 = vpop.xlane.xlu0 %2527
        %2529 = vadd.xlane.f32.xlu0 %v2471
        %v2530 = vpop.xlane.xlu0 %2529
        %2531 = vadd.xlane.f32.xlu0 %v2472
        %v2532 = vpop.xlane.xlu0 %2531
        %2533 = vadd.xlane.f32.xlu0 %v2473
        %v2534 = vpop.xlane.xlu0 %2533
        %2535 = vadd.xlane.f32.xlu0 %v2474
        %v2536 = vpop.xlane.xlu0 %2535
        %2537 = vadd.xlane.f32.xlu0 %v2475
        %v2538 = vpop.xlane.xlu0 %2537
        %2539 = vadd.xlane.f32.xlu0 %v2476
        %v2540 = vpop.xlane.xlu0 %2539
        %v2541 = vmul.f32 %v2478, %v697
        %v2542 = vmul.f32 %v2480, %v697
        %v2543 = vmul.f32 %v2482, %v697
        %v2544 = vmul.f32 %v2484, %v697
        %v2545 = vmul.f32 %v2486, %v697
        %v2546 = vmul.f32 %v2488, %v697
        %v2547 = vmul.f32 %v2490, %v697
        %v2548 = vmul.f32 %v2492, %v697
        %v2549 = vmul.f32 %v2494, %v697
        %v2550 = vmul.f32 %v2496, %v697
        %v2551 = vmul.f32 %v2498, %v697
        %v2552 = vmul.f32 %v2500, %v697
        %v2553 = vmul.f32 %v2502, %v697
        %v2554 = vmul.f32 %v2504, %v697
        %v2555 = vmul.f32 %v2506, %v697
        %v2556 = vmul.f32 %v2508, %v697
        %v2557 = vmul.f32 %v2510, %v697
        %v2558 = vmul.f32 %v2512, %v697
        %v2559 = vmul.f32 %v2514, %v697
        %v2560 = vmul.f32 %v2516, %v697
        %v2561 = vmul.f32 %v2518, %v697
        %v2562 = vmul.f32 %v2520, %v697
        %v2563 = vmul.f32 %v2522, %v697
        %v2564 = vmul.f32 %v2524, %v697
        %v2565 = vmul.f32 %v2526, %v697
        %v2566 = vmul.f32 %v2528, %v697
        %v2567 = vmul.f32 %v2530, %v697
        %v2568 = vmul.f32 %v2532, %v697
        %v2569 = vmul.f32 %v2534, %v697
        %v2570 = vmul.f32 %v2536, %v697
        %v2571 = vmul.f32 %v2538, %v697
        %v2572 = vmul.f32 %v2540, %v697
        %v2573 = vadd.f32 %v2541, 1e-05
        %v2574 = vadd.f32 %v2542, 1e-05
        %v2575 = vadd.f32 %v2543, 1e-05
        %v2576 = vadd.f32 %v2544, 1e-05
        %v2577 = vadd.f32 %v2545, 1e-05
        %v2578 = vadd.f32 %v2546, 1e-05
        %v2579 = vadd.f32 %v2547, 1e-05
        %v2580 = vadd.f32 %v2548, 1e-05
        %v2581 = vadd.f32 %v2549, 1e-05
        %v2582 = vadd.f32 %v2550, 1e-05
        %v2583 = vadd.f32 %v2551, 1e-05
        %v2584 = vadd.f32 %v2552, 1e-05
        %v2585 = vadd.f32 %v2553, 1e-05
        %v2586 = vadd.f32 %v2554, 1e-05
        %v2587 = vadd.f32 %v2555, 1e-05
        %v2588 = vadd.f32 %v2556, 1e-05
        %v2589 = vadd.f32 %v2557, 1e-05
        %v2590 = vadd.f32 %v2558, 1e-05
        %v2591 = vadd.f32 %v2559, 1e-05
        %v2592 = vadd.f32 %v2560, 1e-05
        %v2593 = vadd.f32 %v2561, 1e-05
        %v2594 = vadd.f32 %v2562, 1e-05
        %v2595 = vadd.f32 %v2563, 1e-05
        %v2596 = vadd.f32 %v2564, 1e-05
        %v2597 = vadd.f32 %v2565, 1e-05
        %v2598 = vadd.f32 %v2566, 1e-05
        %v2599 = vadd.f32 %v2567, 1e-05
        %v2600 = vadd.f32 %v2568, 1e-05
        %v2601 = vadd.f32 %v2569, 1e-05
        %v2602 = vadd.f32 %v2570, 1e-05
        %v2603 = vadd.f32 %v2571, 1e-05
        %v2604 = vadd.f32 %v2572, 1e-05
        %v2605 = vrsqrt.pop %v2573
        %v2606 = vrsqrt.pop %v2574
        %v2607 = vrsqrt.pop %v2575
        %v2608 = vrsqrt.pop %v2576
        %v2609 = vrsqrt.pop %v2577
        %v2610 = vrsqrt.pop %v2578
        %v2611 = vrsqrt.pop %v2579
        %v2612 = vrsqrt.pop %v2580
        %v2613 = vrsqrt.pop %v2581
        %v2614 = vrsqrt.pop %v2582
        %v2615 = vrsqrt.pop %v2583
        %v2616 = vrsqrt.pop %v2584
        %v2617 = vrsqrt.pop %v2585
        %v2618 = vrsqrt.pop %v2586
        %v2619 = vrsqrt.pop %v2587
        %v2620 = vrsqrt.pop %v2588
        %v2621 = vrsqrt.pop %v2589
        %v2622 = vrsqrt.pop %v2590
        %v2623 = vrsqrt.pop %v2591
        %v2624 = vrsqrt.pop %v2592
        %v2625 = vrsqrt.pop %v2593
        %v2626 = vrsqrt.pop %v2594
        %v2627 = vrsqrt.pop %v2595
        %v2628 = vrsqrt.pop %v2596
        %v2629 = vrsqrt.pop %v2597
        %v2630 = vrsqrt.pop %v2598
        %v2631 = vrsqrt.pop %v2599
        %v2632 = vrsqrt.pop %v2600
        %v2633 = vrsqrt.pop %v2601
        %v2634 = vrsqrt.pop %v2602
        %v2635 = vrsqrt.pop %v2603
        %v2636 = vrsqrt.pop %v2604
        %v2637 = vmul.f32 %v2413, %v2605
        %v2638 = vmul.f32 %v2414, %v2606
        %v2639 = vmul.f32 %v2415, %v2607
        %v2640 = vmul.f32 %v2416, %v2608
        %v2641 = vmul.f32 %v2417, %v2609
        %v2642 = vmul.f32 %v2418, %v2610
        %v2643 = vmul.f32 %v2419, %v2611
        %v2644 = vmul.f32 %v2420, %v2612
        %v2645 = vmul.f32 %v2421, %v2613
        %v2646 = vmul.f32 %v2422, %v2614
        %v2647 = vmul.f32 %v2423, %v2615
        %v2648 = vmul.f32 %v2424, %v2616
        %v2649 = vmul.f32 %v2425, %v2617
        %v2650 = vmul.f32 %v2426, %v2618
        %v2651 = vmul.f32 %v2427, %v2619
        %v2652 = vmul.f32 %v2428, %v2620
        %v2653 = vmul.f32 %v2429, %v2621
        %v2654 = vmul.f32 %v2430, %v2622
        %v2655 = vmul.f32 %v2431, %v2623
        %v2656 = vmul.f32 %v2432, %v2624
        %v2657 = vmul.f32 %v2433, %v2625
        %v2658 = vmul.f32 %v2434, %v2626
        %v2659 = vmul.f32 %v2435, %v2627
        %v2660 = vmul.f32 %v2436, %v2628
        %v2661 = vmul.f32 %v2437, %v2629
        %v2662 = vmul.f32 %v2438, %v2630
        %v2663 = vmul.f32 %v2439, %v2631
        %v2664 = vmul.f32 %v2440, %v2632
        %v2665 = vmul.f32 %v2441, %v2633
        %v2666 = vmul.f32 %v2442, %v2634
        %v2667 = vmul.f32 %v2443, %v2635
        %v2668 = vmul.f32 %v2444, %v2636
        %v2670 = vlaneseq
        %v2671 = vshrl.u32 %v2670, 7
        %v2672 = vsub.s32 0, %v2671
        %v2673 = vrot.slane %v2315, %v2672
        %v2675 = vmul.f32 %v2637, %v2673
        %v2676 = vmul.f32 %v2638, %v2673
        %v2677 = vmul.f32 %v2639, %v2673
        %v2678 = vmul.f32 %v2640, %v2673
        %v2679 = vmul.f32 %v2641, %v2673
        %v2680 = vmul.f32 %v2642, %v2673
        %v2681 = vmul.f32 %v2643, %v2673
        %v2682 = vmul.f32 %v2644, %v2673
        %v2683 = vmul.f32 %v2645, %v2673
        %v2684 = vmul.f32 %v2646, %v2673
        %v2685 = vmul.f32 %v2647, %v2673
        %v2686 = vmul.f32 %v2648, %v2673
        %v2687 = vmul.f32 %v2649, %v2673
        %v2688 = vmul.f32 %v2650, %v2673
        %v2689 = vmul.f32 %v2651, %v2673
        %v2690 = vmul.f32 %v2652, %v2673
        %v2691 = vmul.f32 %v2653, %v2673
        %v2692 = vmul.f32 %v2654, %v2673
        %v2693 = vmul.f32 %v2655, %v2673
        %v2694 = vmul.f32 %v2656, %v2673
        %v2695 = vmul.f32 %v2657, %v2673
        %v2696 = vmul.f32 %v2658, %v2673
        %v2697 = vmul.f32 %v2659, %v2673
        %v2698 = vmul.f32 %v2660, %v2673
        %v2699 = vmul.f32 %v2661, %v2673
        %v2700 = vmul.f32 %v2662, %v2673
        %v2701 = vmul.f32 %v2663, %v2673
        %v2702 = vmul.f32 %v2664, %v2673
        %v2703 = vmul.f32 %v2665, %v2673
        %v2704 = vmul.f32 %v2666, %v2673
        %v2705 = vmul.f32 %v2667, %v2673
        %v2706 = vmul.f32 %v2668, %v2673
        %v2708 = vlaneseq
        %v2709 = vshrl.u32 %v2708, 7
        %v2710 = vsub.s32 0, %v2709
        %v2711 = vrot.slane %v2316, %v2710
        %v2713 = vadd.f32 %v2675, %v2711
        %v2714 = vadd.f32 %v2676, %v2711
        %v2715 = vadd.f32 %v2677, %v2711
        %v2716 = vadd.f32 %v2678, %v2711
        %v2717 = vadd.f32 %v2679, %v2711
        %v2718 = vadd.f32 %v2680, %v2711
        %v2719 = vadd.f32 %v2681, %v2711
        %v2720 = vadd.f32 %v2682, %v2711
        %v2721 = vadd.f32 %v2683, %v2711
        %v2722 = vadd.f32 %v2684, %v2711
        %v2723 = vadd.f32 %v2685, %v2711
        %v2724 = vadd.f32 %v2686, %v2711
        %v2725 = vadd.f32 %v2687, %v2711
        %v2726 = vadd.f32 %v2688, %v2711
        %v2727 = vadd.f32 %v2689, %v2711
        %v2728 = vadd.f32 %v2690, %v2711
        %v2729 = vadd.f32 %v2691, %v2711
        %v2730 = vadd.f32 %v2692, %v2711
        %v2731 = vadd.f32 %v2693, %v2711
        %v2732 = vadd.f32 %v2694, %v2711
        %v2733 = vadd.f32 %v2695, %v2711
        %v2734 = vadd.f32 %v2696, %v2711
        %v2735 = vadd.f32 %v2697, %v2711
        %v2736 = vadd.f32 %v2698, %v2711
        %v2737 = vadd.f32 %v2699, %v2711
        %v2738 = vadd.f32 %v2700, %v2711
        %v2739 = vadd.f32 %v2701, %v2711
        %v2740 = vadd.f32 %v2702, %v2711
        %v2741 = vadd.f32 %v2703, %v2711
        %v2742 = vadd.f32 %v2704, %v2711
        %v2743 = vadd.f32 %v2705, %v2711
        %v2744 = vadd.f32 %v2706, %v2711
        %2745 = vst [vmem:[#allocation2] sm:$0xff] 0.0
        %2746 = vst [vmem:[#allocation2 + $0x8] sm:$0xff] 0.0
        %2747 = vst [vmem:[#allocation2 + $0x10] sm:$0xff] 0.0
        %2748 = vst [vmem:[#allocation2 + $0x18] sm:$0xff] 0.0
        %2749 = vst [vmem:[#allocation2 + $0x20] sm:$0xff] 0.0
        %2750 = vst [vmem:[#allocation2 + $0x28] sm:$0xff] 0.0
        %2751 = vst [vmem:[#allocation2 + $0x30] sm:$0xff] 0.0
        %2752 = vst [vmem:[#allocation2 + $0x38] sm:$0xff] 0.0
        %2753 = vst [vmem:[#allocation2 + $0x40] sm:$0xff] 0.0
        %2754 = vst [vmem:[#allocation2 + $0x48] sm:$0xff] 0.0
        %2755 = vst [vmem:[#allocation2 + $0x50] sm:$0xff] 0.0
        %2756 = vst [vmem:[#allocation2 + $0x58] sm:$0xff] 0.0
        %2757 = vst [vmem:[#allocation2 + $0x60] sm:$0xff] 0.0
        %2758 = vst [vmem:[#allocation2 + $0x68] sm:$0xff] 0.0
        %2759 = vst [vmem:[#allocation2 + $0x70] sm:$0xff] 0.0
        %2760 = vst [vmem:[#allocation2 + $0x78] sm:$0xff] 0.0
        %2761 = vst [vmem:[#allocation2 + $0x80] sm:$0xff] 0.0
        %2762 = vst [vmem:[#allocation2 + $0x88] sm:$0xff] 0.0
        %2763 = vst [vmem:[#allocation2 + $0x90] sm:$0xff] 0.0
        %2764 = vst [vmem:[#allocation2 + $0x98] sm:$0xff] 0.0
        %2765 = vst [vmem:[#allocation2 + $0xa0] sm:$0xff] 0.0
        %2766 = vst [vmem:[#allocation2 + $0xa8] sm:$0xff] 0.0
        %2767 = vst [vmem:[#allocation2 + $0xb0] sm:$0xff] 0.0
        %2768 = vst [vmem:[#allocation2 + $0xb8] sm:$0xff] 0.0
        %2769 = vst [vmem:[#allocation2 + $0xc0] sm:$0xff] 0.0
        %2770 = vst [vmem:[#allocation2 + $0xc8] sm:$0xff] 0.0
        %2771 = vst [vmem:[#allocation2 + $0xd0] sm:$0xff] 0.0
        %2772 = vst [vmem:[#allocation2 + $0xd8] sm:$0xff] 0.0
        %2773 = vst [vmem:[#allocation2 + $0xe0] sm:$0xff] 0.0
        %2774 = vst [vmem:[#allocation2 + $0xe8] sm:$0xff] 0.0
        %2775 = vst [vmem:[#allocation2 + $0xf0] sm:$0xff] 0.0
        %2776 = vst [vmem:[#allocation2 + $0xf8] sm:$0xff] 0.0
        %2777 = vst [vmem:[#allocation2 + $0x100] sm:$0xff] 0.0
        %2778 = vst [vmem:[#allocation2 + $0x108] sm:$0xff] 0.0
        %2779 = vst [vmem:[#allocation2 + $0x110] sm:$0xff] 0.0
        %2780 = vst [vmem:[#allocation2 + $0x118] sm:$0xff] 0.0
        %2781 = vst [vmem:[#allocation2 + $0x120] sm:$0xff] 0.0
        %2782 = vst [vmem:[#allocation2 + $0x128] sm:$0xff] 0.0
        %2783 = vst [vmem:[#allocation2 + $0x130] sm:$0xff] 0.0
        %2784 = vst [vmem:[#allocation2 + $0x138] sm:$0xff] 0.0
        %2785 = vst [vmem:[#allocation2 + $0x140] sm:$0xff] 0.0
        %2786 = vst [vmem:[#allocation2 + $0x148] sm:$0xff] 0.0
        %2787 = vst [vmem:[#allocation2 + $0x150] sm:$0xff] 0.0
        %2788 = vst [vmem:[#allocation2 + $0x158] sm:$0xff] 0.0
        %2789 = vst [vmem:[#allocation2 + $0x160] sm:$0xff] 0.0
        %2790 = vst [vmem:[#allocation2 + $0x168] sm:$0xff] 0.0
        %2791 = vst [vmem:[#allocation2 + $0x170] sm:$0xff] 0.0
        %2792 = vst [vmem:[#allocation2 + $0x178] sm:$0xff] 0.0
        %2793 = vst [vmem:[#allocation2 + $0x180] sm:$0xff] 0.0
        %2794 = vst [vmem:[#allocation2 + $0x188] sm:$0xff] 0.0
        %2795 = vst [vmem:[#allocation2 + $0x190] sm:$0xff] 0.0
        %2796 = vst [vmem:[#allocation2 + $0x198] sm:$0xff] 0.0
        %2797 = vst [vmem:[#allocation2 + $0x1a0] sm:$0xff] 0.0
        %2798 = vst [vmem:[#allocation2 + $0x1a8] sm:$0xff] 0.0
        %s2799 = scalar_lea.vmem [#allocation2], 24
        %2800 = vst [vmem:[%s2799 + $0x1] sm:$0xff] %v2713
        %2801 = vst [vmem:[%s2799 + $0x9] sm:$0xff] %v2714
        %2802 = vst [vmem:[%s2799 + $0x19] sm:$0xff] %v2715
        %2803 = vst [vmem:[%s2799 + $0x21] sm:$0xff] %v2716
        %2804 = vst [vmem:[%s2799 + $0x31] sm:$0xff] %v2717
        %2805 = vst [vmem:[%s2799 + $0x39] sm:$0xff] %v2718
        %2806 = vst [vmem:[%s2799 + $0x49] sm:$0xff] %v2719
        %2807 = vst [vmem:[%s2799 + $0x51] sm:$0xff] %v2720
        %2808 = vst [vmem:[%s2799 + $0x61] sm:$0xff] %v2721
        %2809 = vst [vmem:[%s2799 + $0x69] sm:$0xff] %v2722
        %2810 = vst [vmem:[%s2799 + $0x79] sm:$0xff] %v2723
        %2811 = vst [vmem:[%s2799 + $0x81] sm:$0xff] %v2724
        %2812 = vst [vmem:[%s2799 + $0x91] sm:$0xff] %v2725
        %2813 = vst [vmem:[%s2799 + $0x99] sm:$0xff] %v2726
        %2814 = vst [vmem:[%s2799 + $0xa9] sm:$0xff] %v2727
        %2815 = vst [vmem:[%s2799 + $0xb1] sm:$0xff] %v2728
        %2816 = vst [vmem:[%s2799 + $0xc1] sm:$0xff] %v2729
        %2817 = vst [vmem:[%s2799 + $0xc9] sm:$0xff] %v2730
        %2818 = vst [vmem:[%s2799 + $0xd9] sm:$0xff] %v2731
        %2819 = vst [vmem:[%s2799 + $0xe1] sm:$0xff] %v2732
        %2820 = vst [vmem:[%s2799 + $0xf1] sm:$0xff] %v2733
        %2821 = vst [vmem:[%s2799 + $0xf9] sm:$0xff] %v2734
        %2822 = vst [vmem:[%s2799 + $0x109] sm:$0xff] %v2735
        %2823 = vst [vmem:[%s2799 + $0x111] sm:$0xff] %v2736
        %2824 = vst [vmem:[%s2799 + $0x121] sm:$0xff] %v2737
        %2825 = vst [vmem:[%s2799 + $0x129] sm:$0xff] %v2738
        %2826 = vst [vmem:[%s2799 + $0x139] sm:$0xff] %v2739
        %2827 = vst [vmem:[%s2799 + $0x141] sm:$0xff] %v2740
        %2828 = vst [vmem:[%s2799 + $0x151] sm:$0xff] %v2741
        %2829 = vst [vmem:[%s2799 + $0x159] sm:$0xff] %v2742
        %2830 = vst [vmem:[%s2799 + $0x169] sm:$0xff] %v2743
        %2831 = vst [vmem:[%s2799 + $0x171] sm:$0xff] %v2744
        %v2832 = vld [vmem:[%s9] sm:$0x7]
        %v2833 = vld [vmem:[%s9 + $0x4] sm:$0x7]
        %v2834 = vld [vmem:[%s9 + $0x8] sm:$0x7]
        %v2835 = vld [vmem:[#allocation2] sm:$0xff]
        %v2836 = vld [vmem:[#allocation2 + $0x8] sm:$0xff]
        %v2837 = vld [vmem:[#allocation2 + $0x18] sm:$0xff]
        %v2838 = vld [vmem:[#allocation2 + $0x20] sm:$0xff]
        %v2839 = vld [vmem:[#allocation2 + $0x30] sm:$0xff]
        %v2840 = vld [vmem:[#allocation2 + $0x38] sm:$0xff]
        %v2841 = vld [vmem:[#allocation2 + $0x48] sm:$0xff]
        %v2842 = vld [vmem:[#allocation2 + $0x50] sm:$0xff]
        %v2843 = vld [vmem:[#allocation2 + $0x60] sm:$0xff]
        %v2844 = vld [vmem:[#allocation2 + $0x68] sm:$0xff]
        %v2845 = vld [vmem:[#allocation2 + $0x78] sm:$0xff]
        %v2846 = vld [vmem:[#allocation2 + $0x80] sm:$0xff]
        %v2847 = vld [vmem:[#allocation2 + $0x90] sm:$0xff]
        %v2848 = vld [vmem:[#allocation2 + $0x98] sm:$0xff]
        %v2849 = vld [vmem:[#allocation2 + $0xa8] sm:$0xff]
        %v2850 = vld [vmem:[#allocation2 + $0xb0] sm:$0xff]
        %v2851 = vld [vmem:[#allocation2 + $0xc0] sm:$0xff]
        %v2852 = vld [vmem:[#allocation2 + $0xc8] sm:$0xff]
        %v2853 = vld [vmem:[#allocation2 + $0xd8] sm:$0xff]
        %v2854 = vld [vmem:[#allocation2 + $0xe0] sm:$0xff]
        %v2855 = vld [vmem:[#allocation2 + $0xf0] sm:$0xff]
        %v2856 = vld [vmem:[#allocation2 + $0xf8] sm:$0xff]
        %v2857 = vld [vmem:[#allocation2 + $0x108] sm:$0xff]
        %v2858 = vld [vmem:[#allocation2 + $0x110] sm:$0xff]
        %v2859 = vld [vmem:[#allocation2 + $0x120] sm:$0xff]
        %v2860 = vld [vmem:[#allocation2 + $0x128] sm:$0xff]
        %v2861 = vld [vmem:[#allocation2 + $0x138] sm:$0xff]
        %v2862 = vld [vmem:[#allocation2 + $0x140] sm:$0xff]
        %v2863 = vld [vmem:[#allocation2 + $0x150] sm:$0xff]
        %v2864 = vld [vmem:[#allocation2 + $0x158] sm:$0xff]
        %v2865 = vld [vmem:[#allocation2 + $0x168] sm:$0xff]
        %v2866 = vld [vmem:[#allocation2 + $0x170] sm:$0xff]
        %v2867 = vlaneseq
        %v2868 = vshrl.u32 %v2867, 7
        %v2869 = vsub.s32 0, %v2868
        %v2870 = vrot.slane %v2832, %v2869
        %v2871 = vmul.f32 %v2835, %v2870
        %v2872 = vmul.f32 %v2836, %v2870
        %v2873 = vmul.f32 %v2837, %v2870
        %v2874 = vmul.f32 %v2838, %v2870
        %v2875 = vmul.f32 %v2839, %v2870
        %v2876 = vmul.f32 %v2840, %v2870
        %v2877 = vmul.f32 %v2841, %v2870
        %v2878 = vmul.f32 %v2842, %v2870
        %v2879 = vmul.f32 %v2843, %v2870
        %v2880 = vmul.f32 %v2844, %v2870
        %v2881 = vmul.f32 %v2845, %v2870
        %v2882 = vmul.f32 %v2846, %v2870
        %v2883 = vmul.f32 %v2847, %v2870
        %v2884 = vmul.f32 %v2848, %v2870
        %v2885 = vmul.f32 %v2849, %v2870
        %v2886 = vmul.f32 %v2850, %v2870
        %v2887 = vmul.f32 %v2851, %v2870
        %v2888 = vmul.f32 %v2852, %v2870
        %v2889 = vmul.f32 %v2853, %v2870
        %v2890 = vmul.f32 %v2854, %v2870
        %v2891 = vmul.f32 %v2855, %v2870
        %v2892 = vmul.f32 %v2856, %v2870
        %v2893 = vmul.f32 %v2857, %v2870
        %v2894 = vmul.f32 %v2858, %v2870
        %v2895 = vmul.f32 %v2859, %v2870
        %v2896 = vmul.f32 %v2860, %v2870
        %v2897 = vmul.f32 %v2861, %v2870
        %v2898 = vmul.f32 %v2862, %v2870
        %v2899 = vmul.f32 %v2863, %v2870
        %v2900 = vmul.f32 %v2864, %v2870
        %v2901 = vmul.f32 %v2865, %v2870
        %v2902 = vmul.f32 %v2866, %v2870
        %v2903 = vadd.f32 %v2871, 0.0
        %v2904 = vadd.f32 %v2872, 0.0
        %v2905 = vadd.f32 %v2873, 0.0
        %v2906 = vadd.f32 %v2874, 0.0
        %v2907 = vadd.f32 %v2875, 0.0
        %v2908 = vadd.f32 %v2876, 0.0
        %v2909 = vadd.f32 %v2877, 0.0
        %v2910 = vadd.f32 %v2878, 0.0
        %v2911 = vadd.f32 %v2879, 0.0
        %v2912 = vadd.f32 %v2880, 0.0
        %v2913 = vadd.f32 %v2881, 0.0
        %v2914 = vadd.f32 %v2882, 0.0
        %v2915 = vadd.f32 %v2883, 0.0
        %v2916 = vadd.f32 %v2884, 0.0
        %v2917 = vadd.f32 %v2885, 0.0
        %v2918 = vadd.f32 %v2886, 0.0
        %v2919 = vadd.f32 %v2887, 0.0
        %v2920 = vadd.f32 %v2888, 0.0
        %v2921 = vadd.f32 %v2889, 0.0
        %v2922 = vadd.f32 %v2890, 0.0
        %v2923 = vadd.f32 %v2891, 0.0
        %v2924 = vadd.f32 %v2892, 0.0
        %v2925 = vadd.f32 %v2893, 0.0
        %v2926 = vadd.f32 %v2894, 0.0
        %v2927 = vadd.f32 %v2895, 0.0
        %v2928 = vadd.f32 %v2896, 0.0
        %v2929 = vadd.f32 %v2897, 0.0
        %v2930 = vadd.f32 %v2898, 0.0
        %v2931 = vadd.f32 %v2899, 0.0
        %v2932 = vadd.f32 %v2900, 0.0
        %v2933 = vadd.f32 %v2901, 0.0
        %v2934 = vadd.f32 %v2902, 0.0
        %v2935 = vld [vmem:[#allocation2 + $0x1] sm:$0xff]
        %v2936 = vld [vmem:[#allocation2 + $0x9] sm:$0xff]
        %v2937 = vld [vmem:[#allocation2 + $0x19] sm:$0xff]
        %v2938 = vld [vmem:[#allocation2 + $0x21] sm:$0xff]
        %v2939 = vld [vmem:[#allocation2 + $0x31] sm:$0xff]
        %v2940 = vld [vmem:[#allocation2 + $0x39] sm:$0xff]
        %v2941 = vld [vmem:[#allocation2 + $0x49] sm:$0xff]
        %v2942 = vld [vmem:[#allocation2 + $0x51] sm:$0xff]
        %v2943 = vld [vmem:[#allocation2 + $0x61] sm:$0xff]
        %v2944 = vld [vmem:[#allocation2 + $0x69] sm:$0xff]
        %v2945 = vld [vmem:[#allocation2 + $0x79] sm:$0xff]
        %v2946 = vld [vmem:[#allocation2 + $0x81] sm:$0xff]
        %v2947 = vld [vmem:[#allocation2 + $0x91] sm:$0xff]
        %v2948 = vld [vmem:[#allocation2 + $0x99] sm:$0xff]
        %v2949 = vld [vmem:[#allocation2 + $0xa9] sm:$0xff]
        %v2950 = vld [vmem:[#allocation2 + $0xb1] sm:$0xff]
        %v2951 = vld [vmem:[#allocation2 + $0xc1] sm:$0xff]
        %v2952 = vld [vmem:[#allocation2 + $0xc9] sm:$0xff]
        %v2953 = vld [vmem:[#allocation2 + $0xd9] sm:$0xff]
        %v2954 = vld [vmem:[#allocation2 + $0xe1] sm:$0xff]
        %v2955 = vld [vmem:[#allocation2 + $0xf1] sm:$0xff]
        %v2956 = vld [vmem:[#allocation2 + $0xf9] sm:$0xff]
        %v2957 = vld [vmem:[#allocation2 + $0x109] sm:$0xff]
        %v2958 = vld [vmem:[#allocation2 + $0x111] sm:$0xff]
        %v2959 = vld [vmem:[#allocation2 + $0x121] sm:$0xff]
        %v2960 = vld [vmem:[#allocation2 + $0x129] sm:$0xff]
        %v2961 = vld [vmem:[#allocation2 + $0x139] sm:$0xff]
        %v2962 = vld [vmem:[#allocation2 + $0x141] sm:$0xff]
        %v2963 = vld [vmem:[#allocation2 + $0x151] sm:$0xff]
        %v2964 = vld [vmem:[#allocation2 + $0x159] sm:$0xff]
        %v2965 = vld [vmem:[#allocation2 + $0x169] sm:$0xff]
        %v2966 = vld [vmem:[#allocation2 + $0x171] sm:$0xff]
        %v2967 = vlaneseq
        %v2968 = vshrl.u32 %v2967, 7
        %v2969 = vsub.s32 1, %v2968
        %v2970 = vrot.slane %v2832, %v2969
        %v2971 = vmul.f32 %v2935, %v2970
        %v2972 = vmul.f32 %v2936, %v2970
        %v2973 = vmul.f32 %v2937, %v2970
        %v2974 = vmul.f32 %v2938, %v2970
        %v2975 = vmul.f32 %v2939, %v2970
        %v2976 = vmul.f32 %v2940, %v2970
        %v2977 = vmul.f32 %v2941, %v2970
        %v2978 = vmul.f32 %v2942, %v2970
        %v2979 = vmul.f32 %v2943, %v2970
        %v2980 = vmul.f32 %v2944, %v2970
        %v2981 = vmul.f32 %v2945, %v2970
        %v2982 = vmul.f32 %v2946, %v2970
        %v2983 = vmul.f32 %v2947, %v2970
        %v2984 = vmul.f32 %v2948, %v2970
        %v2985 = vmul.f32 %v2949, %v2970
        %v2986 = vmul.f32 %v2950, %v2970
        %v2987 = vmul.f32 %v2951, %v2970
        %v2988 = vmul.f32 %v2952, %v2970
        %v2989 = vmul.f32 %v2953, %v2970
        %v2990 = vmul.f32 %v2954, %v2970
        %v2991 = vmul.f32 %v2955, %v2970
        %v2992 = vmul.f32 %v2956, %v2970
        %v2993 = vmul.f32 %v2957, %v2970
        %v2994 = vmul.f32 %v2958, %v2970
        %v2995 = vmul.f32 %v2959, %v2970
        %v2996 = vmul.f32 %v2960, %v2970
        %v2997 = vmul.f32 %v2961, %v2970
        %v2998 = vmul.f32 %v2962, %v2970
        %v2999 = vmul.f32 %v2963, %v2970
        %v3000 = vmul.f32 %v2964, %v2970
        %v3001 = vmul.f32 %v2965, %v2970
        %v3002 = vmul.f32 %v2966, %v2970
        %v3003 = vadd.f32 %v2903, %v2971
        %v3004 = vadd.f32 %v2904, %v2972
        %v3005 = vadd.f32 %v2905, %v2973
        %v3006 = vadd.f32 %v2906, %v2974
        %v3007 = vadd.f32 %v2907, %v2975
        %v3008 = vadd.f32 %v2908, %v2976
        %v3009 = vadd.f32 %v2909, %v2977
        %v3010 = vadd.f32 %v2910, %v2978
        %v3011 = vadd.f32 %v2911, %v2979
        %v3012 = vadd.f32 %v2912, %v2980
        %v3013 = vadd.f32 %v2913, %v2981
        %v3014 = vadd.f32 %v2914, %v2982
        %v3015 = vadd.f32 %v2915, %v2983
        %v3016 = vadd.f32 %v2916, %v2984
        %v3017 = vadd.f32 %v2917, %v2985
        %v3018 = vadd.f32 %v2918, %v2986
        %v3019 = vadd.f32 %v2919, %v2987
        %v3020 = vadd.f32 %v2920, %v2988
        %v3021 = vadd.f32 %v2921, %v2989
        %v3022 = vadd.f32 %v2922, %v2990
        %v3023 = vadd.f32 %v2923, %v2991
        %v3024 = vadd.f32 %v2924, %v2992
        %v3025 = vadd.f32 %v2925, %v2993
        %v3026 = vadd.f32 %v2926, %v2994
        %v3027 = vadd.f32 %v2927, %v2995
        %v3028 = vadd.f32 %v2928, %v2996
        %v3029 = vadd.f32 %v2929, %v2997
        %v3030 = vadd.f32 %v2930, %v2998
        %v3031 = vadd.f32 %v2931, %v2999
        %v3032 = vadd.f32 %v2932, %v3000
        %v3033 = vadd.f32 %v2933, %v3001
        %v3034 = vadd.f32 %v2934, %v3002
        %v3035 = vld [vmem:[#allocation2 + $0x2] sm:$0xff]
        %v3036 = vld [vmem:[#allocation2 + $0xa] sm:$0xff]
        %v3037 = vld [vmem:[#allocation2 + $0x1a] sm:$0xff]
        %v3038 = vld [vmem:[#allocation2 + $0x22] sm:$0xff]
        %v3039 = vld [vmem:[#allocation2 + $0x32] sm:$0xff]
        %v3040 = vld [vmem:[#allocation2 + $0x3a] sm:$0xff]
        %v3041 = vld [vmem:[#allocation2 + $0x4a] sm:$0xff]
        %v3042 = vld [vmem:[#allocation2 + $0x52] sm:$0xff]
        %v3043 = vld [vmem:[#allocation2 + $0x62] sm:$0xff]
        %v3044 = vld [vmem:[#allocation2 + $0x6a] sm:$0xff]
        %v3045 = vld [vmem:[#allocation2 + $0x7a] sm:$0xff]
        %v3046 = vld [vmem:[#allocation2 + $0x82] sm:$0xff]
        %v3047 = vld [vmem:[#allocation2 + $0x92] sm:$0xff]
        %v3048 = vld [vmem:[#allocation2 + $0x9a] sm:$0xff]
        %v3049 = vld [vmem:[#allocation2 + $0xaa] sm:$0xff]
        %v3050 = vld [vmem:[#allocation2 + $0xb2] sm:$0xff]
        %v3051 = vld [vmem:[#allocation2 + $0xc2] sm:$0xff]
        %v3052 = vld [vmem:[#allocation2 + $0xca] sm:$0xff]
        %v3053 = vld [vmem:[#allocation2 + $0xda] sm:$0xff]
        %v3054 = vld [vmem:[#allocation2 + $0xe2] sm:$0xff]
        %v3055 = vld [vmem:[#allocation2 + $0xf2] sm:$0xff]
        %v3056 = vld [vmem:[#allocation2 + $0xfa] sm:$0xff]
        %v3057 = vld [vmem:[#allocation2 + $0x10a] sm:$0xff]
        %v3058 = vld [vmem:[#allocation2 + $0x112] sm:$0xff]
        %v3059 = vld [vmem:[#allocation2 + $0x122] sm:$0xff]
        %v3060 = vld [vmem:[#allocation2 + $0x12a] sm:$0xff]
        %v3061 = vld [vmem:[#allocation2 + $0x13a] sm:$0xff]
        %v3062 = vld [vmem:[#allocation2 + $0x142] sm:$0xff]
        %v3063 = vld [vmem:[#allocation2 + $0x152] sm:$0xff]
        %v3064 = vld [vmem:[#allocation2 + $0x15a] sm:$0xff]
        %v3065 = vld [vmem:[#allocation2 + $0x16a] sm:$0xff]
        %v3066 = vld [vmem:[#allocation2 + $0x172] sm:$0xff]
        %v3067 = vlaneseq
        %v3068 = vshrl.u32 %v3067, 7
        %v3069 = vsub.s32 2, %v3068
        %v3070 = vrot.slane %v2832, %v3069
        %v3071 = vmul.f32 %v3035, %v3070
        %v3072 = vmul.f32 %v3036, %v3070
        %v3073 = vmul.f32 %v3037, %v3070
        %v3074 = vmul.f32 %v3038, %v3070
        %v3075 = vmul.f32 %v3039, %v3070
        %v3076 = vmul.f32 %v3040, %v3070
        %v3077 = vmul.f32 %v3041, %v3070
        %v3078 = vmul.f32 %v3042, %v3070
        %v3079 = vmul.f32 %v3043, %v3070
        %v3080 = vmul.f32 %v3044, %v3070
        %v3081 = vmul.f32 %v3045, %v3070
        %v3082 = vmul.f32 %v3046, %v3070
        %v3083 = vmul.f32 %v3047, %v3070
        %v3084 = vmul.f32 %v3048, %v3070
        %v3085 = vmul.f32 %v3049, %v3070
        %v3086 = vmul.f32 %v3050, %v3070
        %v3087 = vmul.f32 %v3051, %v3070
        %v3088 = vmul.f32 %v3052, %v3070
        %v3089 = vmul.f32 %v3053, %v3070
        %v3090 = vmul.f32 %v3054, %v3070
        %v3091 = vmul.f32 %v3055, %v3070
        %v3092 = vmul.f32 %v3056, %v3070
        %v3093 = vmul.f32 %v3057, %v3070
        %v3094 = vmul.f32 %v3058, %v3070
        %v3095 = vmul.f32 %v3059, %v3070
        %v3096 = vmul.f32 %v3060, %v3070
        %v3097 = vmul.f32 %v3061, %v3070
        %v3098 = vmul.f32 %v3062, %v3070
        %v3099 = vmul.f32 %v3063, %v3070
        %v3100 = vmul.f32 %v3064, %v3070
        %v3101 = vmul.f32 %v3065, %v3070
        %v3102 = vmul.f32 %v3066, %v3070
        %v3103 = vadd.f32 %v3003, %v3071
        %v3104 = vadd.f32 %v3004, %v3072
        %v3105 = vadd.f32 %v3005, %v3073
        %v3106 = vadd.f32 %v3006, %v3074
        %v3107 = vadd.f32 %v3007, %v3075
        %v3108 = vadd.f32 %v3008, %v3076
        %v3109 = vadd.f32 %v3009, %v3077
        %v3110 = vadd.f32 %v3010, %v3078
        %v3111 = vadd.f32 %v3011, %v3079
        %v3112 = vadd.f32 %v3012, %v3080
        %v3113 = vadd.f32 %v3013, %v3081
        %v3114 = vadd.f32 %v3014, %v3082
        %v3115 = vadd.f32 %v3015, %v3083
        %v3116 = vadd.f32 %v3016, %v3084
        %v3117 = vadd.f32 %v3017, %v3085
        %v3118 = vadd.f32 %v3018, %v3086
        %v3119 = vadd.f32 %v3019, %v3087
        %v3120 = vadd.f32 %v3020, %v3088
        %v3121 = vadd.f32 %v3021, %v3089
        %v3122 = vadd.f32 %v3022, %v3090
        %v3123 = vadd.f32 %v3023, %v3091
        %v3124 = vadd.f32 %v3024, %v3092
        %v3125 = vadd.f32 %v3025, %v3093
        %v3126 = vadd.f32 %v3026, %v3094
        %v3127 = vadd.f32 %v3027, %v3095
        %v3128 = vadd.f32 %v3028, %v3096
        %v3129 = vadd.f32 %v3029, %v3097
        %v3130 = vadd.f32 %v3030, %v3098
        %v3131 = vadd.f32 %v3031, %v3099
        %v3132 = vadd.f32 %v3032, %v3100
        %v3133 = vadd.f32 %v3033, %v3101
        %v3134 = vadd.f32 %v3034, %v3102
        %v3135 = vld [vmem:[%s2799] sm:$0xff]
        %v3136 = vld [vmem:[%s2799 + $0x8] sm:$0xff]
        %v3137 = vld [vmem:[%s2799 + $0x18] sm:$0xff]
        %v3138 = vld [vmem:[%s2799 + $0x20] sm:$0xff]
        %v3139 = vld [vmem:[%s2799 + $0x30] sm:$0xff]
        %v3140 = vld [vmem:[%s2799 + $0x38] sm:$0xff]
        %v3141 = vld [vmem:[%s2799 + $0x48] sm:$0xff]
        %v3142 = vld [vmem:[%s2799 + $0x50] sm:$0xff]
        %v3143 = vld [vmem:[%s2799 + $0x60] sm:$0xff]
        %v3144 = vld [vmem:[%s2799 + $0x68] sm:$0xff]
        %v3145 = vld [vmem:[%s2799 + $0x78] sm:$0xff]
        %v3146 = vld [vmem:[%s2799 + $0x80] sm:$0xff]
        %v3147 = vld [vmem:[%s2799 + $0x90] sm:$0xff]
        %v3148 = vld [vmem:[%s2799 + $0x98] sm:$0xff]
        %v3149 = vld [vmem:[%s2799 + $0xa8] sm:$0xff]
        %v3150 = vld [vmem:[%s2799 + $0xb0] sm:$0xff]
        %v3151 = vld [vmem:[%s2799 + $0xc0] sm:$0xff]
        %v3152 = vld [vmem:[%s2799 + $0xc8] sm:$0xff]
        %v3153 = vld [vmem:[%s2799 + $0xd8] sm:$0xff]
        %v3154 = vld [vmem:[%s2799 + $0xe0] sm:$0xff]
        %v3155 = vld [vmem:[%s2799 + $0xf0] sm:$0xff]
        %v3156 = vld [vmem:[%s2799 + $0xf8] sm:$0xff]
        %v3157 = vld [vmem:[%s2799 + $0x108] sm:$0xff]
        %v3158 = vld [vmem:[%s2799 + $0x110] sm:$0xff]
        %v3159 = vld [vmem:[%s2799 + $0x120] sm:$0xff]
        %v3160 = vld [vmem:[%s2799 + $0x128] sm:$0xff]
        %v3161 = vld [vmem:[%s2799 + $0x138] sm:$0xff]
        %v3162 = vld [vmem:[%s2799 + $0x140] sm:$0xff]
        %v3163 = vld [vmem:[%s2799 + $0x150] sm:$0xff]
        %v3164 = vld [vmem:[%s2799 + $0x158] sm:$0xff]
        %v3165 = vld [vmem:[%s2799 + $0x168] sm:$0xff]
        %v3166 = vld [vmem:[%s2799 + $0x170] sm:$0xff]
        %v3167 = vlaneseq
        %v3168 = vshrl.u32 %v3167, 7
        %v3169 = vsub.s32 0, %v3168
        %v3170 = vrot.slane %v2833, %v3169
        %v3171 = vmul.f32 %v3135, %v3170
        %v3172 = vmul.f32 %v3136, %v3170
        %v3173 = vmul.f32 %v3137, %v3170
        %v3174 = vmul.f32 %v3138, %v3170
        %v3175 = vmul.f32 %v3139, %v3170
        %v3176 = vmul.f32 %v3140, %v3170
        %v3177 = vmul.f32 %v3141, %v3170
        %v3178 = vmul.f32 %v3142, %v3170
        %v3179 = vmul.f32 %v3143, %v3170
        %v3180 = vmul.f32 %v3144, %v3170
        %v3181 = vmul.f32 %v3145, %v3170
        %v3182 = vmul.f32 %v3146, %v3170
        %v3183 = vmul.f32 %v3147, %v3170
        %v3184 = vmul.f32 %v3148, %v3170
        %v3185 = vmul.f32 %v3149, %v3170
        %v3186 = vmul.f32 %v3150, %v3170
        %v3187 = vmul.f32 %v3151, %v3170
        %v3188 = vmul.f32 %v3152, %v3170
        %v3189 = vmul.f32 %v3153, %v3170
        %v3190 = vmul.f32 %v3154, %v3170
        %v3191 = vmul.f32 %v3155, %v3170
        %v3192 = vmul.f32 %v3156, %v3170
        %v3193 = vmul.f32 %v3157, %v3170
        %v3194 = vmul.f32 %v3158, %v3170
        %v3195 = vmul.f32 %v3159, %v3170
        %v3196 = vmul.f32 %v3160, %v3170
        %v3197 = vmul.f32 %v3161, %v3170
        %v3198 = vmul.f32 %v3162, %v3170
        %v3199 = vmul.f32 %v3163, %v3170
        %v3200 = vmul.f32 %v3164, %v3170
        %v3201 = vmul.f32 %v3165, %v3170
        %v3202 = vmul.f32 %v3166, %v3170
        %v3203 = vadd.f32 %v3103, %v3171
        %v3204 = vadd.f32 %v3104, %v3172
        %v3205 = vadd.f32 %v3105, %v3173
        %v3206 = vadd.f32 %v3106, %v3174
        %v3207 = vadd.f32 %v3107, %v3175
        %v3208 = vadd.f32 %v3108, %v3176
        %v3209 = vadd.f32 %v3109, %v3177
        %v3210 = vadd.f32 %v3110, %v3178
        %v3211 = vadd.f32 %v3111, %v3179
        %v3212 = vadd.f32 %v3112, %v3180
        %v3213 = vadd.f32 %v3113, %v3181
        %v3214 = vadd.f32 %v3114, %v3182
        %v3215 = vadd.f32 %v3115, %v3183
        %v3216 = vadd.f32 %v3116, %v3184
        %v3217 = vadd.f32 %v3117, %v3185
        %v3218 = vadd.f32 %v3118, %v3186
        %v3219 = vadd.f32 %v3119, %v3187
        %v3220 = vadd.f32 %v3120, %v3188
        %v3221 = vadd.f32 %v3121, %v3189
        %v3222 = vadd.f32 %v3122, %v3190
        %v3223 = vadd.f32 %v3123, %v3191
        %v3224 = vadd.f32 %v3124, %v3192
        %v3225 = vadd.f32 %v3125, %v3193
        %v3226 = vadd.f32 %v3126, %v3194
        %v3227 = vadd.f32 %v3127, %v3195
        %v3228 = vadd.f32 %v3128, %v3196
        %v3229 = vadd.f32 %v3129, %v3197
        %v3230 = vadd.f32 %v3130, %v3198
        %v3231 = vadd.f32 %v3131, %v3199
        %v3232 = vadd.f32 %v3132, %v3200
        %v3233 = vadd.f32 %v3133, %v3201
        %v3234 = vadd.f32 %v3134, %v3202
        %v3235 = vld [vmem:[%s2799 + $0x1] sm:$0xff]
        %v3236 = vld [vmem:[%s2799 + $0x9] sm:$0xff]
        %v3237 = vld [vmem:[%s2799 + $0x19] sm:$0xff]
        %v3238 = vld [vmem:[%s2799 + $0x21] sm:$0xff]
        %v3239 = vld [vmem:[%s2799 + $0x31] sm:$0xff]
        %v3240 = vld [vmem:[%s2799 + $0x39] sm:$0xff]
        %v3241 = vld [vmem:[%s2799 + $0x49] sm:$0xff]
        %v3242 = vld [vmem:[%s2799 + $0x51] sm:$0xff]
        %v3243 = vld [vmem:[%s2799 + $0x61] sm:$0xff]
        %v3244 = vld [vmem:[%s2799 + $0x69] sm:$0xff]
        %v3245 = vld [vmem:[%s2799 + $0x79] sm:$0xff]
        %v3246 = vld [vmem:[%s2799 + $0x81] sm:$0xff]
        %v3247 = vld [vmem:[%s2799 + $0x91] sm:$0xff]
        %v3248 = vld [vmem:[%s2799 + $0x99] sm:$0xff]
        %v3249 = vld [vmem:[%s2799 + $0xa9] sm:$0xff]
        %v3250 = vld [vmem:[%s2799 + $0xb1] sm:$0xff]
        %v3251 = vld [vmem:[%s2799 + $0xc1] sm:$0xff]
        %v3252 = vld [vmem:[%s2799 + $0xc9] sm:$0xff]
        %v3253 = vld [vmem:[%s2799 + $0xd9] sm:$0xff]
        %v3254 = vld [vmem:[%s2799 + $0xe1] sm:$0xff]
        %v3255 = vld [vmem:[%s2799 + $0xf1] sm:$0xff]
        %v3256 = vld [vmem:[%s2799 + $0xf9] sm:$0xff]
        %v3257 = vld [vmem:[%s2799 + $0x109] sm:$0xff]
        %v3258 = vld [vmem:[%s2799 + $0x111] sm:$0xff]
        %v3259 = vld [vmem:[%s2799 + $0x121] sm:$0xff]
        %v3260 = vld [vmem:[%s2799 + $0x129] sm:$0xff]
        %v3261 = vld [vmem:[%s2799 + $0x139] sm:$0xff]
        %v3262 = vld [vmem:[%s2799 + $0x141] sm:$0xff]
        %v3263 = vld [vmem:[%s2799 + $0x151] sm:$0xff]
        %v3264 = vld [vmem:[%s2799 + $0x159] sm:$0xff]
        %v3265 = vld [vmem:[%s2799 + $0x169] sm:$0xff]
        %v3266 = vld [vmem:[%s2799 + $0x171] sm:$0xff]
        %v3267 = vlaneseq
        %v3268 = vshrl.u32 %v3267, 7
        %v3269 = vsub.s32 1, %v3268
        %v3270 = vrot.slane %v2833, %v3269
        %v3271 = vmul.f32 %v3235, %v3270
        %v3272 = vmul.f32 %v3236, %v3270
        %v3273 = vmul.f32 %v3237, %v3270
        %v3274 = vmul.f32 %v3238, %v3270
        %v3275 = vmul.f32 %v3239, %v3270
        %v3276 = vmul.f32 %v3240, %v3270
        %v3277 = vmul.f32 %v3241, %v3270
        %v3278 = vmul.f32 %v3242, %v3270
        %v3279 = vmul.f32 %v3243, %v3270
        %v3280 = vmul.f32 %v3244, %v3270
        %v3281 = vmul.f32 %v3245, %v3270
        %v3282 = vmul.f32 %v3246, %v3270
        %v3283 = vmul.f32 %v3247, %v3270
        %v3284 = vmul.f32 %v3248, %v3270
        %v3285 = vmul.f32 %v3249, %v3270
        %v3286 = vmul.f32 %v3250, %v3270
        %v3287 = vmul.f32 %v3251, %v3270
        %v3288 = vmul.f32 %v3252, %v3270
        %v3289 = vmul.f32 %v3253, %v3270
        %v3290 = vmul.f32 %v3254, %v3270
        %v3291 = vmul.f32 %v3255, %v3270
        %v3292 = vmul.f32 %v3256, %v3270
        %v3293 = vmul.f32 %v3257, %v3270
        %v3294 = vmul.f32 %v3258, %v3270
        %v3295 = vmul.f32 %v3259, %v3270
        %v3296 = vmul.f32 %v3260, %v3270
        %v3297 = vmul.f32 %v3261, %v3270
        %v3298 = vmul.f32 %v3262, %v3270
        %v3299 = vmul.f32 %v3263, %v3270
        %v3300 = vmul.f32 %v3264, %v3270
        %v3301 = vmul.f32 %v3265, %v3270
        %v3302 = vmul.f32 %v3266, %v3270
        %v3303 = vadd.f32 %v3203, %v3271
        %v3304 = vadd.f32 %v3204, %v3272
        %v3305 = vadd.f32 %v3205, %v3273
        %v3306 = vadd.f32 %v3206, %v3274
        %v3307 = vadd.f32 %v3207, %v3275
        %v3308 = vadd.f32 %v3208, %v3276
        %v3309 = vadd.f32 %v3209, %v3277
        %v3310 = vadd.f32 %v3210, %v3278
        %v3311 = vadd.f32 %v3211, %v3279
        %v3312 = vadd.f32 %v3212, %v3280
        %v3313 = vadd.f32 %v3213, %v3281
        %v3314 = vadd.f32 %v3214, %v3282
        %v3315 = vadd.f32 %v3215, %v3283
        %v3316 = vadd.f32 %v3216, %v3284
        %v3317 = vadd.f32 %v3217, %v3285
        %v3318 = vadd.f32 %v3218, %v3286
        %v3319 = vadd.f32 %v3219, %v3287
        %v3320 = vadd.f32 %v3220, %v3288
        %v3321 = vadd.f32 %v3221, %v3289
        %v3322 = vadd.f32 %v3222, %v3290
        %v3323 = vadd.f32 %v3223, %v3291
        %v3324 = vadd.f32 %v3224, %v3292
        %v3325 = vadd.f32 %v3225, %v3293
        %v3326 = vadd.f32 %v3226, %v3294
        %v3327 = vadd.f32 %v3227, %v3295
        %v3328 = vadd.f32 %v3228, %v3296
        %v3329 = vadd.f32 %v3229, %v3297
        %v3330 = vadd.f32 %v3230, %v3298
        %v3331 = vadd.f32 %v3231, %v3299
        %v3332 = vadd.f32 %v3232, %v3300
        %v3333 = vadd.f32 %v3233, %v3301
        %v3334 = vadd.f32 %v3234, %v3302
        %v3335 = vld [vmem:[%s2799 + $0x2] sm:$0xff]
        %v3336 = vld [vmem:[%s2799 + $0xa] sm:$0xff]
        %v3337 = vld [vmem:[%s2799 + $0x1a] sm:$0xff]
        %v3338 = vld [vmem:[%s2799 + $0x22] sm:$0xff]
        %v3339 = vld [vmem:[%s2799 + $0x32] sm:$0xff]
        %v3340 = vld [vmem:[%s2799 + $0x3a] sm:$0xff]
        %v3341 = vld [vmem:[%s2799 + $0x4a] sm:$0xff]
        %v3342 = vld [vmem:[%s2799 + $0x52] sm:$0xff]
        %v3343 = vld [vmem:[%s2799 + $0x62] sm:$0xff]
        %v3344 = vld [vmem:[%s2799 + $0x6a] sm:$0xff]
        %v3345 = vld [vmem:[%s2799 + $0x7a] sm:$0xff]
        %v3346 = vld [vmem:[%s2799 + $0x82] sm:$0xff]
        %v3347 = vld [vmem:[%s2799 + $0x92] sm:$0xff]
        %v3348 = vld [vmem:[%s2799 + $0x9a] sm:$0xff]
        %v3349 = vld [vmem:[%s2799 + $0xaa] sm:$0xff]
        %v3350 = vld [vmem:[%s2799 + $0xb2] sm:$0xff]
        %v3351 = vld [vmem:[%s2799 + $0xc2] sm:$0xff]
        %v3352 = vld [vmem:[%s2799 + $0xca] sm:$0xff]
        %v3353 = vld [vmem:[%s2799 + $0xda] sm:$0xff]
        %v3354 = vld [vmem:[%s2799 + $0xe2] sm:$0xff]
        %v3355 = vld [vmem:[%s2799 + $0xf2] sm:$0xff]
        %v3356 = vld [vmem:[%s2799 + $0xfa] sm:$0xff]
        %v3357 = vld [vmem:[%s2799 + $0x10a] sm:$0xff]
        %v3358 = vld [vmem:[%s2799 + $0x112] sm:$0xff]
        %v3359 = vld [vmem:[%s2799 + $0x122] sm:$0xff]
        %v3360 = vld [vmem:[%s2799 + $0x12a] sm:$0xff]
        %v3361 = vld [vmem:[%s2799 + $0x13a] sm:$0xff]
        %v3362 = vld [vmem:[%s2799 + $0x142] sm:$0xff]
        %v3363 = vld [vmem:[%s2799 + $0x152] sm:$0xff]
        %v3364 = vld [vmem:[%s2799 + $0x15a] sm:$0xff]
        %v3365 = vld [vmem:[%s2799 + $0x16a] sm:$0xff]
        %v3366 = vld [vmem:[%s2799 + $0x172] sm:$0xff]
        %v3367 = vlaneseq
        %v3368 = vshrl.u32 %v3367, 7
        %v3369 = vsub.s32 2, %v3368
        %v3370 = vrot.slane %v2833, %v3369
        %v3371 = vmul.f32 %v3335, %v3370
        %v3372 = vmul.f32 %v3336, %v3370
        %v3373 = vmul.f32 %v3337, %v3370
        %v3374 = vmul.f32 %v3338, %v3370
        %v3375 = vmul.f32 %v3339, %v3370
        %v3376 = vmul.f32 %v3340, %v3370
        %v3377 = vmul.f32 %v3341, %v3370
        %v3378 = vmul.f32 %v3342, %v3370
        %v3379 = vmul.f32 %v3343, %v3370
        %v3380 = vmul.f32 %v3344, %v3370
        %v3381 = vmul.f32 %v3345, %v3370
        %v3382 = vmul.f32 %v3346, %v3370
        %v3383 = vmul.f32 %v3347, %v3370
        %v3384 = vmul.f32 %v3348, %v3370
        %v3385 = vmul.f32 %v3349, %v3370
        %v3386 = vmul.f32 %v3350, %v3370
        %v3387 = vmul.f32 %v3351, %v3370
        %v3388 = vmul.f32 %v3352, %v3370
        %v3389 = vmul.f32 %v3353, %v3370
        %v3390 = vmul.f32 %v3354, %v3370
        %v3391 = vmul.f32 %v3355, %v3370
        %v3392 = vmul.f32 %v3356, %v3370
        %v3393 = vmul.f32 %v3357, %v3370
        %v3394 = vmul.f32 %v3358, %v3370
        %v3395 = vmul.f32 %v3359, %v3370
        %v3396 = vmul.f32 %v3360, %v3370
        %v3397 = vmul.f32 %v3361, %v3370
        %v3398 = vmul.f32 %v3362, %v3370
        %v3399 = vmul.f32 %v3363, %v3370
        %v3400 = vmul.f32 %v3364, %v3370
        %v3401 = vmul.f32 %v3365, %v3370
        %v3402 = vmul.f32 %v3366, %v3370
        %v3403 = vadd.f32 %v3303, %v3371
        %v3404 = vadd.f32 %v3304, %v3372
        %v3405 = vadd.f32 %v3305, %v3373
        %v3406 = vadd.f32 %v3306, %v3374
        %v3407 = vadd.f32 %v3307, %v3375
        %v3408 = vadd.f32 %v3308, %v3376
        %v3409 = vadd.f32 %v3309, %v3377
        %v3410 = vadd.f32 %v3310, %v3378
        %v3411 = vadd.f32 %v3311, %v3379
        %v3412 = vadd.f32 %v3312, %v3380
        %v3413 = vadd.f32 %v3313, %v3381
        %v3414 = vadd.f32 %v3314, %v3382
        %v3415 = vadd.f32 %v3315, %v3383
        %v3416 = vadd.f32 %v3316, %v3384
        %v3417 = vadd.f32 %v3317, %v3385
        %v3418 = vadd.f32 %v3318, %v3386
        %v3419 = vadd.f32 %v3319, %v3387
        %v3420 = vadd.f32 %v3320, %v3388
        %v3421 = vadd.f32 %v3321, %v3389
        %v3422 = vadd.f32 %v3322, %v3390
        %v3423 = vadd.f32 %v3323, %v3391
        %v3424 = vadd.f32 %v3324, %v3392
        %v3425 = vadd.f32 %v3325, %v3393
        %v3426 = vadd.f32 %v3326, %v3394
        %v3427 = vadd.f32 %v3327, %v3395
        %v3428 = vadd.f32 %v3328, %v3396
        %v3429 = vadd.f32 %v3329, %v3397
        %v3430 = vadd.f32 %v3330, %v3398
        %v3431 = vadd.f32 %v3331, %v3399
        %v3432 = vadd.f32 %v3332, %v3400
        %v3433 = vadd.f32 %v3333, %v3401
        %v3434 = vadd.f32 %v3334, %v3402
        %s3435 = scalar_lea.vmem [#allocation2], 48
        %v3436 = vld [vmem:[%s3435] sm:$0xff]
        %v3437 = vld [vmem:[%s3435 + $0x8] sm:$0xff]
        %v3438 = vld [vmem:[%s3435 + $0x18] sm:$0xff]
        %v3439 = vld [vmem:[%s3435 + $0x20] sm:$0xff]
        %v3440 = vld [vmem:[%s3435 + $0x30] sm:$0xff]
        %v3441 = vld [vmem:[%s3435 + $0x38] sm:$0xff]
        %v3442 = vld [vmem:[%s3435 + $0x48] sm:$0xff]
        %v3443 = vld [vmem:[%s3435 + $0x50] sm:$0xff]
        %v3444 = vld [vmem:[%s3435 + $0x60] sm:$0xff]
        %v3445 = vld [vmem:[%s3435 + $0x68] sm:$0xff]
        %v3446 = vld [vmem:[%s3435 + $0x78] sm:$0xff]
        %v3447 = vld [vmem:[%s3435 + $0x80] sm:$0xff]
        %v3448 = vld [vmem:[%s3435 + $0x90] sm:$0xff]
        %v3449 = vld [vmem:[%s3435 + $0x98] sm:$0xff]
        %v3450 = vld [vmem:[%s3435 + $0xa8] sm:$0xff]
        %v3451 = vld [vmem:[%s3435 + $0xb0] sm:$0xff]
        %v3452 = vld [vmem:[%s3435 + $0xc0] sm:$0xff]
        %v3453 = vld [vmem:[%s3435 + $0xc8] sm:$0xff]
        %v3454 = vld [vmem:[%s3435 + $0xd8] sm:$0xff]
        %v3455 = vld [vmem:[%s3435 + $0xe0] sm:$0xff]
        %v3456 = vld [vmem:[%s3435 + $0xf0] sm:$0xff]
        %v3457 = vld [vmem:[%s3435 + $0xf8] sm:$0xff]
        %v3458 = vld [vmem:[%s3435 + $0x108] sm:$0xff]
        %v3459 = vld [vmem:[%s3435 + $0x110] sm:$0xff]
        %v3460 = vld [vmem:[%s3435 + $0x120] sm:$0xff]
        %v3461 = vld [vmem:[%s3435 + $0x128] sm:$0xff]
        %v3462 = vld [vmem:[%s3435 + $0x138] sm:$0xff]
        %v3463 = vld [vmem:[%s3435 + $0x140] sm:$0xff]
        %v3464 = vld [vmem:[%s3435 + $0x150] sm:$0xff]
        %v3465 = vld [vmem:[%s3435 + $0x158] sm:$0xff]
        %v3466 = vld [vmem:[%s3435 + $0x168] sm:$0xff]
        %v3467 = vld [vmem:[%s3435 + $0x170] sm:$0xff]
        %v3468 = vlaneseq
        %v3469 = vshrl.u32 %v3468, 7
        %v3470 = vsub.s32 0, %v3469
        %v3471 = vrot.slane %v2834, %v3470
        %v3472 = vmul.f32 %v3436, %v3471
        %v3473 = vmul.f32 %v3437, %v3471
        %v3474 = vmul.f32 %v3438, %v3471
        %v3475 = vmul.f32 %v3439, %v3471
        %v3476 = vmul.f32 %v3440, %v3471
        %v3477 = vmul.f32 %v3441, %v3471
        %v3478 = vmul.f32 %v3442, %v3471
        %v3479 = vmul.f32 %v3443, %v3471
        %v3480 = vmul.f32 %v3444, %v3471
        %v3481 = vmul.f32 %v3445, %v3471
        %v3482 = vmul.f32 %v3446, %v3471
        %v3483 = vmul.f32 %v3447, %v3471
        %v3484 = vmul.f32 %v3448, %v3471
        %v3485 = vmul.f32 %v3449, %v3471
        %v3486 = vmul.f32 %v3450, %v3471
        %v3487 = vmul.f32 %v3451, %v3471
        %v3488 = vmul.f32 %v3452, %v3471
        %v3489 = vmul.f32 %v3453, %v3471
        %v3490 = vmul.f32 %v3454, %v3471
        %v3491 = vmul.f32 %v3455, %v3471
        %v3492 = vmul.f32 %v3456, %v3471
        %v3493 = vmul.f32 %v3457, %v3471
        %v3494 = vmul.f32 %v3458, %v3471
        %v3495 = vmul.f32 %v3459, %v3471
        %v3496 = vmul.f32 %v3460, %v3471
        %v3497 = vmul.f32 %v3461, %v3471
        %v3498 = vmul.f32 %v3462, %v3471
        %v3499 = vmul.f32 %v3463, %v3471
        %v3500 = vmul.f32 %v3464, %v3471
        %v3501 = vmul.f32 %v3465, %v3471
        %v3502 = vmul.f32 %v3466, %v3471
        %v3503 = vmul.f32 %v3467, %v3471
        %v3504 = vadd.f32 %v3403, %v3472
        %v3505 = vadd.f32 %v3404, %v3473
        %v3506 = vadd.f32 %v3405, %v3474
        %v3507 = vadd.f32 %v3406, %v3475
        %v3508 = vadd.f32 %v3407, %v3476
        %v3509 = vadd.f32 %v3408, %v3477
        %v3510 = vadd.f32 %v3409, %v3478
        %v3511 = vadd.f32 %v3410, %v3479
        %v3512 = vadd.f32 %v3411, %v3480
        %v3513 = vadd.f32 %v3412, %v3481
        %v3514 = vadd.f32 %v3413, %v3482
        %v3515 = vadd.f32 %v3414, %v3483
        %v3516 = vadd.f32 %v3415, %v3484
        %v3517 = vadd.f32 %v3416, %v3485
        %v3518 = vadd.f32 %v3417, %v3486
        %v3519 = vadd.f32 %v3418, %v3487
        %v3520 = vadd.f32 %v3419, %v3488
        %v3521 = vadd.f32 %v3420, %v3489
        %v3522 = vadd.f32 %v3421, %v3490
        %v3523 = vadd.f32 %v3422, %v3491
        %v3524 = vadd.f32 %v3423, %v3492
        %v3525 = vadd.f32 %v3424, %v3493
        %v3526 = vadd.f32 %v3425, %v3494
        %v3527 = vadd.f32 %v3426, %v3495
        %v3528 = vadd.f32 %v3427, %v3496
        %v3529 = vadd.f32 %v3428, %v3497
        %v3530 = vadd.f32 %v3429, %v3498
        %v3531 = vadd.f32 %v3430, %v3499
        %v3532 = vadd.f32 %v3431, %v3500
        %v3533 = vadd.f32 %v3432, %v3501
        %v3534 = vadd.f32 %v3433, %v3502
        %v3535 = vadd.f32 %v3434, %v3503
        %v3536 = vld [vmem:[%s3435 + $0x1] sm:$0xff]
        %v3537 = vld [vmem:[%s3435 + $0x9] sm:$0xff]
        %v3538 = vld [vmem:[%s3435 + $0x19] sm:$0xff]
        %v3539 = vld [vmem:[%s3435 + $0x21] sm:$0xff]
        %v3540 = vld [vmem:[%s3435 + $0x31] sm:$0xff]
        %v3541 = vld [vmem:[%s3435 + $0x39] sm:$0xff]
        %v3542 = vld [vmem:[%s3435 + $0x49] sm:$0xff]
        %v3543 = vld [vmem:[%s3435 + $0x51] sm:$0xff]
        %v3544 = vld [vmem:[%s3435 + $0x61] sm:$0xff]
        %v3545 = vld [vmem:[%s3435 + $0x69] sm:$0xff]
        %v3546 = vld [vmem:[%s3435 + $0x79] sm:$0xff]
        %v3547 = vld [vmem:[%s3435 + $0x81] sm:$0xff]
        %v3548 = vld [vmem:[%s3435 + $0x91] sm:$0xff]
        %v3549 = vld [vmem:[%s3435 + $0x99] sm:$0xff]
        %v3550 = vld [vmem:[%s3435 + $0xa9] sm:$0xff]
        %v3551 = vld [vmem:[%s3435 + $0xb1] sm:$0xff]
        %v3552 = vld [vmem:[%s3435 + $0xc1] sm:$0xff]
        %v3553 = vld [vmem:[%s3435 + $0xc9] sm:$0xff]
        %v3554 = vld [vmem:[%s3435 + $0xd9] sm:$0xff]
        %v3555 = vld [vmem:[%s3435 + $0xe1] sm:$0xff]
        %v3556 = vld [vmem:[%s3435 + $0xf1] sm:$0xff]
        %v3557 = vld [vmem:[%s3435 + $0xf9] sm:$0xff]
        %v3558 = vld [vmem:[%s3435 + $0x109] sm:$0xff]
        %v3559 = vld [vmem:[%s3435 + $0x111] sm:$0xff]
        %v3560 = vld [vmem:[%s3435 + $0x121] sm:$0xff]
        %v3561 = vld [vmem:[%s3435 + $0x129] sm:$0xff]
        %v3562 = vld [vmem:[%s3435 + $0x139] sm:$0xff]
        %v3563 = vld [vmem:[%s3435 + $0x141] sm:$0xff]
        %v3564 = vld [vmem:[%s3435 + $0x151] sm:$0xff]
        %v3565 = vld [vmem:[%s3435 + $0x159] sm:$0xff]
        %v3566 = vld [vmem:[%s3435 + $0x169] sm:$0xff]
        %v3567 = vld [vmem:[%s3435 + $0x171] sm:$0xff]
        %v3568 = vlaneseq
        %v3569 = vshrl.u32 %v3568, 7
        %v3570 = vsub.s32 1, %v3569
        %v3571 = vrot.slane %v2834, %v3570
        %v3572 = vmul.f32 %v3536, %v3571
        %v3573 = vmul.f32 %v3537, %v3571
        %v3574 = vmul.f32 %v3538, %v3571
        %v3575 = vmul.f32 %v3539, %v3571
        %v3576 = vmul.f32 %v3540, %v3571
        %v3577 = vmul.f32 %v3541, %v3571
        %v3578 = vmul.f32 %v3542, %v3571
        %v3579 = vmul.f32 %v3543, %v3571
        %v3580 = vmul.f32 %v3544, %v3571
        %v3581 = vmul.f32 %v3545, %v3571
        %v3582 = vmul.f32 %v3546, %v3571
        %v3583 = vmul.f32 %v3547, %v3571
        %v3584 = vmul.f32 %v3548, %v3571
        %v3585 = vmul.f32 %v3549, %v3571
        %v3586 = vmul.f32 %v3550, %v3571
        %v3587 = vmul.f32 %v3551, %v3571
        %v3588 = vmul.f32 %v3552, %v3571
        %v3589 = vmul.f32 %v3553, %v3571
        %v3590 = vmul.f32 %v3554, %v3571
        %v3591 = vmul.f32 %v3555, %v3571
        %v3592 = vmul.f32 %v3556, %v3571
        %v3593 = vmul.f32 %v3557, %v3571
        %v3594 = vmul.f32 %v3558, %v3571
        %v3595 = vmul.f32 %v3559, %v3571
        %v3596 = vmul.f32 %v3560, %v3571
        %v3597 = vmul.f32 %v3561, %v3571
        %v3598 = vmul.f32 %v3562, %v3571
        %v3599 = vmul.f32 %v3563, %v3571
        %v3600 = vmul.f32 %v3564, %v3571
        %v3601 = vmul.f32 %v3565, %v3571
        %v3602 = vmul.f32 %v3566, %v3571
        %v3603 = vmul.f32 %v3567, %v3571
        %v3604 = vadd.f32 %v3504, %v3572
        %v3605 = vadd.f32 %v3505, %v3573
        %v3606 = vadd.f32 %v3506, %v3574
        %v3607 = vadd.f32 %v3507, %v3575
        %v3608 = vadd.f32 %v3508, %v3576
        %v3609 = vadd.f32 %v3509, %v3577
        %v3610 = vadd.f32 %v3510, %v3578
        %v3611 = vadd.f32 %v3511, %v3579
        %v3612 = vadd.f32 %v3512, %v3580
        %v3613 = vadd.f32 %v3513, %v3581
        %v3614 = vadd.f32 %v3514, %v3582
        %v3615 = vadd.f32 %v3515, %v3583
        %v3616 = vadd.f32 %v3516, %v3584
        %v3617 = vadd.f32 %v3517, %v3585
        %v3618 = vadd.f32 %v3518, %v3586
        %v3619 = vadd.f32 %v3519, %v3587
        %v3620 = vadd.f32 %v3520, %v3588
        %v3621 = vadd.f32 %v3521, %v3589
        %v3622 = vadd.f32 %v3522, %v3590
        %v3623 = vadd.f32 %v3523, %v3591
        %v3624 = vadd.f32 %v3524, %v3592
        %v3625 = vadd.f32 %v3525, %v3593
        %v3626 = vadd.f32 %v3526, %v3594
        %v3627 = vadd.f32 %v3527, %v3595
        %v3628 = vadd.f32 %v3528, %v3596
        %v3629 = vadd.f32 %v3529, %v3597
        %v3630 = vadd.f32 %v3530, %v3598
        %v3631 = vadd.f32 %v3531, %v3599
        %v3632 = vadd.f32 %v3532, %v3600
        %v3633 = vadd.f32 %v3533, %v3601
        %v3634 = vadd.f32 %v3534, %v3602
        %v3635 = vadd.f32 %v3535, %v3603
        %v3636 = vld [vmem:[%s3435 + $0x2] sm:$0xff]
        %v3637 = vld [vmem:[%s3435 + $0xa] sm:$0xff]
        %v3638 = vld [vmem:[%s3435 + $0x1a] sm:$0xff]
        %v3639 = vld [vmem:[%s3435 + $0x22] sm:$0xff]
        %v3640 = vld [vmem:[%s3435 + $0x32] sm:$0xff]
        %v3641 = vld [vmem:[%s3435 + $0x3a] sm:$0xff]
        %v3642 = vld [vmem:[%s3435 + $0x4a] sm:$0xff]
        %v3643 = vld [vmem:[%s3435 + $0x52] sm:$0xff]
        %v3644 = vld [vmem:[%s3435 + $0x62] sm:$0xff]
        %v3645 = vld [vmem:[%s3435 + $0x6a] sm:$0xff]
        %v3646 = vld [vmem:[%s3435 + $0x7a] sm:$0xff]
        %v3647 = vld [vmem:[%s3435 + $0x82] sm:$0xff]
        %v3648 = vld [vmem:[%s3435 + $0x92] sm:$0xff]
        %v3649 = vld [vmem:[%s3435 + $0x9a] sm:$0xff]
        %v3650 = vld [vmem:[%s3435 + $0xaa] sm:$0xff]
        %v3651 = vld [vmem:[%s3435 + $0xb2] sm:$0xff]
        %v3652 = vld [vmem:[%s3435 + $0xc2] sm:$0xff]
        %v3653 = vld [vmem:[%s3435 + $0xca] sm:$0xff]
        %v3654 = vld [vmem:[%s3435 + $0xda] sm:$0xff]
        %v3655 = vld [vmem:[%s3435 + $0xe2] sm:$0xff]
        %v3656 = vld [vmem:[%s3435 + $0xf2] sm:$0xff]
        %v3657 = vld [vmem:[%s3435 + $0xfa] sm:$0xff]
        %v3658 = vld [vmem:[%s3435 + $0x10a] sm:$0xff]
        %v3659 = vld [vmem:[%s3435 + $0x112] sm:$0xff]
        %v3660 = vld [vmem:[%s3435 + $0x122] sm:$0xff]
        %v3661 = vld [vmem:[%s3435 + $0x12a] sm:$0xff]
        %v3662 = vld [vmem:[%s3435 + $0x13a] sm:$0xff]
        %v3663 = vld [vmem:[%s3435 + $0x142] sm:$0xff]
        %v3664 = vld [vmem:[%s3435 + $0x152] sm:$0xff]
        %v3665 = vld [vmem:[%s3435 + $0x15a] sm:$0xff]
        %v3666 = vld [vmem:[%s3435 + $0x16a] sm:$0xff]
        %v3667 = vld [vmem:[%s3435 + $0x172] sm:$0xff]
        %v3668 = vlaneseq
        %v3669 = vshrl.u32 %v3668, 7
        %v3670 = vsub.s32 2, %v3669
        %v3671 = vrot.slane %v2834, %v3670
        %v3672 = vmul.f32 %v3636, %v3671
        %v3673 = vmul.f32 %v3637, %v3671
        %v3674 = vmul.f32 %v3638, %v3671
        %v3675 = vmul.f32 %v3639, %v3671
        %v3676 = vmul.f32 %v3640, %v3671
        %v3677 = vmul.f32 %v3641, %v3671
        %v3678 = vmul.f32 %v3642, %v3671
        %v3679 = vmul.f32 %v3643, %v3671
        %v3680 = vmul.f32 %v3644, %v3671
        %v3681 = vmul.f32 %v3645, %v3671
        %v3682 = vmul.f32 %v3646, %v3671
        %v3683 = vmul.f32 %v3647, %v3671
        %v3684 = vmul.f32 %v3648, %v3671
        %v3685 = vmul.f32 %v3649, %v3671
        %v3686 = vmul.f32 %v3650, %v3671
        %v3687 = vmul.f32 %v3651, %v3671
        %v3688 = vmul.f32 %v3652, %v3671
        %v3689 = vmul.f32 %v3653, %v3671
        %v3690 = vmul.f32 %v3654, %v3671
        %v3691 = vmul.f32 %v3655, %v3671
        %v3692 = vmul.f32 %v3656, %v3671
        %v3693 = vmul.f32 %v3657, %v3671
        %v3694 = vmul.f32 %v3658, %v3671
        %v3695 = vmul.f32 %v3659, %v3671
        %v3696 = vmul.f32 %v3660, %v3671
        %v3697 = vmul.f32 %v3661, %v3671
        %v3698 = vmul.f32 %v3662, %v3671
        %v3699 = vmul.f32 %v3663, %v3671
        %v3700 = vmul.f32 %v3664, %v3671
        %v3701 = vmul.f32 %v3665, %v3671
        %v3702 = vmul.f32 %v3666, %v3671
        %v3703 = vmul.f32 %v3667, %v3671
        %v3704 = vadd.f32 %v3604, %v3672
        %v3705 = vadd.f32 %v3605, %v3673
        %v3706 = vadd.f32 %v3606, %v3674
        %v3707 = vadd.f32 %v3607, %v3675
        %v3708 = vadd.f32 %v3608, %v3676
        %v3709 = vadd.f32 %v3609, %v3677
        %v3710 = vadd.f32 %v3610, %v3678
        %v3711 = vadd.f32 %v3611, %v3679
        %v3712 = vadd.f32 %v3612, %v3680
        %v3713 = vadd.f32 %v3613, %v3681
        %v3714 = vadd.f32 %v3614, %v3682
        %v3715 = vadd.f32 %v3615, %v3683
        %v3716 = vadd.f32 %v3616, %v3684
        %v3717 = vadd.f32 %v3617, %v3685
        %v3718 = vadd.f32 %v3618, %v3686
        %v3719 = vadd.f32 %v3619, %v3687
        %v3720 = vadd.f32 %v3620, %v3688
        %v3721 = vadd.f32 %v3621, %v3689
        %v3722 = vadd.f32 %v3622, %v3690
        %v3723 = vadd.f32 %v3623, %v3691
        %v3724 = vadd.f32 %v3624, %v3692
        %v3725 = vadd.f32 %v3625, %v3693
        %v3726 = vadd.f32 %v3626, %v3694
        %v3727 = vadd.f32 %v3627, %v3695
        %v3728 = vadd.f32 %v3628, %v3696
        %v3729 = vadd.f32 %v3629, %v3697
        %v3730 = vadd.f32 %v3630, %v3698
        %v3731 = vadd.f32 %v3631, %v3699
        %v3732 = vadd.f32 %v3632, %v3700
        %v3733 = vadd.f32 %v3633, %v3701
        %v3734 = vadd.f32 %v3634, %v3702
        %v3735 = vadd.f32 %v3635, %v3703
        %v3736 = vld [vmem:[%s10] sm:$0x1]
        %v3737 = vld [vmem:[%s11] sm:$0x1]
        %3738 = vadd.xlane.f32.xlu0 %v3704
        %v3739 = vpop.xlane.xlu0 %3738
        %3740 = vadd.xlane.f32.xlu0 %v3705
        %v3741 = vpop.xlane.xlu0 %3740
        %3742 = vadd.xlane.f32.xlu0 %v3706
        %v3743 = vpop.xlane.xlu0 %3742
        %3744 = vadd.xlane.f32.xlu0 %v3707
        %v3745 = vpop.xlane.xlu0 %3744
        %3746 = vadd.xlane.f32.xlu0 %v3708
        %v3747 = vpop.xlane.xlu0 %3746
        %3748 = vadd.xlane.f32.xlu0 %v3709
        %v3749 = vpop.xlane.xlu0 %3748
        %3750 = vadd.xlane.f32.xlu0 %v3710
        %v3751 = vpop.xlane.xlu0 %3750
        %3752 = vadd.xlane.f32.xlu0 %v3711
        %v3753 = vpop.xlane.xlu0 %3752
        %3754 = vadd.xlane.f32.xlu0 %v3712
        %v3755 = vpop.xlane.xlu0 %3754
        %3756 = vadd.xlane.f32.xlu0 %v3713
        %v3757 = vpop.xlane.xlu0 %3756
        %3758 = vadd.xlane.f32.xlu0 %v3714
        %v3759 = vpop.xlane.xlu0 %3758
        %3760 = vadd.xlane.f32.xlu0 %v3715
        %v3761 = vpop.xlane.xlu0 %3760
        %3762 = vadd.xlane.f32.xlu0 %v3716
        %v3763 = vpop.xlane.xlu0 %3762
        %3764 = vadd.xlane.f32.xlu0 %v3717
        %v3765 = vpop.xlane.xlu0 %3764
        %3766 = vadd.xlane.f32.xlu0 %v3718
        %v3767 = vpop.xlane.xlu0 %3766
        %3768 = vadd.xlane.f32.xlu0 %v3719
        %v3769 = vpop.xlane.xlu0 %3768
        %3770 = vadd.xlane.f32.xlu0 %v3720
        %v3771 = vpop.xlane.xlu0 %3770
        %3772 = vadd.xlane.f32.xlu0 %v3721
        %v3773 = vpop.xlane.xlu0 %3772
        %3774 = vadd.xlane.f32.xlu0 %v3722
        %v3775 = vpop.xlane.xlu0 %3774
        %3776 = vadd.xlane.f32.xlu0 %v3723
        %v3777 = vpop.xlane.xlu0 %3776
        %3778 = vadd.xlane.f32.xlu0 %v3724
        %v3779 = vpop.xlane.xlu0 %3778
        %3780 = vadd.xlane.f32.xlu0 %v3725
        %v3781 = vpop.xlane.xlu0 %3780
        %3782 = vadd.xlane.f32.xlu0 %v3726
        %v3783 = vpop.xlane.xlu0 %3782
        %3784 = vadd.xlane.f32.xlu0 %v3727
        %v3785 = vpop.xlane.xlu0 %3784
        %3786 = vadd.xlane.f32.xlu0 %v3728
        %v3787 = vpop.xlane.xlu0 %3786
        %3788 = vadd.xlane.f32.xlu0 %v3729
        %v3789 = vpop.xlane.xlu0 %3788
        %3790 = vadd.xlane.f32.xlu0 %v3730
        %v3791 = vpop.xlane.xlu0 %3790
        %3792 = vadd.xlane.f32.xlu0 %v3731
        %v3793 = vpop.xlane.xlu0 %3792
        %3794 = vadd.xlane.f32.xlu0 %v3732
        %v3795 = vpop.xlane.xlu0 %3794
        %3796 = vadd.xlane.f32.xlu0 %v3733
        %v3797 = vpop.xlane.xlu0 %3796
        %3798 = vadd.xlane.f32.xlu0 %v3734
        %v3799 = vpop.xlane.xlu0 %3798
        %3800 = vadd.xlane.f32.xlu0 %v3735
        %v3801 = vpop.xlane.xlu0 %3800
        %v3802 = vmul.f32 %v3739, %v697
        %v3803 = vmul.f32 %v3741, %v697
        %v3804 = vmul.f32 %v3743, %v697
        %v3805 = vmul.f32 %v3745, %v697
        %v3806 = vmul.f32 %v3747, %v697
        %v3807 = vmul.f32 %v3749, %v697
        %v3808 = vmul.f32 %v3751, %v697
        %v3809 = vmul.f32 %v3753, %v697
        %v3810 = vmul.f32 %v3755, %v697
        %v3811 = vmul.f32 %v3757, %v697
        %v3812 = vmul.f32 %v3759, %v697
        %v3813 = vmul.f32 %v3761, %v697
        %v3814 = vmul.f32 %v3763, %v697
        %v3815 = vmul.f32 %v3765, %v697
        %v3816 = vmul.f32 %v3767, %v697
        %v3817 = vmul.f32 %v3769, %v697
        %v3818 = vmul.f32 %v3771, %v697
        %v3819 = vmul.f32 %v3773, %v697
        %v3820 = vmul.f32 %v3775, %v697
        %v3821 = vmul.f32 %v3777, %v697
        %v3822 = vmul.f32 %v3779, %v697
        %v3823 = vmul.f32 %v3781, %v697
        %v3824 = vmul.f32 %v3783, %v697
        %v3825 = vmul.f32 %v3785, %v697
        %v3826 = vmul.f32 %v3787, %v697
        %v3827 = vmul.f32 %v3789, %v697
        %v3828 = vmul.f32 %v3791, %v697
        %v3829 = vmul.f32 %v3793, %v697
        %v3830 = vmul.f32 %v3795, %v697
        %v3831 = vmul.f32 %v3797, %v697
        %v3832 = vmul.f32 %v3799, %v697
        %v3833 = vmul.f32 %v3801, %v697
        %v3834 = vsub.f32 %v3704, %v3802
        %v3835 = vsub.f32 %v3705, %v3803
        %v3836 = vsub.f32 %v3706, %v3804
        %v3837 = vsub.f32 %v3707, %v3805
        %v3838 = vsub.f32 %v3708, %v3806
        %v3839 = vsub.f32 %v3709, %v3807
        %v3840 = vsub.f32 %v3710, %v3808
        %v3841 = vsub.f32 %v3711, %v3809
        %v3842 = vsub.f32 %v3712, %v3810
        %v3843 = vsub.f32 %v3713, %v3811
        %v3844 = vsub.f32 %v3714, %v3812
        %v3845 = vsub.f32 %v3715, %v3813
        %v3846 = vsub.f32 %v3716, %v3814
        %v3847 = vsub.f32 %v3717, %v3815
        %v3848 = vsub.f32 %v3718, %v3816
        %v3849 = vsub.f32 %v3719, %v3817
        %v3850 = vsub.f32 %v3720, %v3818
        %v3851 = vsub.f32 %v3721, %v3819
        %v3852 = vsub.f32 %v3722, %v3820
        %v3853 = vsub.f32 %v3723, %v3821
        %v3854 = vsub.f32 %v3724, %v3822
        %v3855 = vsub.f32 %v3725, %v3823
        %v3856 = vsub.f32 %v3726, %v3824
        %v3857 = vsub.f32 %v3727, %v3825
        %v3858 = vsub.f32 %v3728, %v3826
        %v3859 = vsub.f32 %v3729, %v3827
        %v3860 = vsub.f32 %v3730, %v3828
        %v3861 = vsub.f32 %v3731, %v3829
        %v3862 = vsub.f32 %v3732, %v3830
        %v3863 = vsub.f32 %v3733, %v3831
        %v3864 = vsub.f32 %v3734, %v3832
        %v3865 = vsub.f32 %v3735, %v3833
        %v3866 = vmul.f32 %v3834, %v3834
        %v3867 = vmul.f32 %v3835, %v3835
        %v3868 = vmul.f32 %v3836, %v3836
        %v3869 = vmul.f32 %v3837, %v3837
        %v3870 = vmul.f32 %v3838, %v3838
        %v3871 = vmul.f32 %v3839, %v3839
        %v3872 = vmul.f32 %v3840, %v3840
        %v3873 = vmul.f32 %v3841, %v3841
        %v3874 = vmul.f32 %v3842, %v3842
        %v3875 = vmul.f32 %v3843, %v3843
        %v3876 = vmul.f32 %v3844, %v3844
        %v3877 = vmul.f32 %v3845, %v3845
        %v3878 = vmul.f32 %v3846, %v3846
        %v3879 = vmul.f32 %v3847, %v3847
        %v3880 = vmul.f32 %v3848, %v3848
        %v3881 = vmul.f32 %v3849, %v3849
        %v3882 = vmul.f32 %v3850, %v3850
        %v3883 = vmul.f32 %v3851, %v3851
        %v3884 = vmul.f32 %v3852, %v3852
        %v3885 = vmul.f32 %v3853, %v3853
        %v3886 = vmul.f32 %v3854, %v3854
        %v3887 = vmul.f32 %v3855, %v3855
        %v3888 = vmul.f32 %v3856, %v3856
        %v3889 = vmul.f32 %v3857, %v3857
        %v3890 = vmul.f32 %v3858, %v3858
        %v3891 = vmul.f32 %v3859, %v3859
        %v3892 = vmul.f32 %v3860, %v3860
        %v3893 = vmul.f32 %v3861, %v3861
        %v3894 = vmul.f32 %v3862, %v3862
        %v3895 = vmul.f32 %v3863, %v3863
        %v3896 = vmul.f32 %v3864, %v3864
        %v3897 = vmul.f32 %v3865, %v3865
        %3898 = vadd.xlane.f32.xlu0 %v3866
        %v3899 = vpop.xlane.xlu0 %3898
        %3900 = vadd.xlane.f32.xlu0 %v3867
        %v3901 = vpop.xlane.xlu0 %3900
        %3902 = vadd.xlane.f32.xlu0 %v3868
        %v3903 = vpop.xlane.xlu0 %3902
        %3904 = vadd.xlane.f32.xlu0 %v3869
        %v3905 = vpop.xlane.xlu0 %3904
        %3906 = vadd.xlane.f32.xlu0 %v3870
        %v3907 = vpop.xlane.xlu0 %3906
        %3908 = vadd.xlane.f32.xlu0 %v3871
        %v3909 = vpop.xlane.xlu0 %3908
        %3910 = vadd.xlane.f32.xlu0 %v3872
        %v3911 = vpop.xlane.xlu0 %3910
        %3912 = vadd.xlane.f32.xlu0 %v3873
        %v3913 = vpop.xlane.xlu0 %3912
        %3914 = vadd.xlane.f32.xlu0 %v3874
        %v3915 = vpop.xlane.xlu0 %3914
        %3916 = vadd.xlane.f32.xlu0 %v3875
        %v3917 = vpop.xlane.xlu0 %3916
        %3918 = vadd.xlane.f32.xlu0 %v3876
        %v3919 = vpop.xlane.xlu0 %3918
        %3920 = vadd.xlane.f32.xlu0 %v3877
        %v3921 = vpop.xlane.xlu0 %3920
        %3922 = vadd.xlane.f32.xlu0 %v3878
        %v3923 = vpop.xlane.xlu0 %3922
        %3924 = vadd.xlane.f32.xlu0 %v3879
        %v3925 = vpop.xlane.xlu0 %3924
        %3926 = vadd.xlane.f32.xlu0 %v3880
        %v3927 = vpop.xlane.xlu0 %3926
        %3928 = vadd.xlane.f32.xlu0 %v3881
        %v3929 = vpop.xlane.xlu0 %3928
        %3930 = vadd.xlane.f32.xlu0 %v3882
        %v3931 = vpop.xlane.xlu0 %3930
        %3932 = vadd.xlane.f32.xlu0 %v3883
        %v3933 = vpop.xlane.xlu0 %3932
        %3934 = vadd.xlane.f32.xlu0 %v3884
        %v3935 = vpop.xlane.xlu0 %3934
        %3936 = vadd.xlane.f32.xlu0 %v3885
        %v3937 = vpop.xlane.xlu0 %3936
        %3938 = vadd.xlane.f32.xlu0 %v3886
        %v3939 = vpop.xlane.xlu0 %3938
        %3940 = vadd.xlane.f32.xlu0 %v3887
        %v3941 = vpop.xlane.xlu0 %3940
        %3942 = vadd.xlane.f32.xlu0 %v3888
        %v3943 = vpop.xlane.xlu0 %3942
        %3944 = vadd.xlane.f32.xlu0 %v3889
        %v3945 = vpop.xlane.xlu0 %3944
        %3946 = vadd.xlane.f32.xlu0 %v3890
        %v3947 = vpop.xlane.xlu0 %3946
        %3948 = vadd.xlane.f32.xlu0 %v3891
        %v3949 = vpop.xlane.xlu0 %3948
        %3950 = vadd.xlane.f32.xlu0 %v3892
        %v3951 = vpop.xlane.xlu0 %3950
        %3952 = vadd.xlane.f32.xlu0 %v3893
        %v3953 = vpop.xlane.xlu0 %3952
        %3954 = vadd.xlane.f32.xlu0 %v3894
        %v3955 = vpop.xlane.xlu0 %3954
        %3956 = vadd.xlane.f32.xlu0 %v3895
        %v3957 = vpop.xlane.xlu0 %3956
        %3958 = vadd.xlane.f32.xlu0 %v3896
        %v3959 = vpop.xlane.xlu0 %3958
        %3960 = vadd.xlane.f32.xlu0 %v3897
        %v3961 = vpop.xlane.xlu0 %3960
        %v3962 = vmul.f32 %v3899, %v697
        %v3963 = vmul.f32 %v3901, %v697
        %v3964 = vmul.f32 %v3903, %v697
        %v3965 = vmul.f32 %v3905, %v697
        %v3966 = vmul.f32 %v3907, %v697
        %v3967 = vmul.f32 %v3909, %v697
        %v3968 = vmul.f32 %v3911, %v697
        %v3969 = vmul.f32 %v3913, %v697
        %v3970 = vmul.f32 %v3915, %v697
        %v3971 = vmul.f32 %v3917, %v697
        %v3972 = vmul.f32 %v3919, %v697
        %v3973 = vmul.f32 %v3921, %v697
        %v3974 = vmul.f32 %v3923, %v697
        %v3975 = vmul.f32 %v3925, %v697
        %v3976 = vmul.f32 %v3927, %v697
        %v3977 = vmul.f32 %v3929, %v697
        %v3978 = vmul.f32 %v3931, %v697
        %v3979 = vmul.f32 %v3933, %v697
        %v3980 = vmul.f32 %v3935, %v697
        %v3981 = vmul.f32 %v3937, %v697
        %v3982 = vmul.f32 %v3939, %v697
        %v3983 = vmul.f32 %v3941, %v697
        %v3984 = vmul.f32 %v3943, %v697
        %v3985 = vmul.f32 %v3945, %v697
        %v3986 = vmul.f32 %v3947, %v697
        %v3987 = vmul.f32 %v3949, %v697
        %v3988 = vmul.f32 %v3951, %v697
        %v3989 = vmul.f32 %v3953, %v697
        %v3990 = vmul.f32 %v3955, %v697
        %v3991 = vmul.f32 %v3957, %v697
        %v3992 = vmul.f32 %v3959, %v697
        %v3993 = vmul.f32 %v3961, %v697
        %v3994 = vadd.f32 %v3962, 1e-05
        %v3995 = vadd.f32 %v3963, 1e-05
        %v3996 = vadd.f32 %v3964, 1e-05
        %v3997 = vadd.f32 %v3965, 1e-05
        %v3998 = vadd.f32 %v3966, 1e-05
        %v3999 = vadd.f32 %v3967, 1e-05
        %v4000 = vadd.f32 %v3968, 1e-05
        %v4001 = vadd.f32 %v3969, 1e-05
        %v4002 = vadd.f32 %v3970, 1e-05
        %v4003 = vadd.f32 %v3971, 1e-05
        %v4004 = vadd.f32 %v3972, 1e-05
        %v4005 = vadd.f32 %v3973, 1e-05
        %v4006 = vadd.f32 %v3974, 1e-05
        %v4007 = vadd.f32 %v3975, 1e-05
        %v4008 = vadd.f32 %v3976, 1e-05
        %v4009 = vadd.f32 %v3977, 1e-05
        %v4010 = vadd.f32 %v3978, 1e-05
        %v4011 = vadd.f32 %v3979, 1e-05
        %v4012 = vadd.f32 %v3980, 1e-05
        %v4013 = vadd.f32 %v3981, 1e-05
        %v4014 = vadd.f32 %v3982, 1e-05
        %v4015 = vadd.f32 %v3983, 1e-05
        %v4016 = vadd.f32 %v3984, 1e-05
        %v4017 = vadd.f32 %v3985, 1e-05
        %v4018 = vadd.f32 %v3986, 1e-05
        %v4019 = vadd.f32 %v3987, 1e-05
        %v4020 = vadd.f32 %v3988, 1e-05
        %v4021 = vadd.f32 %v3989, 1e-05
        %v4022 = vadd.f32 %v3990, 1e-05
        %v4023 = vadd.f32 %v3991, 1e-05
        %v4024 = vadd.f32 %v3992, 1e-05
        %v4025 = vadd.f32 %v3993, 1e-05
        %v4026 = vrsqrt.pop %v3994
        %v4027 = vrsqrt.pop %v3995
        %v4028 = vrsqrt.pop %v3996
        %v4029 = vrsqrt.pop %v3997
        %v4030 = vrsqrt.pop %v3998
        %v4031 = vrsqrt.pop %v3999
        %v4032 = vrsqrt.pop %v4000
        %v4033 = vrsqrt.pop %v4001
        %v4034 = vrsqrt.pop %v4002
        %v4035 = vrsqrt.pop %v4003
        %v4036 = vrsqrt.pop %v4004
        %v4037 = vrsqrt.pop %v4005
        %v4038 = vrsqrt.pop %v4006
        %v4039 = vrsqrt.pop %v4007
        %v4040 = vrsqrt.pop %v4008
        %v4041 = vrsqrt.pop %v4009
        %v4042 = vrsqrt.pop %v4010
        %v4043 = vrsqrt.pop %v4011
        %v4044 = vrsqrt.pop %v4012
        %v4045 = vrsqrt.pop %v4013
        %v4046 = vrsqrt.pop %v4014
        %v4047 = vrsqrt.pop %v4015
        %v4048 = vrsqrt.pop %v4016
        %v4049 = vrsqrt.pop %v4017
        %v4050 = vrsqrt.pop %v4018
        %v4051 = vrsqrt.pop %v4019
        %v4052 = vrsqrt.pop %v4020
        %v4053 = vrsqrt.pop %v4021
        %v4054 = vrsqrt.pop %v4022
        %v4055 = vrsqrt.pop %v4023
        %v4056 = vrsqrt.pop %v4024
        %v4057 = vrsqrt.pop %v4025
        %v4058 = vmul.f32 %v3834, %v4026
        %v4059 = vmul.f32 %v3835, %v4027
        %v4060 = vmul.f32 %v3836, %v4028
        %v4061 = vmul.f32 %v3837, %v4029
        %v4062 = vmul.f32 %v3838, %v4030
        %v4063 = vmul.f32 %v3839, %v4031
        %v4064 = vmul.f32 %v3840, %v4032
        %v4065 = vmul.f32 %v3841, %v4033
        %v4066 = vmul.f32 %v3842, %v4034
        %v4067 = vmul.f32 %v3843, %v4035
        %v4068 = vmul.f32 %v3844, %v4036
        %v4069 = vmul.f32 %v3845, %v4037
        %v4070 = vmul.f32 %v3846, %v4038
        %v4071 = vmul.f32 %v3847, %v4039
        %v4072 = vmul.f32 %v3848, %v4040
        %v4073 = vmul.f32 %v3849, %v4041
        %v4074 = vmul.f32 %v3850, %v4042
        %v4075 = vmul.f32 %v3851, %v4043
        %v4076 = vmul.f32 %v3852, %v4044
        %v4077 = vmul.f32 %v3853, %v4045
        %v4078 = vmul.f32 %v3854, %v4046
        %v4079 = vmul.f32 %v3855, %v4047
        %v4080 = vmul.f32 %v3856, %v4048
        %v4081 = vmul.f32 %v3857, %v4049
        %v4082 = vmul.f32 %v3858, %v4050
        %v4083 = vmul.f32 %v3859, %v4051
        %v4084 = vmul.f32 %v3860, %v4052
        %v4085 = vmul.f32 %v3861, %v4053
        %v4086 = vmul.f32 %v3862, %v4054
        %v4087 = vmul.f32 %v3863, %v4055
        %v4088 = vmul.f32 %v3864, %v4056
        %v4089 = vmul.f32 %v3865, %v4057
        %v4091 = vlaneseq
        %v4092 = vshrl.u32 %v4091, 7
        %v4093 = vsub.s32 0, %v4092
        %v4094 = vrot.slane %v3736, %v4093
        %v4096 = vmul.f32 %v4058, %v4094
        %v4097 = vmul.f32 %v4059, %v4094
        %v4098 = vmul.f32 %v4060, %v4094
        %v4099 = vmul.f32 %v4061, %v4094
        %v4100 = vmul.f32 %v4062, %v4094
        %v4101 = vmul.f32 %v4063, %v4094
        %v4102 = vmul.f32 %v4064, %v4094
        %v4103 = vmul.f32 %v4065, %v4094
        %v4104 = vmul.f32 %v4066, %v4094
        %v4105 = vmul.f32 %v4067, %v4094
        %v4106 = vmul.f32 %v4068, %v4094
        %v4107 = vmul.f32 %v4069, %v4094
        %v4108 = vmul.f32 %v4070, %v4094
        %v4109 = vmul.f32 %v4071, %v4094
        %v4110 = vmul.f32 %v4072, %v4094
        %v4111 = vmul.f32 %v4073, %v4094
        %v4112 = vmul.f32 %v4074, %v4094
        %v4113 = vmul.f32 %v4075, %v4094
        %v4114 = vmul.f32 %v4076, %v4094
        %v4115 = vmul.f32 %v4077, %v4094
        %v4116 = vmul.f32 %v4078, %v4094
        %v4117 = vmul.f32 %v4079, %v4094
        %v4118 = vmul.f32 %v4080, %v4094
        %v4119 = vmul.f32 %v4081, %v4094
        %v4120 = vmul.f32 %v4082, %v4094
        %v4121 = vmul.f32 %v4083, %v4094
        %v4122 = vmul.f32 %v4084, %v4094
        %v4123 = vmul.f32 %v4085, %v4094
        %v4124 = vmul.f32 %v4086, %v4094
        %v4125 = vmul.f32 %v4087, %v4094
        %v4126 = vmul.f32 %v4088, %v4094
        %v4127 = vmul.f32 %v4089, %v4094
        %v4129 = vlaneseq
        %v4130 = vshrl.u32 %v4129, 7
        %v4131 = vsub.s32 0, %v4130
        %v4132 = vrot.slane %v3737, %v4131
        %v4134 = vadd.f32 %v4096, %v4132
        %v4135 = vadd.f32 %v4097, %v4132
        %v4136 = vadd.f32 %v4098, %v4132
        %v4137 = vadd.f32 %v4099, %v4132
        %v4138 = vadd.f32 %v4100, %v4132
        %v4139 = vadd.f32 %v4101, %v4132
        %v4140 = vadd.f32 %v4102, %v4132
        %v4141 = vadd.f32 %v4103, %v4132
        %v4142 = vadd.f32 %v4104, %v4132
        %v4143 = vadd.f32 %v4105, %v4132
        %v4144 = vadd.f32 %v4106, %v4132
        %v4145 = vadd.f32 %v4107, %v4132
        %v4146 = vadd.f32 %v4108, %v4132
        %v4147 = vadd.f32 %v4109, %v4132
        %v4148 = vadd.f32 %v4110, %v4132
        %v4149 = vadd.f32 %v4111, %v4132
        %v4150 = vadd.f32 %v4112, %v4132
        %v4151 = vadd.f32 %v4113, %v4132
        %v4152 = vadd.f32 %v4114, %v4132
        %v4153 = vadd.f32 %v4115, %v4132
        %v4154 = vadd.f32 %v4116, %v4132
        %v4155 = vadd.f32 %v4117, %v4132
        %v4156 = vadd.f32 %v4118, %v4132
        %v4157 = vadd.f32 %v4119, %v4132
        %v4158 = vadd.f32 %v4120, %v4132
        %v4159 = vadd.f32 %v4121, %v4132
        %v4160 = vadd.f32 %v4122, %v4132
        %v4161 = vadd.f32 %v4123, %v4132
        %v4162 = vadd.f32 %v4124, %v4132
        %v4163 = vadd.f32 %v4125, %v4132
        %v4164 = vadd.f32 %v4126, %v4132
        %v4165 = vadd.f32 %v4127, %v4132
        %v4166 = vpack.c.bf16 %v4135, %v4134
        %v4167 = vpack.c.bf16 %v4137, %v4136
        %v4168 = vpack.c.bf16 %v4139, %v4138
        %v4169 = vpack.c.bf16 %v4141, %v4140
        %v4170 = vpack.c.bf16 %v4143, %v4142
        %v4171 = vpack.c.bf16 %v4145, %v4144
        %v4172 = vpack.c.bf16 %v4147, %v4146
        %v4173 = vpack.c.bf16 %v4149, %v4148
        %v4174 = vpack.c.bf16 %v4151, %v4150
        %v4175 = vpack.c.bf16 %v4153, %v4152
        %v4176 = vpack.c.bf16 %v4155, %v4154
        %v4177 = vpack.c.bf16 %v4157, %v4156
        %v4178 = vpack.c.bf16 %v4159, %v4158
        %v4179 = vpack.c.bf16 %v4161, %v4160
        %v4180 = vpack.c.bf16 %v4163, %v4162
        %v4181 = vpack.c.bf16 %v4165, %v4164
        %v4182 = vld [vmem:[#allocation9] sm:$0xff]
        %v4183 = vld [vmem:[#allocation9 + $0x8] sm:$0xff]
        %v4184 = vld [vmem:[#allocation9 + $0x10] sm:$0xff]
        %v4185 = vld [vmem:[#allocation9 + $0x18] sm:$0xff]
        %v4186 = vld [vmem:[#allocation9 + $0x20] sm:$0xff]
        %v4187 = vld [vmem:[#allocation9 + $0x28] sm:$0xff]
        %v4188 = vld [vmem:[#allocation9 + $0x30] sm:$0xff]
        %v4189 = vld [vmem:[#allocation9 + $0x38] sm:$0xff]
        %v4190 = vld [vmem:[#allocation9 + $0x40] sm:$0xff]
        %v4191 = vld [vmem:[#allocation9 + $0x48] sm:$0xff]
        %v4192 = vld [vmem:[#allocation9 + $0x50] sm:$0xff]
        %v4193 = vld [vmem:[#allocation9 + $0x58] sm:$0xff]
        %v4194 = vld [vmem:[#allocation9 + $0x60] sm:$0xff]
        %v4195 = vld [vmem:[#allocation9 + $0x68] sm:$0xff]
        %v4196 = vld [vmem:[#allocation9 + $0x70] sm:$0xff]
        %v4197 = vld [vmem:[#allocation9 + $0x78] sm:$0xff]
        %v4198 = vld [vmem:[%s13] sm:$0x3]
        %v4200 = vlaneseq
        %v4201 = vshrl.u32 %v4200, 7
        %v4202 = vsub.s32 0, %v4201
        %v4203 = vrot.slane %v4198, %v4202
        %v4204 = vlaneseq
        %v4205 = vshrl.u32 %v4204, 7
        %v4206 = vsub.s32 1, %v4205
        %v4207 = vrot.slane %v4198, %v4206
        %v4226 = vunpack.c.l.b16 %v4182
        %v4227 = vunpack.c.h.b16 %v4182
        %v4228 = vunpack.c.l.b16 %v4183
        %v4229 = vunpack.c.h.b16 %v4183
        %v4230 = vunpack.c.l.b16 %v4184
        %v4231 = vunpack.c.h.b16 %v4184
        %v4232 = vunpack.c.l.b16 %v4185
        %v4233 = vunpack.c.h.b16 %v4185
        %v4234 = vunpack.c.l.b16 %v4186
        %v4235 = vunpack.c.h.b16 %v4186
        %v4236 = vunpack.c.l.b16 %v4187
        %v4237 = vunpack.c.h.b16 %v4187
        %v4238 = vunpack.c.l.b16 %v4188
        %v4239 = vunpack.c.h.b16 %v4188
        %v4240 = vunpack.c.l.b16 %v4189
        %v4241 = vunpack.c.h.b16 %v4189
        %v4242 = vunpack.c.l.b16 %v4190
        %v4243 = vunpack.c.h.b16 %v4190
        %v4244 = vunpack.c.l.b16 %v4191
        %v4245 = vunpack.c.h.b16 %v4191
        %v4246 = vunpack.c.l.b16 %v4192
        %v4247 = vunpack.c.h.b16 %v4192
        %v4248 = vunpack.c.l.b16 %v4193
        %v4249 = vunpack.c.h.b16 %v4193
        %v4250 = vunpack.c.l.b16 %v4194
        %v4251 = vunpack.c.h.b16 %v4194
        %v4252 = vunpack.c.l.b16 %v4195
        %v4253 = vunpack.c.h.b16 %v4195
        %v4254 = vunpack.c.l.b16 %v4196
        %v4255 = vunpack.c.h.b16 %v4196
        %v4256 = vunpack.c.l.b16 %v4197
        %v4257 = vunpack.c.h.b16 %v4197
        %v4258 = vpack.c.b16 %v4228, %v4226
        %v4259 = vpack.c.b16 %v4229, %v4227
        %v4260 = vpack.c.b16 %v4232, %v4230
        %v4261 = vpack.c.b16 %v4233, %v4231
        %v4262 = vpack.c.b16 %v4236, %v4234
        %v4263 = vpack.c.b16 %v4237, %v4235
        %v4264 = vpack.c.b16 %v4240, %v4238
        %v4265 = vpack.c.b16 %v4241, %v4239
        %v4266 = vpack.c.b16 %v4244, %v4242
        %v4267 = vpack.c.b16 %v4245, %v4243
        %v4268 = vpack.c.b16 %v4248, %v4246
        %v4269 = vpack.c.b16 %v4249, %v4247
        %v4270 = vpack.c.b16 %v4252, %v4250
        %v4271 = vpack.c.b16 %v4253, %v4251
        %v4272 = vpack.c.b16 %v4256, %v4254
        %v4273 = vpack.c.b16 %v4257, %v4255
        %4290 = vmatprep.subr.bf16.mxu0 %v4259
        %4291 = vmatpush1.bf16.msra.mxu0 %v4258
        %4292 = vmatprep.subr.bf16.mxu0 %v4261
        %4293 = vmatpush1.bf16.msra.mxu0 %v4260
        %4294 = vmatprep.subr.bf16.mxu0 %v4263
        %4295 = vmatpush1.bf16.msra.mxu0 %v4262
        %4296 = vmatprep.subr.bf16.mxu0 %v4265
        %4297 = vmatpush1.bf16.msra.mxu0 %v4264
        %4298 = vmatprep.subr.bf16.mxu0 %v4267
        %4299 = vmatpush1.bf16.msra.mxu0 %v4266
        %4300 = vmatprep.subr.bf16.mxu0 %v4269
        %4301 = vmatpush1.bf16.msra.mxu0 %v4268
        %4302 = vmatprep.subr.bf16.mxu0 %v4271
        %4303 = vmatpush1.bf16.msra.mxu0 %v4270
        %4304 = vmatprep.subr.bf16.mxu0 %v4273
        %4305 = vmatpush1.bf16.msra.mxu0 %v4272
        %4306 = vmatprep.subr.bf16.mxu0 0
        %4307 = vmatpush1.bf16.msra.mxu0 0
        %4308 = vmatprep.subr.bf16.mxu0 0
        %4309 = vmatpush1.bf16.msra.mxu0 0
        %4310 = vmatprep.subr.bf16.mxu0 0
        %4311 = vmatpush1.bf16.msra.mxu0 0
        %4312 = vmatprep.subr.bf16.mxu0 0
        %4313 = vmatpush1.bf16.msra.mxu0 0
        %4314 = vmatprep.subr.bf16.mxu0 0
        %4315 = vmatpush1.bf16.msra.mxu0 0
        %4316 = vmatprep.subr.bf16.mxu0 0
        %4317 = vmatpush1.bf16.msra.mxu0 0
        %4318 = vmatprep.subr.bf16.mxu0 0
        %4319 = vmatpush1.bf16.msra.mxu0 0
        %4320 = vmatprep.subr.bf16.mxu0 0
        %4321 = vmatpush1.bf16.msra.mxu0 0
        %4322 = vmatprep.mubr.bf16.mxu0 0
        %4323 = vmatmul.mubr.bf16.gmra.mrb[0].mxu0 %v4166
        %v4324 = vpop.f32.mrb[0].mxu0
        %v4325 = vadd.f32 %v4203, %v4324
        %v4326 = vpop.f32.mrb[0].mxu0
        %v4327 = vadd.f32 %v4207, %v4326
        %v4328 = vpop.f32.mrb[0].mxu0
        %v4329 = vadd.f32 %v4203, %v4328
        %v4330 = vpop.f32.mrb[0].mxu0
        %v4331 = vadd.f32 %v4207, %v4330
        %4332 = vmatprep.mubr.bf16.mxu0 0
        %4333 = vmatmul.mubr.bf16.gmra.mrb[0].mxu0 %v4167
        %v4334 = vpop.f32.mrb[0].mxu0
        %v4335 = vadd.f32 %v4203, %v4334
        %v4336 = vpop.f32.mrb[0].mxu0
        %v4337 = vadd.f32 %v4207, %v4336
        %v4338 = vpop.f32.mrb[0].mxu0
        %v4339 = vadd.f32 %v4203, %v4338
        %v4340 = vpop.f32.mrb[0].mxu0
        %v4341 = vadd.f32 %v4207, %v4340
        %4342 = vmatprep.mubr.bf16.mxu0 0
        %4343 = vmatmul.mubr.bf16.gmra.mrb[0].mxu0 %v4168
        %v4344 = vpop.f32.mrb[0].mxu0
        %v4345 = vadd.f32 %v4203, %v4344
        %v4346 = vpop.f32.mrb[0].mxu0
        %v4347 = vadd.f32 %v4207, %v4346
        %v4348 = vpop.f32.mrb[0].mxu0
        %v4349 = vadd.f32 %v4203, %v4348
        %v4350 = vpop.f32.mrb[0].mxu0
        %v4351 = vadd.f32 %v4207, %v4350
        %4352 = vmatprep.mubr.bf16.mxu0 0
        %4353 = vmatmul.mubr.bf16.gmra.mrb[0].mxu0 %v4169
        %v4354 = vpop.f32.mrb[0].mxu0
        %v4355 = vadd.f32 %v4203, %v4354
        %v4356 = vpop.f32.mrb[0].mxu0
        %v4357 = vadd.f32 %v4207, %v4356
        %v4358 = vpop.f32.mrb[0].mxu0
        %v4359 = vadd.f32 %v4203, %v4358
        %v4360 = vpop.f32.mrb[0].mxu0
        %v4361 = vadd.f32 %v4207, %v4360
        %4362 = vmatprep.mubr.bf16.mxu0 0
        %4363 = vmatmul.mubr.bf16.gmra.mrb[0].mxu0 %v4170
        %v4364 = vpop.f32.mrb[0].mxu0
        %v4365 = vadd.f32 %v4203, %v4364
        %v4366 = vpop.f32.mrb[0].mxu0
        %v4367 = vadd.f32 %v4207, %v4366
        %v4368 = vpop.f32.mrb[0].mxu0
        %v4369 = vadd.f32 %v4203, %v4368
        %v4370 = vpop.f32.mrb[0].mxu0
        %v4371 = vadd.f32 %v4207, %v4370
        %4372 = vmatprep.mubr.bf16.mxu0 0
        %4373 = vmatmul.mubr.bf16.gmra.mrb[0].mxu0 %v4171
        %v4374 = vpop.f32.mrb[0].mxu0
        %v4375 = vadd.f32 %v4203, %v4374
        %v4376 = vpop.f32.mrb[0].mxu0
        %v4377 = vadd.f32 %v4207, %v4376
        %v4378 = vpop.f32.mrb[0].mxu0
        %v4379 = vadd.f32 %v4203, %v4378
        %v4380 = vpop.f32.mrb[0].mxu0
        %v4381 = vadd.f32 %v4207, %v4380
        %4382 = vmatprep.mubr.bf16.mxu0 0
        %4383 = vmatmul.mubr.bf16.gmra.mrb[0].mxu0 %v4172
        %v4384 = vpop.f32.mrb[0].mxu0
        %v4385 = vadd.f32 %v4203, %v4384
        %v4386 = vpop.f32.mrb[0].mxu0
        %v4387 = vadd.f32 %v4207, %v4386
        %v4388 = vpop.f32.mrb[0].mxu0
        %v4389 = vadd.f32 %v4203, %v4388
        %v4390 = vpop.f32.mrb[0].mxu0
        %v4391 = vadd.f32 %v4207, %v4390
        %4392 = vmatprep.mubr.bf16.mxu0 0
        %4393 = vmatmul.mubr.bf16.gmra.mrb[0].mxu0 %v4173
        %v4394 = vpop.f32.mrb[0].mxu0
        %v4395 = vadd.f32 %v4203, %v4394
        %v4396 = vpop.f32.mrb[0].mxu0
        %v4397 = vadd.f32 %v4207, %v4396
        %v4398 = vpop.f32.mrb[0].mxu0
        %v4399 = vadd.f32 %v4203, %v4398
        %v4400 = vpop.f32.mrb[0].mxu0
        %v4401 = vadd.f32 %v4207, %v4400
        %4402 = vmatprep.mubr.bf16.mxu0 0
        %4403 = vmatmul.mubr.bf16.gmra.mrb[0].mxu0 %v4174
        %v4404 = vpop.f32.mrb[0].mxu0
        %v4405 = vadd.f32 %v4203, %v4404
        %v4406 = vpop.f32.mrb[0].mxu0
        %v4407 = vadd.f32 %v4207, %v4406
        %v4408 = vpop.f32.mrb[0].mxu0
        %v4409 = vadd.f32 %v4203, %v4408
        %v4410 = vpop.f32.mrb[0].mxu0
        %v4411 = vadd.f32 %v4207, %v4410
        %4412 = vmatprep.mubr.bf16.mxu0 0
        %4413 = vmatmul.mubr.bf16.gmra.mrb[0].mxu0 %v4175
        %v4414 = vpop.f32.mrb[0].mxu0
        %v4415 = vadd.f32 %v4203, %v4414
        %v4416 = vpop.f32.mrb[0].mxu0
        %v4417 = vadd.f32 %v4207, %v4416
        %v4418 = vpop.f32.mrb[0].mxu0
        %v4419 = vadd.f32 %v4203, %v4418
        %v4420 = vpop.f32.mrb[0].mxu0
        %v4421 = vadd.f32 %v4207, %v4420
        %4422 = vmatprep.mubr.bf16.mxu0 0
        %4423 = vmatmul.mubr.bf16.gmra.mrb[0].mxu0 %v4176
        %v4424 = vpop.f32.mrb[0].mxu0
        %v4425 = vadd.f32 %v4203, %v4424
        %v4426 = vpop.f32.mrb[0].mxu0
        %v4427 = vadd.f32 %v4207, %v4426
        %v4428 = vpop.f32.mrb[0].mxu0
        %v4429 = vadd.f32 %v4203, %v4428
        %v4430 = vpop.f32.mrb[0].mxu0
        %v4431 = vadd.f32 %v4207, %v4430
        %4432 = vmatprep.mubr.bf16.mxu0 0
        %4433 = vmatmul.mubr.bf16.gmra.mrb[0].mxu0 %v4177
        %v4434 = vpop.f32.mrb[0].mxu0
        %v4435 = vadd.f32 %v4203, %v4434
        %v4436 = vpop.f32.mrb[0].mxu0
        %v4437 = vadd.f32 %v4207, %v4436
        %v4438 = vpop.f32.mrb[0].mxu0
        %v4439 = vadd.f32 %v4203, %v4438
        %v4440 = vpop.f32.mrb[0].mxu0
        %v4441 = vadd.f32 %v4207, %v4440
        %4442 = vmatprep.mubr.bf16.mxu0 0
        %4443 = vmatmul.mubr.bf16.gmra.mrb[0].mxu0 %v4178
        %v4444 = vpop.f32.mrb[0].mxu0
        %v4445 = vadd.f32 %v4203, %v4444
        %v4446 = vpop.f32.mrb[0].mxu0
        %v4447 = vadd.f32 %v4207, %v4446
        %v4448 = vpop.f32.mrb[0].mxu0
        %v4449 = vadd.f32 %v4203, %v4448
        %v4450 = vpop.f32.mrb[0].mxu0
        %v4451 = vadd.f32 %v4207, %v4450
        %4452 = vmatprep.mubr.bf16.mxu0 0
        %4453 = vmatmul.mubr.bf16.gmra.mrb[0].mxu0 %v4179
        %v4454 = vpop.f32.mrb[0].mxu0
        %v4455 = vadd.f32 %v4203, %v4454
        %v4456 = vpop.f32.mrb[0].mxu0
        %v4457 = vadd.f32 %v4207, %v4456
        %v4458 = vpop.f32.mrb[0].mxu0
        %v4459 = vadd.f32 %v4203, %v4458
        %v4460 = vpop.f32.mrb[0].mxu0
        %v4461 = vadd.f32 %v4207, %v4460
        %4462 = vmatprep.mubr.bf16.mxu0 0
        %4463 = vmatmul.mubr.bf16.gmra.mrb[0].mxu0 %v4180
        %v4464 = vpop.f32.mrb[0].mxu0
        %v4465 = vadd.f32 %v4203, %v4464
        %v4466 = vpop.f32.mrb[0].mxu0
        %v4467 = vadd.f32 %v4207, %v4466
        %v4468 = vpop.f32.mrb[0].mxu0
        %v4469 = vadd.f32 %v4203, %v4468
        %v4470 = vpop.f32.mrb[0].mxu0
        %v4471 = vadd.f32 %v4207, %v4470
        %4472 = vmatprep.mubr.bf16.mxu0 0
        %4473 = vmatmul.mubr.bf16.gmra.mrb[0].mxu0 %v4181
        %v4474 = vpop.f32.mrb[0].mxu0
        %v4475 = vadd.f32 %v4203, %v4474
        %v4476 = vpop.f32.mrb[0].mxu0
        %v4477 = vadd.f32 %v4207, %v4476
        %v4478 = vpop.f32.mrb[0].mxu0
        %v4479 = vadd.f32 %v4203, %v4478
        %v4480 = vpop.f32.mrb[0].mxu0
        %v4481 = vadd.f32 %v4207, %v4480
        %4482 = vdwg.mxu0
        %v4483 = vmul.f32 %v4325, %v4325
        %v4484 = vmul.f32 %v4327, %v4327
        %v4485 = vmul.f32 %v4329, %v4329
        %v4486 = vmul.f32 %v4331, %v4331
        %v4487 = vmul.f32 %v4335, %v4335
        %v4488 = vmul.f32 %v4337, %v4337
        %v4489 = vmul.f32 %v4339, %v4339
        %v4490 = vmul.f32 %v4341, %v4341
        %v4491 = vmul.f32 %v4345, %v4345
        %v4492 = vmul.f32 %v4347, %v4347
        %v4493 = vmul.f32 %v4349, %v4349
        %v4494 = vmul.f32 %v4351, %v4351
        %v4495 = vmul.f32 %v4355, %v4355
        %v4496 = vmul.f32 %v4357, %v4357
        %v4497 = vmul.f32 %v4359, %v4359
        %v4498 = vmul.f32 %v4361, %v4361
        %v4499 = vmul.f32 %v4365, %v4365
        %v4500 = vmul.f32 %v4367, %v4367
        %v4501 = vmul.f32 %v4369, %v4369
        %v4502 = vmul.f32 %v4371, %v4371
        %v4503 = vmul.f32 %v4375, %v4375
        %v4504 = vmul.f32 %v4377, %v4377
        %v4505 = vmul.f32 %v4379, %v4379
        %v4506 = vmul.f32 %v4381, %v4381
        %v4507 = vmul.f32 %v4385, %v4385
        %v4508 = vmul.f32 %v4387, %v4387
        %v4509 = vmul.f32 %v4389, %v4389
        %v4510 = vmul.f32 %v4391, %v4391
        %v4511 = vmul.f32 %v4395, %v4395
        %v4512 = vmul.f32 %v4397, %v4397
        %v4513 = vmul.f32 %v4399, %v4399
        %v4514 = vmul.f32 %v4401, %v4401
        %v4515 = vmul.f32 %v4405, %v4405
        %v4516 = vmul.f32 %v4407, %v4407
        %v4517 = vmul.f32 %v4409, %v4409
        %v4518 = vmul.f32 %v4411, %v4411
        %v4519 = vmul.f32 %v4415, %v4415
        %v4520 = vmul.f32 %v4417, %v4417
        %v4521 = vmul.f32 %v4419, %v4419
        %v4522 = vmul.f32 %v4421, %v4421
        %v4523 = vmul.f32 %v4425, %v4425
        %v4524 = vmul.f32 %v4427, %v4427
        %v4525 = vmul.f32 %v4429, %v4429
        %v4526 = vmul.f32 %v4431, %v4431
        %v4527 = vmul.f32 %v4435, %v4435
        %v4528 = vmul.f32 %v4437, %v4437
        %v4529 = vmul.f32 %v4439, %v4439
        %v4530 = vmul.f32 %v4441, %v4441
        %v4531 = vmul.f32 %v4445, %v4445
        %v4532 = vmul.f32 %v4447, %v4447
        %v4533 = vmul.f32 %v4449, %v4449
        %v4534 = vmul.f32 %v4451, %v4451
        %v4535 = vmul.f32 %v4455, %v4455
        %v4536 = vmul.f32 %v4457, %v4457
        %v4537 = vmul.f32 %v4459, %v4459
        %v4538 = vmul.f32 %v4461, %v4461
        %v4539 = vmul.f32 %v4465, %v4465
        %v4540 = vmul.f32 %v4467, %v4467
        %v4541 = vmul.f32 %v4469, %v4469
        %v4542 = vmul.f32 %v4471, %v4471
        %v4543 = vmul.f32 %v4475, %v4475
        %v4544 = vmul.f32 %v4477, %v4477
        %v4545 = vmul.f32 %v4479, %v4479
        %v4546 = vmul.f32 %v4481, %v4481
        %v4547 = vmul.f32 %v4325, %v4483
        %v4548 = vmul.f32 %v4327, %v4484
        %v4549 = vmul.f32 %v4329, %v4485
        %v4550 = vmul.f32 %v4331, %v4486
        %v4551 = vmul.f32 %v4335, %v4487
        %v4552 = vmul.f32 %v4337, %v4488
        %v4553 = vmul.f32 %v4339, %v4489
        %v4554 = vmul.f32 %v4341, %v4490
        %v4555 = vmul.f32 %v4345, %v4491
        %v4556 = vmul.f32 %v4347, %v4492
        %v4557 = vmul.f32 %v4349, %v4493
        %v4558 = vmul.f32 %v4351, %v4494
        %v4559 = vmul.f32 %v4355, %v4495
        %v4560 = vmul.f32 %v4357, %v4496
        %v4561 = vmul.f32 %v4359, %v4497
        %v4562 = vmul.f32 %v4361, %v4498
        %v4563 = vmul.f32 %v4365, %v4499
        %v4564 = vmul.f32 %v4367, %v4500
        %v4565 = vmul.f32 %v4369, %v4501
        %v4566 = vmul.f32 %v4371, %v4502
        %v4567 = vmul.f32 %v4375, %v4503
        %v4568 = vmul.f32 %v4377, %v4504
        %v4569 = vmul.f32 %v4379, %v4505
        %v4570 = vmul.f32 %v4381, %v4506
        %v4571 = vmul.f32 %v4385, %v4507
        %v4572 = vmul.f32 %v4387, %v4508
        %v4573 = vmul.f32 %v4389, %v4509
        %v4574 = vmul.f32 %v4391, %v4510
        %v4575 = vmul.f32 %v4395, %v4511
        %v4576 = vmul.f32 %v4397, %v4512
        %v4577 = vmul.f32 %v4399, %v4513
        %v4578 = vmul.f32 %v4401, %v4514
        %v4579 = vmul.f32 %v4405, %v4515
        %v4580 = vmul.f32 %v4407, %v4516
        %v4581 = vmul.f32 %v4409, %v4517
        %v4582 = vmul.f32 %v4411, %v4518
        %v4583 = vmul.f32 %v4415, %v4519
        %v4584 = vmul.f32 %v4417, %v4520
        %v4585 = vmul.f32 %v4419, %v4521
        %v4586 = vmul.f32 %v4421, %v4522
        %v4587 = vmul.f32 %v4425, %v4523
        %v4588 = vmul.f32 %v4427, %v4524
        %v4589 = vmul.f32 %v4429, %v4525
        %v4590 = vmul.f32 %v4431, %v4526
        %v4591 = vmul.f32 %v4435, %v4527
        %v4592 = vmul.f32 %v4437, %v4528
        %v4593 = vmul.f32 %v4439, %v4529
        %v4594 = vmul.f32 %v4441, %v4530
        %v4595 = vmul.f32 %v4445, %v4531
        %v4596 = vmul.f32 %v4447, %v4532
        %v4597 = vmul.f32 %v4449, %v4533
        %v4598 = vmul.f32 %v4451, %v4534
        %v4599 = vmul.f32 %v4455, %v4535
        %v4600 = vmul.f32 %v4457, %v4536
        %v4601 = vmul.f32 %v4459, %v4537
        %v4602 = vmul.f32 %v4461, %v4538
        %v4603 = vmul.f32 %v4465, %v4539
        %v4604 = vmul.f32 %v4467, %v4540
        %v4605 = vmul.f32 %v4469, %v4541
        %v4606 = vmul.f32 %v4471, %v4542
        %v4607 = vmul.f32 %v4475, %v4543
        %v4608 = vmul.f32 %v4477, %v4544
        %v4609 = vmul.f32 %v4479, %v4545
        %v4610 = vmul.f32 %v4481, %v4546
        %v4611 = vmul.f32 %v4547, 0.044715
        %v4612 = vmul.f32 %v4548, 0.044715
        %v4613 = vmul.f32 %v4549, 0.044715
        %v4614 = vmul.f32 %v4550, 0.044715
        %v4615 = vmul.f32 %v4551, 0.044715
        %v4616 = vmul.f32 %v4552, 0.044715
        %v4617 = vmul.f32 %v4553, 0.044715
        %v4618 = vmul.f32 %v4554, 0.044715
        %v4619 = vmul.f32 %v4555, 0.044715
        %v4620 = vmul.f32 %v4556, 0.044715
        %v4621 = vmul.f32 %v4557, 0.044715
        %v4622 = vmul.f32 %v4558, 0.044715
        %v4623 = vmul.f32 %v4559, 0.044715
        %v4624 = vmul.f32 %v4560, 0.044715
        %v4625 = vmul.f32 %v4561, 0.044715
        %v4626 = vmul.f32 %v4562, 0.044715
        %v4627 = vmul.f32 %v4563, 0.044715
        %v4628 = vmul.f32 %v4564, 0.044715
        %v4629 = vmul.f32 %v4565, 0.044715
        %v4630 = vmul.f32 %v4566, 0.044715
        %v4631 = vmul.f32 %v4567, 0.044715
        %v4632 = vmul.f32 %v4568, 0.044715
        %v4633 = vmul.f32 %v4569, 0.044715
        %v4634 = vmul.f32 %v4570, 0.044715
        %v4635 = vmul.f32 %v4571, 0.044715
        %v4636 = vmul.f32 %v4572, 0.044715
        %v4637 = vmul.f32 %v4573, 0.044715
        %v4638 = vmul.f32 %v4574, 0.044715
        %v4639 = vmul.f32 %v4575, 0.044715
        %v4640 = vmul.f32 %v4576, 0.044715
        %v4641 = vmul.f32 %v4577, 0.044715
        %v4642 = vmul.f32 %v4578, 0.044715
        %v4643 = vmul.f32 %v4579, 0.044715
        %v4644 = vmul.f32 %v4580, 0.044715
        %v4645 = vmul.f32 %v4581, 0.044715
        %v4646 = vmul.f32 %v4582, 0.044715
        %v4647 = vmul.f32 %v4583, 0.044715
        %v4648 = vmul.f32 %v4584, 0.044715
        %v4649 = vmul.f32 %v4585, 0.044715
        %v4650 = vmul.f32 %v4586, 0.044715
        %v4651 = vmul.f32 %v4587, 0.044715
        %v4652 = vmul.f32 %v4588, 0.044715
        %v4653 = vmul.f32 %v4589, 0.044715
        %v4654 = vmul.f32 %v4590, 0.044715
        %v4655 = vmul.f32 %v4591, 0.044715
        %v4656 = vmul.f32 %v4592, 0.044715
        %v4657 = vmul.f32 %v4593, 0.044715
        %v4658 = vmul.f32 %v4594, 0.044715
        %v4659 = vmul.f32 %v4595, 0.044715
        %v4660 = vmul.f32 %v4596, 0.044715
        %v4661 = vmul.f32 %v4597, 0.044715
        %v4662 = vmul.f32 %v4598, 0.044715
        %v4663 = vmul.f32 %v4599, 0.044715
        %v4664 = vmul.f32 %v4600, 0.044715
        %v4665 = vmul.f32 %v4601, 0.044715
        %v4666 = vmul.f32 %v4602, 0.044715
        %v4667 = vmul.f32 %v4603, 0.044715
        %v4668 = vmul.f32 %v4604, 0.044715
        %v4669 = vmul.f32 %v4605, 0.044715
        %v4670 = vmul.f32 %v4606, 0.044715
        %v4671 = vmul.f32 %v4607, 0.044715
        %v4672 = vmul.f32 %v4608, 0.044715
        %v4673 = vmul.f32 %v4609, 0.044715
        %v4674 = vmul.f32 %v4610, 0.044715
        %v4675 = vadd.f32 %v4325, %v4611
        %v4676 = vadd.f32 %v4327, %v4612
        %v4677 = vadd.f32 %v4329, %v4613
        %v4678 = vadd.f32 %v4331, %v4614
        %v4679 = vadd.f32 %v4335, %v4615
        %v4680 = vadd.f32 %v4337, %v4616
        %v4681 = vadd.f32 %v4339, %v4617
        %v4682 = vadd.f32 %v4341, %v4618
        %v4683 = vadd.f32 %v4345, %v4619
        %v4684 = vadd.f32 %v4347, %v4620
        %v4685 = vadd.f32 %v4349, %v4621
        %v4686 = vadd.f32 %v4351, %v4622
        %v4687 = vadd.f32 %v4355, %v4623
        %v4688 = vadd.f32 %v4357, %v4624
        %v4689 = vadd.f32 %v4359, %v4625
        %v4690 = vadd.f32 %v4361, %v4626
        %v4691 = vadd.f32 %v4365, %v4627
        %v4692 = vadd.f32 %v4367, %v4628
        %v4693 = vadd.f32 %v4369, %v4629
        %v4694 = vadd.f32 %v4371, %v4630
        %v4695 = vadd.f32 %v4375, %v4631
        %v4696 = vadd.f32 %v4377, %v4632
        %v4697 = vadd.f32 %v4379, %v4633
        %v4698 = vadd.f32 %v4381, %v4634
        %v4699 = vadd.f32 %v4385, %v4635
        %v4700 = vadd.f32 %v4387, %v4636
        %v4701 = vadd.f32 %v4389, %v4637
        %v4702 = vadd.f32 %v4391, %v4638
        %v4703 = vadd.f32 %v4395, %v4639
        %v4704 = vadd.f32 %v4397, %v4640
        %v4705 = vadd.f32 %v4399, %v4641
        %v4706 = vadd.f32 %v4401, %v4642
        %v4707 = vadd.f32 %v4405, %v4643
        %v4708 = vadd.f32 %v4407, %v4644
        %v4709 = vadd.f32 %v4409, %v4645
        %v4710 = vadd.f32 %v4411, %v4646
        %v4711 = vadd.f32 %v4415, %v4647
        %v4712 = vadd.f32 %v4417, %v4648
        %v4713 = vadd.f32 %v4419, %v4649
        %v4714 = vadd.f32 %v4421, %v4650
        %v4715 = vadd.f32 %v4425, %v4651
        %v4716 = vadd.f32 %v4427, %v4652
        %v4717 = vadd.f32 %v4429, %v4653
        %v4718 = vadd.f32 %v4431, %v4654
        %v4719 = vadd.f32 %v4435, %v4655
        %v4720 = vadd.f32 %v4437, %v4656
        %v4721 = vadd.f32 %v4439, %v4657
        %v4722 = vadd.f32 %v4441, %v4658
        %v4723 = vadd.f32 %v4445, %v4659
        %v4724 = vadd.f32 %v4447, %v4660
        %v4725 = vadd.f32 %v4449, %v4661
        %v4726 = vadd.f32 %v4451, %v4662
        %v4727 = vadd.f32 %v4455, %v4663
        %v4728 = vadd.f32 %v4457, %v4664
        %v4729 = vadd.f32 %v4459, %v4665
        %v4730 = vadd.f32 %v4461, %v4666
        %v4731 = vadd.f32 %v4465, %v4667
        %v4732 = vadd.f32 %v4467, %v4668
        %v4733 = vadd.f32 %v4469, %v4669
        %v4734 = vadd.f32 %v4471, %v4670
        %v4735 = vadd.f32 %v4475, %v4671
        %v4736 = vadd.f32 %v4477, %v4672
        %v4737 = vadd.f32 %v4479, %v4673
        %v4738 = vadd.f32 %v4481, %v4674
        %v4739 = vmul.f32 %v4675, 0.7978846
        %v4740 = vmul.f32 %v4676, 0.7978846
        %v4741 = vmul.f32 %v4677, 0.7978846
        %v4742 = vmul.f32 %v4678, 0.7978846
        %v4743 = vmul.f32 %v4679, 0.7978846
        %v4744 = vmul.f32 %v4680, 0.7978846
        %v4745 = vmul.f32 %v4681, 0.7978846
        %v4746 = vmul.f32 %v4682, 0.7978846
        %v4747 = vmul.f32 %v4683, 0.7978846
        %v4748 = vmul.f32 %v4684, 0.7978846
        %v4749 = vmul.f32 %v4685, 0.7978846
        %v4750 = vmul.f32 %v4686, 0.7978846
        %v4751 = vmul.f32 %v4687, 0.7978846
        %v4752 = vmul.f32 %v4688, 0.7978846
        %v4753 = vmul.f32 %v4689, 0.7978846
        %v4754 = vmul.f32 %v4690, 0.7978846
        %v4755 = vmul.f32 %v4691, 0.7978846
        %v4756 = vmul.f32 %v4692, 0.7978846
        %v4757 = vmul.f32 %v4693, 0.7978846
        %v4758 = vmul.f32 %v4694, 0.7978846
        %v4759 = vmul.f32 %v4695, 0.7978846
        %v4760 = vmul.f32 %v4696, 0.7978846
        %v4761 = vmul.f32 %v4697, 0.7978846
        %v4762 = vmul.f32 %v4698, 0.7978846
        %v4763 = vmul.f32 %v4699, 0.7978846
        %v4764 = vmul.f32 %v4700, 0.7978846
        %v4765 = vmul.f32 %v4701, 0.7978846
        %v4766 = vmul.f32 %v4702, 0.7978846
        %v4767 = vmul.f32 %v4703, 0.7978846
        %v4768 = vmul.f32 %v4704, 0.7978846
        %v4769 = vmul.f32 %v4705, 0.7978846
        %v4770 = vmul.f32 %v4706, 0.7978846
        %v4771 = vmul.f32 %v4707, 0.7978846
        %v4772 = vmul.f32 %v4708, 0.7978846
        %v4773 = vmul.f32 %v4709, 0.7978846
        %v4774 = vmul.f32 %v4710, 0.7978846
        %v4775 = vmul.f32 %v4711, 0.7978846
        %v4776 = vmul.f32 %v4712, 0.7978846
        %v4777 = vmul.f32 %v4713, 0.7978846
        %v4778 = vmul.f32 %v4714, 0.7978846
        %v4779 = vmul.f32 %v4715, 0.7978846
        %v4780 = vmul.f32 %v4716, 0.7978846
        %v4781 = vmul.f32 %v4717, 0.7978846
        %v4782 = vmul.f32 %v4718, 0.7978846
        %v4783 = vmul.f32 %v4719, 0.7978846
        %v4784 = vmul.f32 %v4720, 0.7978846
        %v4785 = vmul.f32 %v4721, 0.7978846
        %v4786 = vmul.f32 %v4722, 0.7978846
        %v4787 = vmul.f32 %v4723, 0.7978846
        %v4788 = vmul.f32 %v4724, 0.7978846
        %v4789 = vmul.f32 %v4725, 0.7978846
        %v4790 = vmul.f32 %v4726, 0.7978846
        %v4791 = vmul.f32 %v4727, 0.7978846
        %v4792 = vmul.f32 %v4728, 0.7978846
        %v4793 = vmul.f32 %v4729, 0.7978846
        %v4794 = vmul.f32 %v4730, 0.7978846
        %v4795 = vmul.f32 %v4731, 0.7978846
        %v4796 = vmul.f32 %v4732, 0.7978846
        %v4797 = vmul.f32 %v4733, 0.7978846
        %v4798 = vmul.f32 %v4734, 0.7978846
        %v4799 = vmul.f32 %v4735, 0.7978846
        %v4800 = vmul.f32 %v4736, 0.7978846
        %v4801 = vmul.f32 %v4737, 0.7978846
        %v4802 = vmul.f32 %v4738, 0.7978846
        %v4803 = vtanh.pop %v4739
        %v4804 = vtanh.pop %v4740
        %v4805 = vtanh.pop %v4741
        %v4806 = vtanh.pop %v4742
        %v4807 = vtanh.pop %v4743
        %v4808 = vtanh.pop %v4744
        %v4809 = vtanh.pop %v4745
        %v4810 = vtanh.pop %v4746
        %v4811 = vtanh.pop %v4747
        %v4812 = vtanh.pop %v4748
        %v4813 = vtanh.pop %v4749
        %v4814 = vtanh.pop %v4750
        %v4815 = vtanh.pop %v4751
        %v4816 = vtanh.pop %v4752
        %v4817 = vtanh.pop %v4753
        %v4818 = vtanh.pop %v4754
        %v4819 = vtanh.pop %v4755
        %v4820 = vtanh.pop %v4756
        %v4821 = vtanh.pop %v4757
        %v4822 = vtanh.pop %v4758
        %v4823 = vtanh.pop %v4759
        %v4824 = vtanh.pop %v4760
        %v4825 = vtanh.pop %v4761
        %v4826 = vtanh.pop %v4762
        %v4827 = vtanh.pop %v4763
        %v4828 = vtanh.pop %v4764
        %v4829 = vtanh.pop %v4765
        %v4830 = vtanh.pop %v4766
        %v4831 = vtanh.pop %v4767
        %v4832 = vtanh.pop %v4768
        %v4833 = vtanh.pop %v4769
        %v4834 = vtanh.pop %v4770
        %v4835 = vtanh.pop %v4771
        %v4836 = vtanh.pop %v4772
        %v4837 = vtanh.pop %v4773
        %v4838 = vtanh.pop %v4774
        %v4839 = vtanh.pop %v4775
        %v4840 = vtanh.pop %v4776
        %v4841 = vtanh.pop %v4777
        %v4842 = vtanh.pop %v4778
        %v4843 = vtanh.pop %v4779
        %v4844 = vtanh.pop %v4780
        %v4845 = vtanh.pop %v4781
        %v4846 = vtanh.pop %v4782
        %v4847 = vtanh.pop %v4783
        %v4848 = vtanh.pop %v4784
        %v4849 = vtanh.pop %v4785
        %v4850 = vtanh.pop %v4786
        %v4851 = vtanh.pop %v4787
        %v4852 = vtanh.pop %v4788
        %v4853 = vtanh.pop %v4789
        %v4854 = vtanh.pop %v4790
        %v4855 = vtanh.pop %v4791
        %v4856 = vtanh.pop %v4792
        %v4857 = vtanh.pop %v4793
        %v4858 = vtanh.pop %v4794
        %v4859 = vtanh.pop %v4795
        %v4860 = vtanh.pop %v4796
        %v4861 = vtanh.pop %v4797
        %v4862 = vtanh.pop %v4798
        %v4863 = vtanh.pop %v4799
        %v4864 = vtanh.pop %v4800
        %v4865 = vtanh.pop %v4801
        %v4866 = vtanh.pop %v4802
        %v4867 = vadd.f32 %v4803, 1.0
        %v4868 = vadd.f32 %v4804, 1.0
        %v4869 = vadd.f32 %v4805, 1.0
        %v4870 = vadd.f32 %v4806, 1.0
        %v4871 = vadd.f32 %v4807, 1.0
        %v4872 = vadd.f32 %v4808, 1.0
        %v4873 = vadd.f32 %v4809, 1.0
        %v4874 = vadd.f32 %v4810, 1.0
        %v4875 = vadd.f32 %v4811, 1.0
        %v4876 = vadd.f32 %v4812, 1.0
        %v4877 = vadd.f32 %v4813, 1.0
        %v4878 = vadd.f32 %v4814, 1.0
        %v4879 = vadd.f32 %v4815, 1.0
        %v4880 = vadd.f32 %v4816, 1.0
        %v4881 = vadd.f32 %v4817, 1.0
        %v4882 = vadd.f32 %v4818, 1.0
        %v4883 = vadd.f32 %v4819, 1.0
        %v4884 = vadd.f32 %v4820, 1.0
        %v4885 = vadd.f32 %v4821, 1.0
        %v4886 = vadd.f32 %v4822, 1.0
        %v4887 = vadd.f32 %v4823, 1.0
        %v4888 = vadd.f32 %v4824, 1.0
        %v4889 = vadd.f32 %v4825, 1.0
        %v4890 = vadd.f32 %v4826, 1.0
        %v4891 = vadd.f32 %v4827, 1.0
        %v4892 = vadd.f32 %v4828, 1.0
        %v4893 = vadd.f32 %v4829, 1.0
        %v4894 = vadd.f32 %v4830, 1.0
        %v4895 = vadd.f32 %v4831, 1.0
        %v4896 = vadd.f32 %v4832, 1.0
        %v4897 = vadd.f32 %v4833, 1.0
        %v4898 = vadd.f32 %v4834, 1.0
        %v4899 = vadd.f32 %v4835, 1.0
        %v4900 = vadd.f32 %v4836, 1.0
        %v4901 = vadd.f32 %v4837, 1.0
        %v4902 = vadd.f32 %v4838, 1.0
        %v4903 = vadd.f32 %v4839, 1.0
        %v4904 = vadd.f32 %v4840, 1.0
        %v4905 = vadd.f32 %v4841, 1.0
        %v4906 = vadd.f32 %v4842, 1.0
        %v4907 = vadd.f32 %v4843, 1.0
        %v4908 = vadd.f32 %v4844, 1.0
        %v4909 = vadd.f32 %v4845, 1.0
        %v4910 = vadd.f32 %v4846, 1.0
        %v4911 = vadd.f32 %v4847, 1.0
        %v4912 = vadd.f32 %v4848, 1.0
        %v4913 = vadd.f32 %v4849, 1.0
        %v4914 = vadd.f32 %v4850, 1.0
        %v4915 = vadd.f32 %v4851, 1.0
        %v4916 = vadd.f32 %v4852, 1.0
        %v4917 = vadd.f32 %v4853, 1.0
        %v4918 = vadd.f32 %v4854, 1.0
        %v4919 = vadd.f32 %v4855, 1.0
        %v4920 = vadd.f32 %v4856, 1.0
        %v4921 = vadd.f32 %v4857, 1.0
        %v4922 = vadd.f32 %v4858, 1.0
        %v4923 = vadd.f32 %v4859, 1.0
        %v4924 = vadd.f32 %v4860, 1.0
        %v4925 = vadd.f32 %v4861, 1.0
        %v4926 = vadd.f32 %v4862, 1.0
        %v4927 = vadd.f32 %v4863, 1.0
        %v4928 = vadd.f32 %v4864, 1.0
        %v4929 = vadd.f32 %v4865, 1.0
        %v4930 = vadd.f32 %v4866, 1.0
        %v4931 = vmul.f32 %v4867, 0.5
        %v4932 = vmul.f32 %v4868, 0.5
        %v4933 = vmul.f32 %v4869, 0.5
        %v4934 = vmul.f32 %v4870, 0.5
        %v4935 = vmul.f32 %v4871, 0.5
        %v4936 = vmul.f32 %v4872, 0.5
        %v4937 = vmul.f32 %v4873, 0.5
        %v4938 = vmul.f32 %v4874, 0.5
        %v4939 = vmul.f32 %v4875, 0.5
        %v4940 = vmul.f32 %v4876, 0.5
        %v4941 = vmul.f32 %v4877, 0.5
        %v4942 = vmul.f32 %v4878, 0.5
        %v4943 = vmul.f32 %v4879, 0.5
        %v4944 = vmul.f32 %v4880, 0.5
        %v4945 = vmul.f32 %v4881, 0.5
        %v4946 = vmul.f32 %v4882, 0.5
        %v4947 = vmul.f32 %v4883, 0.5
        %v4948 = vmul.f32 %v4884, 0.5
        %v4949 = vmul.f32 %v4885, 0.5
        %v4950 = vmul.f32 %v4886, 0.5
        %v4951 = vmul.f32 %v4887, 0.5
        %v4952 = vmul.f32 %v4888, 0.5
        %v4953 = vmul.f32 %v4889, 0.5
        %v4954 = vmul.f32 %v4890, 0.5
        %v4955 = vmul.f32 %v4891, 0.5
        %v4956 = vmul.f32 %v4892, 0.5
        %v4957 = vmul.f32 %v4893, 0.5
        %v4958 = vmul.f32 %v4894, 0.5
        %v4959 = vmul.f32 %v4895, 0.5
        %v4960 = vmul.f32 %v4896, 0.5
        %v4961 = vmul.f32 %v4897, 0.5
        %v4962 = vmul.f32 %v4898, 0.5
        %v4963 = vmul.f32 %v4899, 0.5
        %v4964 = vmul.f32 %v4900, 0.5
        %v4965 = vmul.f32 %v4901, 0.5
        %v4966 = vmul.f32 %v4902, 0.5
        %v4967 = vmul.f32 %v4903, 0.5
        %v4968 = vmul.f32 %v4904, 0.5
        %v4969 = vmul.f32 %v4905, 0.5
        %v4970 = vmul.f32 %v4906, 0.5
        %v4971 = vmul.f32 %v4907, 0.5
        %v4972 = vmul.f32 %v4908, 0.5
        %v4973 = vmul.f32 %v4909, 0.5
        %v4974 = vmul.f32 %v4910, 0.5
        %v4975 = vmul.f32 %v4911, 0.5
        %v4976 = vmul.f32 %v4912, 0.5
        %v4977 = vmul.f32 %v4913, 0.5
        %v4978 = vmul.f32 %v4914, 0.5
        %v4979 = vmul.f32 %v4915, 0.5
        %v4980 = vmul.f32 %v4916, 0.5
        %v4981 = vmul.f32 %v4917, 0.5
        %v4982 = vmul.f32 %v4918, 0.5
        %v4983 = vmul.f32 %v4919, 0.5
        %v4984 = vmul.f32 %v4920, 0.5
        %v4985 = vmul.f32 %v4921, 0.5
        %v4986 = vmul.f32 %v4922, 0.5
        %v4987 = vmul.f32 %v4923, 0.5
        %v4988 = vmul.f32 %v4924, 0.5
        %v4989 = vmul.f32 %v4925, 0.5
        %v4990 = vmul.f32 %v4926, 0.5
        %v4991 = vmul.f32 %v4927, 0.5
        %v4992 = vmul.f32 %v4928, 0.5
        %v4993 = vmul.f32 %v4929, 0.5
        %v4994 = vmul.f32 %v4930, 0.5
        %v4995 = vmul.f32 %v4325, %v4931
        %v4996 = vmul.f32 %v4327, %v4932
        %v4997 = vmul.f32 %v4329, %v4933
        %v4998 = vmul.f32 %v4331, %v4934
        %v4999 = vmul.f32 %v4335, %v4935
        %v5000 = vmul.f32 %v4337, %v4936
        %v5001 = vmul.f32 %v4339, %v4937
        %v5002 = vmul.f32 %v4341, %v4938
        %v5003 = vmul.f32 %v4345, %v4939
        %v5004 = vmul.f32 %v4347, %v4940
        %v5005 = vmul.f32 %v4349, %v4941
        %v5006 = vmul.f32 %v4351, %v4942
        %v5007 = vmul.f32 %v4355, %v4943
        %v5008 = vmul.f32 %v4357, %v4944
        %v5009 = vmul.f32 %v4359, %v4945
        %v5010 = vmul.f32 %v4361, %v4946
        %v5011 = vmul.f32 %v4365, %v4947
        %v5012 = vmul.f32 %v4367, %v4948
        %v5013 = vmul.f32 %v4369, %v4949
        %v5014 = vmul.f32 %v4371, %v4950
        %v5015 = vmul.f32 %v4375, %v4951
        %v5016 = vmul.f32 %v4377, %v4952
        %v5017 = vmul.f32 %v4379, %v4953
        %v5018 = vmul.f32 %v4381, %v4954
        %v5019 = vmul.f32 %v4385, %v4955
        %v5020 = vmul.f32 %v4387, %v4956
        %v5021 = vmul.f32 %v4389, %v4957
        %v5022 = vmul.f32 %v4391, %v4958
        %v5023 = vmul.f32 %v4395, %v4959
        %v5024 = vmul.f32 %v4397, %v4960
        %v5025 = vmul.f32 %v4399, %v4961
        %v5026 = vmul.f32 %v4401, %v4962
        %v5027 = vmul.f32 %v4405, %v4963
        %v5028 = vmul.f32 %v4407, %v4964
        %v5029 = vmul.f32 %v4409, %v4965
        %v5030 = vmul.f32 %v4411, %v4966
        %v5031 = vmul.f32 %v4415, %v4967
        %v5032 = vmul.f32 %v4417, %v4968
        %v5033 = vmul.f32 %v4419, %v4969
        %v5034 = vmul.f32 %v4421, %v4970
        %v5035 = vmul.f32 %v4425, %v4971
        %v5036 = vmul.f32 %v4427, %v4972
        %v5037 = vmul.f32 %v4429, %v4973
        %v5038 = vmul.f32 %v4431, %v4974
        %v5039 = vmul.f32 %v4435, %v4975
        %v5040 = vmul.f32 %v4437, %v4976
        %v5041 = vmul.f32 %v4439, %v4977
        %v5042 = vmul.f32 %v4441, %v4978
        %v5043 = vmul.f32 %v4445, %v4979
        %v5044 = vmul.f32 %v4447, %v4980
        %v5045 = vmul.f32 %v4449, %v4981
        %v5046 = vmul.f32 %v4451, %v4982
        %v5047 = vmul.f32 %v4455, %v4983
        %v5048 = vmul.f32 %v4457, %v4984
        %v5049 = vmul.f32 %v4459, %v4985
        %v5050 = vmul.f32 %v4461, %v4986
        %v5051 = vmul.f32 %v4465, %v4987
        %v5052 = vmul.f32 %v4467, %v4988
        %v5053 = vmul.f32 %v4469, %v4989
        %v5054 = vmul.f32 %v4471, %v4990
        %v5055 = vmul.f32 %v4475, %v4991
        %v5056 = vmul.f32 %v4477, %v4992
        %v5057 = vmul.f32 %v4479, %v4993
        %v5058 = vmul.f32 %v4481, %v4994
        %v5059 = vpack.c.bf16 %v4997, %v4995
        %v5060 = vpack.c.bf16 %v4998, %v4996
        %v5061 = vpack.c.bf16 %v5001, %v4999
        %v5062 = vpack.c.bf16 %v5002, %v5000
        %v5063 = vpack.c.bf16 %v5005, %v5003
        %v5064 = vpack.c.bf16 %v5006, %v5004
        %v5065 = vpack.c.bf16 %v5009, %v5007
        %v5066 = vpack.c.bf16 %v5010, %v5008
        %v5067 = vpack.c.bf16 %v5013, %v5011
        %v5068 = vpack.c.bf16 %v5014, %v5012
        %v5069 = vpack.c.bf16 %v5017, %v5015
        %v5070 = vpack.c.bf16 %v5018, %v5016
        %v5071 = vpack.c.bf16 %v5021, %v5019
        %v5072 = vpack.c.bf16 %v5022, %v5020
        %v5073 = vpack.c.bf16 %v5025, %v5023
        %v5074 = vpack.c.bf16 %v5026, %v5024
        %v5075 = vpack.c.bf16 %v5029, %v5027
        %v5076 = vpack.c.bf16 %v5030, %v5028
        %v5077 = vpack.c.bf16 %v5033, %v5031
        %v5078 = vpack.c.bf16 %v5034, %v5032
        %v5079 = vpack.c.bf16 %v5037, %v5035
        %v5080 = vpack.c.bf16 %v5038, %v5036
        %v5081 = vpack.c.bf16 %v5041, %v5039
        %v5082 = vpack.c.bf16 %v5042, %v5040
        %v5083 = vpack.c.bf16 %v5045, %v5043
        %v5084 = vpack.c.bf16 %v5046, %v5044
        %v5085 = vpack.c.bf16 %v5049, %v5047
        %v5086 = vpack.c.bf16 %v5050, %v5048
        %v5087 = vpack.c.bf16 %v5053, %v5051
        %v5088 = vpack.c.bf16 %v5054, %v5052
        %v5089 = vpack.c.bf16 %v5057, %v5055
        %v5090 = vpack.c.bf16 %v5058, %v5056
        %v5091 = vld [vmem:[#allocation11] sm:$0xf]
        %v5092 = vld [vmem:[#allocation11 + $0x4] sm:$0xf]
        %v5093 = vld [vmem:[#allocation11 + $0x8] sm:$0xf]
        %v5094 = vld [vmem:[#allocation11 + $0xc] sm:$0xf]
        %v5095 = vld [vmem:[#allocation11 + $0x10] sm:$0xf]
        %v5096 = vld [vmem:[#allocation11 + $0x14] sm:$0xf]
        %v5097 = vld [vmem:[#allocation11 + $0x18] sm:$0xf]
        %v5098 = vld [vmem:[#allocation11 + $0x1c] sm:$0xf]
        %v5099 = vld [vmem:[#allocation11 + $0x20] sm:$0xf]
        %v5100 = vld [vmem:[#allocation11 + $0x24] sm:$0xf]
        %v5101 = vld [vmem:[#allocation11 + $0x28] sm:$0xf]
        %v5102 = vld [vmem:[#allocation11 + $0x2c] sm:$0xf]
        %v5103 = vld [vmem:[#allocation11 + $0x30] sm:$0xf]
        %v5104 = vld [vmem:[#allocation11 + $0x34] sm:$0xf]
        %v5105 = vld [vmem:[#allocation11 + $0x38] sm:$0xf]
        %v5106 = vld [vmem:[#allocation11 + $0x3c] sm:$0xf]
        %v5107 = vld [vmem:[#allocation11 + $0x40] sm:$0xf]
        %v5108 = vld [vmem:[#allocation11 + $0x44] sm:$0xf]
        %v5109 = vld [vmem:[#allocation11 + $0x48] sm:$0xf]
        %v5110 = vld [vmem:[#allocation11 + $0x4c] sm:$0xf]
        %v5111 = vld [vmem:[#allocation11 + $0x50] sm:$0xf]
        %v5112 = vld [vmem:[#allocation11 + $0x54] sm:$0xf]
        %v5113 = vld [vmem:[#allocation11 + $0x58] sm:$0xf]
        %v5114 = vld [vmem:[#allocation11 + $0x5c] sm:$0xf]
        %v5115 = vld [vmem:[#allocation11 + $0x60] sm:$0xf]
        %v5116 = vld [vmem:[#allocation11 + $0x64] sm:$0xf]
        %v5117 = vld [vmem:[#allocation11 + $0x68] sm:$0xf]
        %v5118 = vld [vmem:[#allocation11 + $0x6c] sm:$0xf]
        %v5119 = vld [vmem:[#allocation11 + $0x70] sm:$0xf]
        %v5120 = vld [vmem:[#allocation11 + $0x74] sm:$0xf]
        %v5121 = vld [vmem:[#allocation11 + $0x78] sm:$0xf]
        %v5122 = vld [vmem:[#allocation11 + $0x7c] sm:$0xf]
        %v5123 = vld [vmem:[%s15] sm:$0x1]
        %v5125 = vlaneseq
        %v5126 = vshrl.u32 %v5125, 7
        %v5127 = vsub.s32 0, %v5126
        %v5128 = vrot.slane %v5123, %v5127
        %v5162 = vunpack.c.l.b16 %v5091
        %v5163 = vunpack.c.l.b16 %v5092
        %v5164 = vunpack.c.l.b16 %v5093
        %v5165 = vunpack.c.l.b16 %v5094
        %v5166 = vunpack.c.l.b16 %v5095
        %v5167 = vunpack.c.l.b16 %v5096
        %v5168 = vunpack.c.l.b16 %v5097
        %v5169 = vunpack.c.l.b16 %v5098
        %v5170 = vunpack.c.l.b16 %v5099
        %v5171 = vunpack.c.l.b16 %v5100
        %v5172 = vunpack.c.l.b16 %v5101
        %v5173 = vunpack.c.l.b16 %v5102
        %v5174 = vunpack.c.l.b16 %v5103
        %v5175 = vunpack.c.l.b16 %v5104
        %v5176 = vunpack.c.l.b16 %v5105
        %v5177 = vunpack.c.l.b16 %v5106
        %v5178 = vunpack.c.l.b16 %v5107
        %v5179 = vunpack.c.l.b16 %v5108
        %v5180 = vunpack.c.l.b16 %v5109
        %v5181 = vunpack.c.l.b16 %v5110
        %v5182 = vunpack.c.l.b16 %v5111
        %v5183 = vunpack.c.l.b16 %v5112
        %v5184 = vunpack.c.l.b16 %v5113
        %v5185 = vunpack.c.l.b16 %v5114
        %v5186 = vunpack.c.l.b16 %v5115
        %v5187 = vunpack.c.l.b16 %v5116
        %v5188 = vunpack.c.l.b16 %v5117
        %v5189 = vunpack.c.l.b16 %v5118
        %v5190 = vunpack.c.l.b16 %v5119
        %v5191 = vunpack.c.l.b16 %v5120
        %v5192 = vunpack.c.l.b16 %v5121
        %v5193 = vunpack.c.l.b16 %v5122
        %v5194 = vpack.c.b16 %v5163, %v5162
        %v5195 = vpack.c.b16 %v5165, %v5164
        %v5196 = vpack.c.b16 %v5167, %v5166
        %v5197 = vpack.c.b16 %v5169, %v5168
        %v5198 = vpack.c.b16 %v5171, %v5170
        %v5199 = vpack.c.b16 %v5173, %v5172
        %v5200 = vpack.c.b16 %v5175, %v5174
        %v5201 = vpack.c.b16 %v5177, %v5176
        %v5202 = vpack.c.b16 %v5179, %v5178
        %v5203 = vpack.c.b16 %v5181, %v5180
        %v5204 = vpack.c.b16 %v5183, %v5182
        %v5205 = vpack.c.b16 %v5185, %v5184
        %v5206 = vpack.c.b16 %v5187, %v5186
        %v5207 = vpack.c.b16 %v5189, %v5188
        %v5208 = vpack.c.b16 %v5191, %v5190
        %v5209 = vpack.c.b16 %v5193, %v5192
        %5226 = vmatprep.subr.bf16.mxu0 0
        %5227 = vmatpush1.bf16.msra.mxu0 %v5194
        %5228 = vmatprep.subr.bf16.mxu0 0
        %5229 = vmatpush1.bf16.msra.mxu0 %v5195
        %5230 = vmatprep.subr.bf16.mxu0 0
        %5231 = vmatpush1.bf16.msra.mxu0 %v5196
        %5232 = vmatprep.subr.bf16.mxu0 0
        %5233 = vmatpush1.bf16.msra.mxu0 %v5197
        %5234 = vmatprep.subr.bf16.mxu0 0
        %5235 = vmatpush1.bf16.msra.mxu0 %v5198
        %5236 = vmatprep.subr.bf16.mxu0 0
        %5237 = vmatpush1.bf16.msra.mxu0 %v5199
        %5238 = vmatprep.subr.bf16.mxu0 0
        %5239 = vmatpush1.bf16.msra.mxu0 %v5200
        %5240 = vmatprep.subr.bf16.mxu0 0
        %5241 = vmatpush1.bf16.msra.mxu0 %v5201
        %5242 = vmatprep.subr.bf16.mxu0 0
        %5243 = vmatpush1.bf16.msra.mxu0 %v5202
        %5244 = vmatprep.subr.bf16.mxu0 0
        %5245 = vmatpush1.bf16.msra.mxu0 %v5203
        %5246 = vmatprep.subr.bf16.mxu0 0
        %5247 = vmatpush1.bf16.msra.mxu0 %v5204
        %5248 = vmatprep.subr.bf16.mxu0 0
        %5249 = vmatpush1.bf16.msra.mxu0 %v5205
        %5250 = vmatprep.subr.bf16.mxu0 0
        %5251 = vmatpush1.bf16.msra.mxu0 %v5206
        %5252 = vmatprep.subr.bf16.mxu0 0
        %5253 = vmatpush1.bf16.msra.mxu0 %v5207
        %5254 = vmatprep.subr.bf16.mxu0 0
        %5255 = vmatpush1.bf16.msra.mxu0 %v5208
        %5256 = vmatprep.subr.bf16.mxu0 0
        %5257 = vmatpush1.bf16.msra.mxu0 %v5209
        %5258 = vmatprep.mubr.bf16.mxu0 %v5060
        %5259 = vmatmul.mubr.bf16.gmra.mrb[0].mxu0 %v5059
        %v5260 = vpop.f32.mrb[0].mxu0
        %v5261 = vadd.f32 %v5128, %v5260
        %v5262 = vpop.f32.mrb[0].mxu0
        %v5263 = vpop.f32.mrb[0].mxu0
        %v5264 = vadd.f32 %v5128, %v5263
        %v5265 = vpop.f32.mrb[0].mxu0
        %5266 = vmatprep.mubr.bf16.mxu0 %v5062
        %5267 = vmatmul.mubr.bf16.gmra.mrb[0].mxu0 %v5061
        %v5268 = vpop.f32.mrb[0].mxu0
        %v5269 = vadd.f32 %v5128, %v5268
        %v5270 = vpop.f32.mrb[0].mxu0
        %v5271 = vpop.f32.mrb[0].mxu0
        %v5272 = vadd.f32 %v5128, %v5271
        %v5273 = vpop.f32.mrb[0].mxu0
        %5274 = vmatprep.mubr.bf16.mxu0 %v5064
        %5275 = vmatmul.mubr.bf16.gmra.mrb[0].mxu0 %v5063
        %v5276 = vpop.f32.mrb[0].mxu0
        %v5277 = vadd.f32 %v5128, %v5276
        %v5278 = vpop.f32.mrb[0].mxu0
        %v5279 = vpop.f32.mrb[0].mxu0
        %v5280 = vadd.f32 %v5128, %v5279
        %v5281 = vpop.f32.mrb[0].mxu0
        %5282 = vmatprep.mubr.bf16.mxu0 %v5066
        %5283 = vmatmul.mubr.bf16.gmra.mrb[0].mxu0 %v5065
        %v5284 = vpop.f32.mrb[0].mxu0
        %v5285 = vadd.f32 %v5128, %v5284
        %v5286 = vpop.f32.mrb[0].mxu0
        %v5287 = vpop.f32.mrb[0].mxu0
        %v5288 = vadd.f32 %v5128, %v5287
        %v5289 = vpop.f32.mrb[0].mxu0
        %5290 = vmatprep.mubr.bf16.mxu0 %v5068
        %5291 = vmatmul.mubr.bf16.gmra.mrb[0].mxu0 %v5067
        %v5292 = vpop.f32.mrb[0].mxu0
        %v5293 = vadd.f32 %v5128, %v5292
        %v5294 = vpop.f32.mrb[0].mxu0
        %v5295 = vpop.f32.mrb[0].mxu0
        %v5296 = vadd.f32 %v5128, %v5295
        %v5297 = vpop.f32.mrb[0].mxu0
        %5298 = vmatprep.mubr.bf16.mxu0 %v5070
        %5299 = vmatmul.mubr.bf16.gmra.mrb[0].mxu0 %v5069
        %v5300 = vpop.f32.mrb[0].mxu0
        %v5301 = vadd.f32 %v5128, %v5300
        %v5302 = vpop.f32.mrb[0].mxu0
        %v5303 = vpop.f32.mrb[0].mxu0
        %v5304 = vadd.f32 %v5128, %v5303
        %v5305 = vpop.f32.mrb[0].mxu0
        %5306 = vmatprep.mubr.bf16.mxu0 %v5072
        %5307 = vmatmul.mubr.bf16.gmra.mrb[0].mxu0 %v5071
        %v5308 = vpop.f32.mrb[0].mxu0
        %v5309 = vadd.f32 %v5128, %v5308
        %v5310 = vpop.f32.mrb[0].mxu0
        %v5311 = vpop.f32.mrb[0].mxu0
        %v5312 = vadd.f32 %v5128, %v5311
        %v5313 = vpop.f32.mrb[0].mxu0
        %5314 = vmatprep.mubr.bf16.mxu0 %v5074
        %5315 = vmatmul.mubr.bf16.gmra.mrb[0].mxu0 %v5073
        %v5316 = vpop.f32.mrb[0].mxu0
        %v5317 = vadd.f32 %v5128, %v5316
        %v5318 = vpop.f32.mrb[0].mxu0
        %v5319 = vpop.f32.mrb[0].mxu0
        %v5320 = vadd.f32 %v5128, %v5319
        %v5321 = vpop.f32.mrb[0].mxu0
        %5322 = vmatprep.mubr.bf16.mxu0 %v5076
        %5323 = vmatmul.mubr.bf16.gmra.mrb[0].mxu0 %v5075
        %v5324 = vpop.f32.mrb[0].mxu0
        %v5325 = vadd.f32 %v5128, %v5324
        %v5326 = vpop.f32.mrb[0].mxu0
        %v5327 = vpop.f32.mrb[0].mxu0
        %v5328 = vadd.f32 %v5128, %v5327
        %v5329 = vpop.f32.mrb[0].mxu0
        %5330 = vmatprep.mubr.bf16.mxu0 %v5078
        %5331 = vmatmul.mubr.bf16.gmra.mrb[0].mxu0 %v5077
        %v5332 = vpop.f32.mrb[0].mxu0
        %v5333 = vadd.f32 %v5128, %v5332
        %v5334 = vpop.f32.mrb[0].mxu0
        %v5335 = vpop.f32.mrb[0].mxu0
        %v5336 = vadd.f32 %v5128, %v5335
        %v5337 = vpop.f32.mrb[0].mxu0
        %5338 = vmatprep.mubr.bf16.mxu0 %v5080
        %5339 = vmatmul.mubr.bf16.gmra.mrb[0].mxu0 %v5079
        %v5340 = vpop.f32.mrb[0].mxu0
        %v5341 = vadd.f32 %v5128, %v5340
        %v5342 = vpop.f32.mrb[0].mxu0
        %v5343 = vpop.f32.mrb[0].mxu0
        %v5344 = vadd.f32 %v5128, %v5343
        %v5345 = vpop.f32.mrb[0].mxu0
        %5346 = vmatprep.mubr.bf16.mxu0 %v5082
        %5347 = vmatmul.mubr.bf16.gmra.mrb[0].mxu0 %v5081
        %v5348 = vpop.f32.mrb[0].mxu0
        %v5349 = vadd.f32 %v5128, %v5348
        %v5350 = vpop.f32.mrb[0].mxu0
        %v5351 = vpop.f32.mrb[0].mxu0
        %v5352 = vadd.f32 %v5128, %v5351
        %v5353 = vpop.f32.mrb[0].mxu0
        %5354 = vmatprep.mubr.bf16.mxu0 %v5084
        %5355 = vmatmul.mubr.bf16.gmra.mrb[0].mxu0 %v5083
        %v5356 = vpop.f32.mrb[0].mxu0
        %v5357 = vadd.f32 %v5128, %v5356
        %v5358 = vpop.f32.mrb[0].mxu0
        %v5359 = vpop.f32.mrb[0].mxu0
        %v5360 = vadd.f32 %v5128, %v5359
        %v5361 = vpop.f32.mrb[0].mxu0
        %5362 = vmatprep.mubr.bf16.mxu0 %v5086
        %5363 = vmatmul.mubr.bf16.gmra.mrb[0].mxu0 %v5085
        %v5364 = vpop.f32.mrb[0].mxu0
        %v5365 = vadd.f32 %v5128, %v5364
        %v5366 = vpop.f32.mrb[0].mxu0
        %v5367 = vpop.f32.mrb[0].mxu0
        %v5368 = vadd.f32 %v5128, %v5367
        %v5369 = vpop.f32.mrb[0].mxu0
        %5370 = vmatprep.mubr.bf16.mxu0 %v5088
        %5371 = vmatmul.mubr.bf16.gmra.mrb[0].mxu0 %v5087
        %v5372 = vpop.f32.mrb[0].mxu0
        %v5373 = vadd.f32 %v5128, %v5372
        %v5374 = vpop.f32.mrb[0].mxu0
        %v5375 = vpop.f32.mrb[0].mxu0
        %v5376 = vadd.f32 %v5128, %v5375
        %v5377 = vpop.f32.mrb[0].mxu0
        %5378 = vmatprep.mubr.bf16.mxu0 %v5090
        %5379 = vmatmul.mubr.bf16.gmra.mrb[0].mxu0 %v5089
        %v5380 = vpop.f32.mrb[0].mxu0
        %v5381 = vadd.f32 %v5128, %v5380
        %v5382 = vpop.f32.mrb[0].mxu0
        %v5383 = vpop.f32.mrb[0].mxu0
        %v5384 = vadd.f32 %v5128, %v5383
        %v5385 = vpop.f32.mrb[0].mxu0
        %5386 = vdwg.mxu0
        %v5387 = vadd.f32 %v3704, %v5261
        %v5388 = vadd.f32 %v3705, %v5264
        %v5389 = vadd.f32 %v3706, %v5269
        %v5390 = vadd.f32 %v3707, %v5272
        %v5391 = vadd.f32 %v3708, %v5277
        %v5392 = vadd.f32 %v3709, %v5280
        %v5393 = vadd.f32 %v3710, %v5285
        %v5394 = vadd.f32 %v3711, %v5288
        %v5395 = vadd.f32 %v3712, %v5293
        %v5396 = vadd.f32 %v3713, %v5296
        %v5397 = vadd.f32 %v3714, %v5301
        %v5398 = vadd.f32 %v3715, %v5304
        %v5399 = vadd.f32 %v3716, %v5309
        %v5400 = vadd.f32 %v3717, %v5312
        %v5401 = vadd.f32 %v3718, %v5317
        %v5402 = vadd.f32 %v3719, %v5320
        %v5403 = vadd.f32 %v3720, %v5325
        %v5404 = vadd.f32 %v3721, %v5328
        %v5405 = vadd.f32 %v3722, %v5333
        %v5406 = vadd.f32 %v3723, %v5336
        %v5407 = vadd.f32 %v3724, %v5341
        %v5408 = vadd.f32 %v3725, %v5344
        %v5409 = vadd.f32 %v3726, %v5349
        %v5410 = vadd.f32 %v3727, %v5352
        %v5411 = vadd.f32 %v3728, %v5357
        %v5412 = vadd.f32 %v3729, %v5360
        %v5413 = vadd.f32 %v3730, %v5365
        %v5414 = vadd.f32 %v3731, %v5368
        %v5415 = vadd.f32 %v3732, %v5373
        %v5416 = vadd.f32 %v3733, %v5376
        %v5417 = vadd.f32 %v3734, %v5381
        %v5418 = vadd.f32 %v3735, %v5384
        %5419 = vst [vmem:[%s597] sm:$0xff] %v5387
        %5420 = vst [vmem:[%s597 + $0x8] sm:$0xff] %v5388
        %5421 = vst [vmem:[%s597 + $0x10] sm:$0xff] %v5389
        %5422 = vst [vmem:[%s597 + $0x18] sm:$0xff] %v5390
        %5423 = vst [vmem:[%s597 + $0x20] sm:$0xff] %v5391
        %5424 = vst [vmem:[%s597 + $0x28] sm:$0xff] %v5392
        %5425 = vst [vmem:[%s597 + $0x30] sm:$0xff] %v5393
        %5426 = vst [vmem:[%s597 + $0x38] sm:$0xff] %v5394
        %5427 = vst [vmem:[%s597 + $0x40] sm:$0xff] %v5395
        %5428 = vst [vmem:[%s597 + $0x48] sm:$0xff] %v5396
        %5429 = vst [vmem:[%s597 + $0x50] sm:$0xff] %v5397
        %5430 = vst [vmem:[%s597 + $0x58] sm:$0xff] %v5398
        %5431 = vst [vmem:[%s597 + $0x60] sm:$0xff] %v5399
        %5432 = vst [vmem:[%s597 + $0x68] sm:$0xff] %v5400
        %5433 = vst [vmem:[%s597 + $0x70] sm:$0xff] %v5401
        %5434 = vst [vmem:[%s597 + $0x78] sm:$0xff] %v5402
        %5435 = vst [vmem:[%s597 + $0x80] sm:$0xff] %v5403
        %5436 = vst [vmem:[%s597 + $0x88] sm:$0xff] %v5404
        %5437 = vst [vmem:[%s597 + $0x90] sm:$0xff] %v5405
        %5438 = vst [vmem:[%s597 + $0x98] sm:$0xff] %v5406
        %5439 = vst [vmem:[%s597 + $0xa0] sm:$0xff] %v5407
        %5440 = vst [vmem:[%s597 + $0xa8] sm:$0xff] %v5408
        %5441 = vst [vmem:[%s597 + $0xb0] sm:$0xff] %v5409
        %5442 = vst [vmem:[%s597 + $0xb8] sm:$0xff] %v5410
        %5443 = vst [vmem:[%s597 + $0xc0] sm:$0xff] %v5411
        %5444 = vst [vmem:[%s597 + $0xc8] sm:$0xff] %v5412
        %5445 = vst [vmem:[%s597 + $0xd0] sm:$0xff] %v5413
        %5446 = vst [vmem:[%s597 + $0xd8] sm:$0xff] %v5414
        %5447 = vst [vmem:[%s597 + $0xe0] sm:$0xff] %v5415
        %5448 = vst [vmem:[%s597 + $0xe8] sm:$0xff] %v5416
        %5449 = vst [vmem:[%s597 + $0xf0] sm:$0xff] %v5417
        %5450 = vst [vmem:[%s597 + $0xf8] sm:$0xff] %v5418
        %s5451 = sand.u32 %s384, 1
        %s5452 = scalar_lea.sflag [#allocation5], %s5451
        %s5453 = sand.u32 %s384, 1
        %s5454 = smul.addr %s5453, 256
        %s5455 = scalar_lea.vmem [#allocation12], %s5454
        // Predicated region
        $region105: #{tpu_custom_call.1} parent=83 // pred_check
          %p5456 = pneg %p394
        $region106: #{tpu_custom_call.1} parent=83 // pred_check_branch
          %5458 = sbr.rel (%p5456) target = $region108
        $region107: #{tpu_custom_call.1} parent=83 // pred_region
          %s5460 = ssub.s32 4096, 4096
          %5461 = vsyncadd %s5452, %s5460
          %s5462 = smul.addr %s35, 32
          %s5463 = smul.addr %s5462, 128
          %s5464 = scalar_lea.hbm %s16, %s5463
          %s5465 = sshll.u32 %s5455, 4
          %s5466 = int_to_ptr.vmem [resolvable:$true] %s5465
          %5471 = dma.vmem_to_hbm [thread:$0]  %s5466, 4096, %s5464, %s5452, 128, 128, 8
        $region108: #{tpu_custom_call.1} parent=83 // pred_fallthru
          _
      $region84: #{tpu_custom_call.1} parent=5 // pred_fallthru
        _
      %p5472 = scmp.le.s32.totalorder 2, %s30
      // Predicated region
      $region109: #{tpu_custom_call.1} parent=5 // pred_check
        %p5473 = pneg %p5472
      $region110: #{tpu_custom_call.1} parent=5 // pred_check_branch
        %5475 = sbr.rel (%p5473) target = $region112
      $region111: #{tpu_custom_call.1} parent=5 // pred_region
        %s5476 = ssub.s32 %s30, 2
        // Predicated region
        $region113: #{tpu_custom_call.1} parent=111 // pred_check
          %p5477 = pneg %p400
        $region114: #{tpu_custom_call.1} parent=111 // pred_check_branch
          %5479 = sbr.rel (%p5477) target = $region116
        $region115: #{tpu_custom_call.1} parent=111 // pred_region
          %s5480 = sand.u32 %s385, 1
          %s5481 = scalar_lea.sflag [#allocation5], %s5480
          %s5482 = sand.u32 %s385, 1
          %s5483 = smul.addr %s5482, 256
          %s5484 = scalar_lea.vmem [#allocation12], %s5483
          %5485 = dma.done %s5481, 4096
        $region116: #{tpu_custom_call.1} parent=111 // pred_fallthru
          _
      $region112: #{tpu_custom_call.1} parent=5 // pred_fallthru
        _
    $region6: #{tpu_custom_call.1} parent=1 // loop_footer
      %s34 = sadd.s32 1, %s30
    $region7: #{tpu_custom_call.1} parent=1 // loop_footer_branch
      %29 = sbr.rel target = $region3
    $region8: #{tpu_custom_call.1} parent=1 // loop_exit
      _
    %5486 = vsyncpa [#allocation4], 1
    %s5487 = scalar_lea.sflag [#allocation4], 1
    %5488 = vsyncpa %s5487, 1
    %5489 = vsyncpa [#allocation7], 1
    %5490 = vsyncpa [#allocation10], 1
    %5491 = vsyncpa [#allocation5], 1
    %s5492 = scalar_lea.sflag [#allocation5], 1
    %5493 = vsyncpa %s5492, 1

</llo_original>
